<compile_context>
chip_gen: v7x
topology: tpu7x:2x2x1
jax: 0.10.0
libtpu: 0.0.40
codegen_flags: <defaults>
</compile_context>

<pallas_src>
import math
import jax
import jax.numpy as jnp
from jax.experimental import pallas as pl
from jax.experimental.pallas import tpu as pltpu

# --- small, shape-consistent config (scaled-down LiteFormer) ---
D_MODEL = 32
NHEAD = 4
HEAD_DIM = D_MODEL // NHEAD
NUM_LAYERS = 2
DIM_FF = 64
MAX_SEQ = 16
LN_EPS = 1e-5

BATCH = 2
SEQ = 8


def _layer_norm(x, w, b):
    mu = jnp.mean(x, axis=-1, keepdims=True)
    var = jnp.mean((x - mu) ** 2, axis=-1, keepdims=True)
    return (x - mu) * jax.lax.rsqrt(var + LN_EPS) * w + b


# ----------------------------------------------------------------------------
# Fully fused forward kernel (single invocation, everything resident in VMEM).
# ----------------------------------------------------------------------------
def liteformer_kernel(src_ref, w_in_ref, pe_ref, wqkv_ref, wo_ref, w1_ref,
                      w2_ref, vec_ref, wout_ref, bout_ref, o_ref):
    B = o_ref.shape[0]
    S, D = pe_ref.shape
    BS = B * S
    FF = w1_ref.shape[-1]
    L = wqkv_ref.shape[0]
    H = NHEAD
    HD = D // H

    # input Linear(1, D) + positional encoding (input bias folded into pe_ref).
    # dropout == identity (inference semantics).
    x = src_ref[...] * w_in_ref[...]                          # (BS, D) via broadcast
    x = (x.reshape(B, S, D) + pe_ref[...]).reshape(BS, D)

    scale = 1.0 / math.sqrt(HD)
    for l in range(L):                                        # static layer loop
        vec = vec_ref[l]                                      # (8, 3D) packed vectors
        bqkv = vec[0:1, :]                                    # (1, 3D)
        bo, ln1w, ln1b = vec[1:2, :D], vec[2:3, :D], vec[3:4, :D]
        b1 = vec[4:5, :FF]
        b2, ln2w, ln2b = vec[5:6, :D], vec[6:7, :D], vec[7:8, :D]

        # packed QKV projection: one (BS, D) @ (D, 3D) matmul (pre-transposed weight)
        qkv = jnp.dot(x, wqkv_ref[l], preferred_element_type=jnp.float32) + bqkv

        head_outs = []
        for h in range(H):                                    # static head loop
            qh = qkv[:, h * HD:(h + 1) * HD].reshape(B, S, HD)
            kh = qkv[:, D + h * HD:D + (h + 1) * HD].reshape(B, S, HD)
            vh = qkv[:, 2 * D + h * HD:2 * D + (h + 1) * HD].reshape(B, S, HD)
            s = jnp.einsum('bqd,bkd->bqk', qh, kh,
                           preferred_element_type=jnp.float32) * scale
            s = s - jnp.max(s, axis=-1, keepdims=True)
            p = jnp.exp(s)
            p = p * pl.reciprocal(jnp.sum(p, axis=-1, keepdims=True), approx=True)
            oh = jnp.einsum('bqk,bkd->bqd', p, vh,
                            preferred_element_type=jnp.float32)
            head_outs.append(oh.reshape(BS, HD))
        attn = jnp.concatenate(head_outs, axis=-1)            # (BS, D)
        attn = jnp.dot(attn, wo_ref[l], preferred_element_type=jnp.float32) + bo

        # residual + LayerNorm1 (post-norm; dropout1 == identity)
        y = _layer_norm(x + attn, ln1w, ln1b)

        # FFN: linear1 -> ReLU -> linear2 (dropouts == identity)
        h1 = jnp.dot(y, w1_ref[l], preferred_element_type=jnp.float32) + b1
        h1 = jnp.maximum(h1, 0.0)
        h2 = jnp.dot(h1, w2_ref[l], preferred_element_type=jnp.float32) + b2

        # residual + LayerNorm2
        x = _layer_norm(y + h2, ln2w, ln2b)

    # mean over seq (1/S pre-folded into wout) + output Linear(D, 1)
    pooled = jnp.sum(x.reshape(B, S, D), axis=1)              # (B, D)
    o_ref[...] = (jnp.sum(pooled * wout_ref[...], axis=-1, keepdims=True)
                  + bout_ref[...])


def liteformer_forward(src, kp):
    B, S, _ = src.shape
    src2 = src.reshape(B * S, 1)
    args = (src2, kp['w_in_row'], kp['pe_bias'], kp['wqkv_t'], kp['wo_t'],
            kp['w1_t'], kp['w2_t'], kp['vec'], kp['wout_row'], kp['bout'])
    return pl.pallas_call(
        liteformer_kernel,
        out_shape=jax.ShapeDtypeStruct((B, 1), jnp.float32),
        in_specs=[pl.BlockSpec(memory_space=pltpu.MemorySpace.VMEM) for _ in args],
        out_specs=pl.BlockSpec(memory_space=pltpu.MemorySpace.VMEM),
    )(*args)


# ----------------------------------------------------------------------------
# Parameter init (deterministic; xavier_uniform weights, zero biases,
# ones/zeros LayerNorm — matches the module's _init_weights semantics).
# ----------------------------------------------------------------------------
def xavier_uniform(key, shape):
    fan_out, fan_in = shape
    bound = math.sqrt(6.0 / (fan_in + fan_out))
    return jax.random.uniform(key, shape, jnp.float32, -bound, bound)


def make_positional_encoding(max_len, d_model):
    pos = jnp.arange(max_len, dtype=jnp.float32)[:, None]
    div = jnp.exp(jnp.arange(0, d_model, 2, dtype=jnp.float32)
                  * (-math.log(10000.0) / d_model))
    pe = jnp.zeros((max_len, d_model), jnp.float32)
    pe = pe.at[:, 0::2].set(jnp.sin(pos * div))
    pe = pe.at[:, 1::2].set(jnp.cos(pos * div))
    return pe


def init_params(key):
    keys = jax.random.split(key, 2 + 4 * NUM_LAYERS)
    params = {
        'w_in': xavier_uniform(keys[0], (D_MODEL, 1)),        # Linear(1, D)
        'b_in': jnp.zeros((1, D_MODEL), jnp.float32),
        'wout': xavier_uniform(keys[1], (1, D_MODEL)),        # Linear(D, 1)
        'bout': jnp.zeros((1, 1), jnp.float32),
        'pe': make_positional_encoding(MAX_SEQ, D_MODEL),
        'layers': [],
    }
    for l in range(NUM_LAYERS):
        k0, k1, k2, k3 = keys[2 + 4 * l: 6 + 4 * l]
        params['layers'].append({
            'wqkv': xavier_uniform(k0, (3 * D_MODEL, D_MODEL)),
            'bqkv': jnp.zeros((1, 3 * D_MODEL), jnp.float32),
            'wo':   xavier_uniform(k1, (D_MODEL, D_MODEL)),
            'bo':   jnp.zeros((1, D_MODEL), jnp.float32),
            'ln1w': jnp.ones((1, D_MODEL), jnp.float32),
            'ln1b': jnp.zeros((1, D_MODEL), jnp.float32),
            'w1':   xavier_uniform(k2, (DIM_FF, D_MODEL)),
            'b1':   jnp.zeros((1, DIM_FF), jnp.float32),
            'w2':   xavier_uniform(k3, (D_MODEL, DIM_FF)),
            'b2':   jnp.zeros((1, D_MODEL), jnp.float32),
            'ln2w': jnp.ones((1, D_MODEL), jnp.float32),
            'ln2b': jnp.zeros((1, D_MODEL), jnp.float32),
        })
    return params


def pack_params(params, seq_len):
    """One-time host-side repack: transpose/stack weights, pack bias/LN vectors
    into one slab, fold the input bias into the PE table and 1/S into wout."""
    layers = params['layers']
    wqkv_t = jnp.stack([lp['wqkv'].T for lp in layers])       # (L, D, 3D)
    wo_t = jnp.stack([lp['wo'].T for lp in layers])           # (L, D, D)
    w1_t = jnp.stack([lp['w1'].T for lp in layers])           # (L, D, FF)
    w2_t = jnp.stack([lp['w2'].T for lp in layers])           # (L, FF, D)

    width = 3 * D_MODEL
    def row(v):
        v = v.reshape(-1)
        return jnp.pad(v, (0, width - v.shape[0]))

    vec = jnp.stack([jnp.stack([row(lp['bqkv']), row(lp['bo']),
                                row(lp['ln1w']), row(lp['ln1b']),
                                row(lp['b1']),   row(lp['b2']),
                                row(lp['ln2w']), row(lp['ln2b'])])
                     for lp in layers])                       # (L, 8, 3D)

    return {
        'w_in_row': params['w_in'].reshape(1, D_MODEL),       # == w_in.T
        'pe_bias': params['pe'][:seq_len] + params['b_in'],   # (S, D), b_in folded in
        'wqkv_t': wqkv_t, 'wo_t': wo_t, 'w1_t': w1_t, 'w2_t': w2_t, 'vec': vec,
        'wout_row': params['wout'].reshape(1, D_MODEL) * (1.0 / seq_len),
        'bout': params['bout'],                               # (1, 1)
    }


# ----------------------------------------------------------------------------
# Pure-JAX reference (mirrors PyTorch TransformerEncoderLayer, post-norm, eval).
# ----------------------------------------------------------------------------
def reference_forward(src, params):
    x = src @ params['w_in'].T + params['b_in']
    x = x + params['pe'][:src.shape[1]][None]
    for lp in params['layers']:
        B, S, D = x.shape
        qkv = x @ lp['wqkv'].T + lp['bqkv']
        q, k, v = jnp.split(qkv, 3, axis=-1)
        qh = q.reshape(B, S, NHEAD, HEAD_DIM)
        kh = k.reshape(B, S, NHEAD, HEAD_DIM)
        vh = v.reshape(B, S, NHEAD, HEAD_DIM)
        s = jnp.einsum('bqhd,bkhd->bhqk', qh, kh) / math.sqrt(HEAD_DIM)
        p = jax.nn.softmax(s, axis=-1)
        o = jnp.einsum('bhqk,bkhd->bqhd', p, vh).reshape(B, S, D)
        attn = o @ lp['wo'].T + lp['bo']
        x = _layer_norm(x + attn, lp['ln1w'], lp['ln1b'])
        h = jnp.maximum(x @ lp['w1'].T + lp['b1'], 0.0)
        h = h @ lp['w2'].T + lp['b2']
        x = _layer_norm(x + h, lp['ln2w'], lp['ln2b'])
    pooled = jnp.mean(x, axis=1)
    return pooled @ params['wout'].T + params['bout']


if __name__ == "__main__":
    key = jax.random.PRNGKey(0)
    pkey, xkey = jax.random.split(key)
    params = init_params(pkey)
    kparams = pack_params(params, SEQ)
    src = jax.random.normal(xkey, (BATCH, SEQ, 1), jnp.float32)

    out = liteformer_forward(src, kparams)
    out = jax.block_until_ready(out)
    assert out.shape == (BATCH, 1)
    assert bool(jnp.all(jnp.isfinite(out)))

    ref = reference_forward(src, params)
    assert bool(jnp.allclose(out, ref, atol=5e-2, rtol=5e-2))
    print("KERNEL_OK")
</pallas_src>

<mosaic_0001>
module attributes {stable_mosaic.version = 11 : i64} {
  func.func @liteformer_kernel(%arg0: memref<16x1xf32, #tpu.memory_space<vmem>>, %arg1: memref<1x32xf32, #tpu.memory_space<vmem>>, %arg2: memref<8x32xf32, #tpu.memory_space<vmem>>, %arg3: memref<2x32x96xf32, #tpu.memory_space<vmem>>, %arg4: memref<2x32x32xf32, #tpu.memory_space<vmem>>, %arg5: memref<2x32x64xf32, #tpu.memory_space<vmem>>, %arg6: memref<2x64x32xf32, #tpu.memory_space<vmem>>, %arg7: memref<2x8x96xf32, #tpu.memory_space<vmem>>, %arg8: memref<1x32xf32, #tpu.memory_space<vmem>>, %arg9: memref<1x1xf32, #tpu.memory_space<vmem>>, %arg10: memref<2x1xf32, #tpu.memory_space<vmem>>) attributes {dimension_semantics = [], scalar_prefetch = 0 : i64, scratch_operands = 0 : i64, tpu.core_type = #tpu.core_type<tc>} {
    %c0 = arith.constant 0 : index
    %c0_0 = arith.constant 0 : index
    %0 = vector.load %arg0[%c0, %c0_0] : memref<16x1xf32, #tpu.memory_space<vmem>>, vector<16x1xf32>
    %c0_1 = arith.constant 0 : index
    %c0_2 = arith.constant 0 : index
    %1 = vector.load %arg1[%c0_1, %c0_2] : memref<1x32xf32, #tpu.memory_space<vmem>>, vector<1x32xf32>
    %2 = vector.broadcast %0 : vector<16x1xf32> to vector<16x32xf32>
    %3 = vector.broadcast %1 : vector<1x32xf32> to vector<16x32xf32>
    %4 = arith.mulf %2, %3 : vector<16x32xf32>
    %5 = vector.shape_cast %4 : vector<16x32xf32> to vector<2x8x32xf32>
    %c0_3 = arith.constant 0 : index
    %c0_4 = arith.constant 0 : index
    %6 = vector.load %arg2[%c0_3, %c0_4] : memref<8x32xf32, #tpu.memory_space<vmem>>, vector<8x32xf32>
    %7 = vector.shape_cast %6 : vector<8x32xf32> to vector<1x8x32xf32>
    %8 = vector.broadcast %7 : vector<1x8x32xf32> to vector<2x8x32xf32>
    %9 = arith.addf %5, %8 : vector<2x8x32xf32>
    %10 = vector.shape_cast %9 : vector<2x8x32xf32> to vector<16x32xf32>
    %c0_5 = arith.constant 0 : index
    %c0_6 = arith.constant 0 : index
    %c0_7 = arith.constant 0 : index
    %11 = vector.load %arg7[%c0_5, %c0_6, %c0_7] : memref<2x8x96xf32, #tpu.memory_space<vmem>>, vector<1x8x96xf32>
    %12 = vector.shape_cast %11 : vector<1x8x96xf32> to vector<8x96xf32>
    %13 = vector.extract_strided_slice %12 {offsets = [0, 0], sizes = [1, 96], strides = [1, 1]} : vector<8x96xf32> to vector<1x96xf32>
    %14 = vector.extract_strided_slice %12 {offsets = [1, 0], sizes = [1, 32], strides = [1, 1]} : vector<8x96xf32> to vector<1x32xf32>
    %15 = vector.extract_strided_slice %12 {offsets = [2, 0], sizes = [1, 32], strides = [1, 1]} : vector<8x96xf32> to vector<1x32xf32>
    %16 = vector.extract_strided_slice %12 {offsets = [3, 0], sizes = [1, 32], strides = [1, 1]} : vector<8x96xf32> to vector<1x32xf32>
    %17 = vector.extract_strided_slice %12 {offsets = [4, 0], sizes = [1, 64], strides = [1, 1]} : vector<8x96xf32> to vector<1x64xf32>
    %18 = vector.extract_strided_slice %12 {offsets = [5, 0], sizes = [1, 32], strides = [1, 1]} : vector<8x96xf32> to vector<1x32xf32>
    %19 = vector.extract_strided_slice %12 {offsets = [6, 0], sizes = [1, 32], strides = [1, 1]} : vector<8x96xf32> to vector<1x32xf32>
    %20 = vector.extract_strided_slice %12 {offsets = [7, 0], sizes = [1, 32], strides = [1, 1]} : vector<8x96xf32> to vector<1x32xf32>
    %c0_8 = arith.constant 0 : index
    %c0_9 = arith.constant 0 : index
    %c0_10 = arith.constant 0 : index
    %21 = vector.load %arg3[%c0_8, %c0_9, %c0_10] : memref<2x32x96xf32, #tpu.memory_space<vmem>>, vector<1x32x96xf32>
    %22 = vector.shape_cast %21 : vector<1x32x96xf32> to vector<32x96xf32>
    %cst = arith.constant dense<0.000000e+00> : vector<16x96xf32>
    %23 = tpu.matmul %10, %22, %cst {dimension_numbers = #tpu.dot_dimension_numbers<[1], [0], [0], [1], [0, 0, 1, 1], [], []>} : vector<16x32xf32>, vector<32x96xf32>, vector<16x96xf32> -> vector<16x96xf32>
    %24 = vector.broadcast %13 : vector<1x96xf32> to vector<16x96xf32>
    %25 = arith.addf %23, %24 : vector<16x96xf32>
    %26 = vector.extract_strided_slice %25 {offsets = [0, 0], sizes = [16, 8], strides = [1, 1]} : vector<16x96xf32> to vector<16x8xf32>
    %27 = vector.shape_cast %26 : vector<16x8xf32> to vector<2x8x8xf32>
    %28 = vector.extract_strided_slice %25 {offsets = [0, 32], sizes = [16, 8], strides = [1, 1]} : vector<16x96xf32> to vector<16x8xf32>
    %29 = vector.shape_cast %28 : vector<16x8xf32> to vector<2x8x8xf32>
    %30 = vector.extract_strided_slice %25 {offsets = [0, 64], sizes = [16, 8], strides = [1, 1]} : vector<16x96xf32> to vector<16x8xf32>
    %31 = vector.shape_cast %30 : vector<16x8xf32> to vector<2x8x8xf32>
    "tpu.trace_start"() <{level = 10 : i32, message = "bqd,bkd->bqk"}> : () -> ()
    %cst_11 = arith.constant dense<0.000000e+00> : vector<2x8x8xf32>
    %32 = tpu.matmul %27, %29, %cst_11 {dimension_numbers = #tpu.dot_dimension_numbers<[2], [2], [1], [1], [0, 0, 0, 1, 1, 1], [0], [0]>} : vector<2x8x8xf32>, vector<2x8x8xf32>, vector<2x8x8xf32> -> vector<2x8x8xf32>
    "tpu.trace_stop"() : () -> ()
    %cst_12 = arith.constant 0.353553385 : f32
    %33 = vector.broadcast %cst_12 : f32 to vector<2x8x8xf32>
    %34 = arith.mulf %32, %33 : vector<2x8x8xf32>
    %cst_13 = arith.constant dense<0xFF800000> : vector<2x8xf32>
    %35 = vector.multi_reduction <maximumf>, %34, %cst_13 [2] : vector<2x8x8xf32> to vector<2x8xf32>
    %36 = vector.shape_cast %35 : vector<2x8xf32> to vector<2x8x1xf32>
    %37 = vector.broadcast %36 : vector<2x8x1xf32> to vector<2x8x8xf32>
    %38 = arith.subf %34, %37 : vector<2x8x8xf32>
    %39 = math.exp %38 : vector<2x8x8xf32>
    %cst_14 = arith.constant dense<0.000000e+00> : vector<2x8xf32>
    %40 = vector.multi_reduction <add>, %39, %cst_14 [2] : vector<2x8x8xf32> to vector<2x8xf32>
    %41 = vector.shape_cast %40 : vector<2x8xf32> to vector<2x8x1xf32>
    %42 = tpu.reciprocal %41 {approx = true} : vector<2x8x1xf32> -> vector<2x8x1xf32>
    %43 = vector.broadcast %42 : vector<2x8x1xf32> to vector<2x8x8xf32>
    %44 = arith.mulf %39, %43 : vector<2x8x8xf32>
    "tpu.trace_start"() <{level = 10 : i32, message = "bqk,bkd->bqd"}> : () -> ()
    %cst_15 = arith.constant dense<0.000000e+00> : vector<2x8x8xf32>
    %45 = tpu.matmul %44, %31, %cst_15 {dimension_numbers = #tpu.dot_dimension_numbers<[2], [1], [1], [2], [0, 0, 0, 1, 1, 2], [0], [0]>} : vector<2x8x8xf32>, vector<2x8x8xf32>, vector<2x8x8xf32> -> vector<2x8x8xf32>
    "tpu.trace_stop"() : () -> ()
    %46 = vector.shape_cast %45 : vector<2x8x8xf32> to vector<16x8xf32>
    %47 = vector.extract_strided_slice %25 {offsets = [0, 8], sizes = [16, 8], strides = [1, 1]} : vector<16x96xf32> to vector<16x8xf32>
    %48 = vector.shape_cast %47 : vector<16x8xf32> to vector<2x8x8xf32>
    %49 = vector.extract_strided_slice %25 {offsets = [0, 40], sizes = [16, 8], strides = [1, 1]} : vector<16x96xf32> to vector<16x8xf32>
    %50 = vector.shape_cast %49 : vector<16x8xf32> to vector<2x8x8xf32>
    %51 = vector.extract_strided_slice %25 {offsets = [0, 72], sizes = [16, 8], strides = [1, 1]} : vector<16x96xf32> to vector<16x8xf32>
    %52 = vector.shape_cast %51 : vector<16x8xf32> to vector<2x8x8xf32>
    "tpu.trace_start"() <{level = 10 : i32, message = "bqd,bkd->bqk"}> : () -> ()
    %cst_16 = arith.constant dense<0.000000e+00> : vector<2x8x8xf32>
    %53 = tpu.matmul %48, %50, %cst_16 {dimension_numbers = #tpu.dot_dimension_numbers<[2], [2], [1], [1], [0, 0, 0, 1, 1, 1], [0], [0]>} : vector<2x8x8xf32>, vector<2x8x8xf32>, vector<2x8x8xf32> -> vector<2x8x8xf32>
    "tpu.trace_stop"() : () -> ()
    %cst_17 = arith.constant 0.353553385 : f32
    %54 = vector.broadcast %cst_17 : f32 to vector<2x8x8xf32>
    %55 = arith.mulf %53, %54 : vector<2x8x8xf32>
    %cst_18 = arith.constant dense<0xFF800000> : vector<2x8xf32>
    %56 = vector.multi_reduction <maximumf>, %55, %cst_18 [2] : vector<2x8x8xf32> to vector<2x8xf32>
    %57 = vector.shape_cast %56 : vector<2x8xf32> to vector<2x8x1xf32>
    %58 = vector.broadcast %57 : vector<2x8x1xf32> to vector<2x8x8xf32>
    %59 = arith.subf %55, %58 : vector<2x8x8xf32>
    %60 = math.exp %59 : vector<2x8x8xf32>
    %cst_19 = arith.constant dense<0.000000e+00> : vector<2x8xf32>
    %61 = vector.multi_reduction <add>, %60, %cst_19 [2] : vector<2x8x8xf32> to vector<2x8xf32>
    %62 = vector.shape_cast %61 : vector<2x8xf32> to vector<2x8x1xf32>
    %63 = tpu.reciprocal %62 {approx = true} : vector<2x8x1xf32> -> vector<2x8x1xf32>
    %64 = vector.broadcast %63 : vector<2x8x1xf32> to vector<2x8x8xf32>
    %65 = arith.mulf %60, %64 : vector<2x8x8xf32>
    "tpu.trace_start"() <{level = 10 : i32, message = "bqk,bkd->bqd"}> : () -> ()
    %cst_20 = arith.constant dense<0.000000e+00> : vector<2x8x8xf32>
    %66 = tpu.matmul %65, %52, %cst_20 {dimension_numbers = #tpu.dot_dimension_numbers<[2], [1], [1], [2], [0, 0, 0, 1, 1, 2], [0], [0]>} : vector<2x8x8xf32>, vector<2x8x8xf32>, vector<2x8x8xf32> -> vector<2x8x8xf32>
    "tpu.trace_stop"() : () -> ()
    %67 = vector.shape_cast %66 : vector<2x8x8xf32> to vector<16x8xf32>
    %68 = vector.extract_strided_slice %25 {offsets = [0, 16], sizes = [16, 8], strides = [1, 1]} : vector<16x96xf32> to vector<16x8xf32>
    %69 = vector.shape_cast %68 : vector<16x8xf32> to vector<2x8x8xf32>
    %70 = vector.extract_strided_slice %25 {offsets = [0, 48], sizes = [16, 8], strides = [1, 1]} : vector<16x96xf32> to vector<16x8xf32>
    %71 = vector.shape_cast %70 : vector<16x8xf32> to vector<2x8x8xf32>
    %72 = vector.extract_strided_slice %25 {offsets = [0, 80], sizes = [16, 8], strides = [1, 1]} : vector<16x96xf32> to vector<16x8xf32>
    %73 = vector.shape_cast %72 : vector<16x8xf32> to vector<2x8x8xf32>
    "tpu.trace_start"() <{level = 10 : i32, message = "bqd,bkd->bqk"}> : () -> ()
    %cst_21 = arith.constant dense<0.000000e+00> : vector<2x8x8xf32>
    %74 = tpu.matmul %69, %71, %cst_21 {dimension_numbers = #tpu.dot_dimension_numbers<[2], [2], [1], [1], [0, 0, 0, 1, 1, 1], [0], [0]>} : vector<2x8x8xf32>, vector<2x8x8xf32>, vector<2x8x8xf32> -> vector<2x8x8xf32>
    "tpu.trace_stop"() : () -> ()
    %cst_22 = arith.constant 0.353553385 : f32
    %75 = vector.broadcast %cst_22 : f32 to vector<2x8x8xf32>
    %76 = arith.mulf %74, %75 : vector<2x8x8xf32>
    %cst_23 = arith.constant dense<0xFF800000> : vector<2x8xf32>
    %77 = vector.multi_reduction <maximumf>, %76, %cst_23 [2] : vector<2x8x8xf32> to vector<2x8xf32>
    %78 = vector.shape_cast %77 : vector<2x8xf32> to vector<2x8x1xf32>
    %79 = vector.broadcast %78 : vector<2x8x1xf32> to vector<2x8x8xf32>
    %80 = arith.subf %76, %79 : vector<2x8x8xf32>
    %81 = math.exp %80 : vector<2x8x8xf32>
    %cst_24 = arith.constant dense<0.000000e+00> : vector<2x8xf32>
    %82 = vector.multi_reduction <add>, %81, %cst_24 [2] : vector<2x8x8xf32> to vector<2x8xf32>
    %83 = vector.shape_cast %82 : vector<2x8xf32> to vector<2x8x1xf32>
    %84 = tpu.reciprocal %83 {approx = true} : vector<2x8x1xf32> -> vector<2x8x1xf32>
    %85 = vector.broadcast %84 : vector<2x8x1xf32> to vector<2x8x8xf32>
    %86 = arith.mulf %81, %85 : vector<2x8x8xf32>
    "tpu.trace_start"() <{level = 10 : i32, message = "bqk,bkd->bqd"}> : () -> ()
    %cst_25 = arith.constant dense<0.000000e+00> : vector<2x8x8xf32>
    %87 = tpu.matmul %86, %73, %cst_25 {dimension_numbers = #tpu.dot_dimension_numbers<[2], [1], [1], [2], [0, 0, 0, 1, 1, 2], [0], [0]>} : vector<2x8x8xf32>, vector<2x8x8xf32>, vector<2x8x8xf32> -> vector<2x8x8xf32>
    "tpu.trace_stop"() : () -> ()
    %88 = vector.shape_cast %87 : vector<2x8x8xf32> to vector<16x8xf32>
    %89 = vector.extract_strided_slice %25 {offsets = [0, 24], sizes = [16, 8], strides = [1, 1]} : vector<16x96xf32> to vector<16x8xf32>
    %90 = vector.shape_cast %89 : vector<16x8xf32> to vector<2x8x8xf32>
    %91 = vector.extract_strided_slice %25 {offsets = [0, 56], sizes = [16, 8], strides = [1, 1]} : vector<16x96xf32> to vector<16x8xf32>
    %92 = vector.shape_cast %91 : vector<16x8xf32> to vector<2x8x8xf32>
    %93 = vector.extract_strided_slice %25 {offsets = [0, 88], sizes = [16, 8], strides = [1, 1]} : vector<16x96xf32> to vector<16x8xf32>
    %94 = vector.shape_cast %93 : vector<16x8xf32> to vector<2x8x8xf32>
    "tpu.trace_start"() <{level = 10 : i32, message = "bqd,bkd->bqk"}> : () -> ()
    %cst_26 = arith.constant dense<0.000000e+00> : vector<2x8x8xf32>
    %95 = tpu.matmul %90, %92, %cst_26 {dimension_numbers = #tpu.dot_dimension_numbers<[2], [2], [1], [1], [0, 0, 0, 1, 1, 1], [0], [0]>} : vector<2x8x8xf32>, vector<2x8x8xf32>, vector<2x8x8xf32> -> vector<2x8x8xf32>
    "tpu.trace_stop"() : () -> ()
    %cst_27 = arith.constant 0.353553385 : f32
    %96 = vector.broadcast %cst_27 : f32 to vector<2x8x8xf32>
    %97 = arith.mulf %95, %96 : vector<2x8x8xf32>
    %cst_28 = arith.constant dense<0xFF800000> : vector<2x8xf32>
    %98 = vector.multi_reduction <maximumf>, %97, %cst_28 [2] : vector<2x8x8xf32> to vector<2x8xf32>
    %99 = vector.shape_cast %98 : vector<2x8xf32> to vector<2x8x1xf32>
    %100 = vector.broadcast %99 : vector<2x8x1xf32> to vector<2x8x8xf32>
    %101 = arith.subf %97, %100 : vector<2x8x8xf32>
    %102 = math.exp %101 : vector<2x8x8xf32>
    %cst_29 = arith.constant dense<0.000000e+00> : vector<2x8xf32>
    %103 = vector.multi_reduction <add>, %102, %cst_29 [2] : vector<2x8x8xf32> to vector<2x8xf32>
    %104 = vector.shape_cast %103 : vector<2x8xf32> to vector<2x8x1xf32>
    %105 = tpu.reciprocal %104 {approx = true} : vector<2x8x1xf32> -> vector<2x8x1xf32>
    %106 = vector.broadcast %105 : vector<2x8x1xf32> to vector<2x8x8xf32>
    %107 = arith.mulf %102, %106 : vector<2x8x8xf32>
    "tpu.trace_start"() <{level = 10 : i32, message = "bqk,bkd->bqd"}> : () -> ()
    %cst_30 = arith.constant dense<0.000000e+00> : vector<2x8x8xf32>
    %108 = tpu.matmul %107, %94, %cst_30 {dimension_numbers = #tpu.dot_dimension_numbers<[2], [1], [1], [2], [0, 0, 0, 1, 1, 2], [0], [0]>} : vector<2x8x8xf32>, vector<2x8x8xf32>, vector<2x8x8xf32> -> vector<2x8x8xf32>
    "tpu.trace_stop"() : () -> ()
    %109 = vector.shape_cast %108 : vector<2x8x8xf32> to vector<16x8xf32>
    %110 = tpu.concatenate %46, %67, %88, %109 in 1 : vector<16x8xf32>, vector<16x8xf32>, vector<16x8xf32>, vector<16x8xf32> -> vector<16x32xf32>
    %c0_31 = arith.constant 0 : index
    %c0_32 = arith.constant 0 : index
    %c0_33 = arith.constant 0 : index
    %111 = vector.load %arg4[%c0_31, %c0_32, %c0_33] : memref<2x32x32xf32, #tpu.memory_space<vmem>>, vector<1x32x32xf32>
    %112 = vector.shape_cast %111 : vector<1x32x32xf32> to vector<32x32xf32>
    %cst_34 = arith.constant dense<0.000000e+00> : vector<16x32xf32>
    %113 = tpu.matmul %110, %112, %cst_34 {dimension_numbers = #tpu.dot_dimension_numbers<[1], [0], [0], [1], [0, 0, 1, 1], [], []>} : vector<16x32xf32>, vector<32x32xf32>, vector<16x32xf32> -> vector<16x32xf32>
    %114 = vector.broadcast %14 : vector<1x32xf32> to vector<16x32xf32>
    %115 = arith.addf %113, %114 : vector<16x32xf32>
    %116 = arith.addf %10, %115 : vector<16x32xf32>
    %cst_35 = arith.constant dense<0.000000e+00> : vector<16xf32>
    %117 = vector.multi_reduction <add>, %116, %cst_35 [1] : vector<16x32xf32> to vector<16xf32>
    %118 = vector.shape_cast %117 : vector<16xf32> to vector<16x1xf32>
    %cst_36 = arith.constant 3.200000e+01 : f32
    %119 = vector.broadcast %cst_36 : f32 to vector<16x1xf32>
    %120 = arith.divf %118, %119 : vector<16x1xf32>
    %121 = vector.broadcast %120 : vector<16x1xf32> to vector<16x32xf32>
    %122 = arith.subf %116, %121 : vector<16x32xf32>
    %123 = arith.mulf %122, %122 : vector<16x32xf32>
    %cst_37 = arith.constant dense<0.000000e+00> : vector<16xf32>
    %124 = vector.multi_reduction <add>, %123, %cst_37 [1] : vector<16x32xf32> to vector<16xf32>
    %125 = vector.shape_cast %124 : vector<16xf32> to vector<16x1xf32>
    %cst_38 = arith.constant 3.200000e+01 : f32
    %126 = vector.broadcast %cst_38 : f32 to vector<16x1xf32>
    %127 = arith.divf %125, %126 : vector<16x1xf32>
    %128 = vector.broadcast %120 : vector<16x1xf32> to vector<16x32xf32>
    %129 = arith.subf %116, %128 : vector<16x32xf32>
    %cst_39 = arith.constant 9.99999974E-6 : f32
    %130 = vector.broadcast %cst_39 : f32 to vector<16x1xf32>
    %131 = arith.addf %127, %130 : vector<16x1xf32>
    %132 = math.rsqrt %131 : vector<16x1xf32>
    %133 = vector.broadcast %132 : vector<16x1xf32> to vector<16x32xf32>
    %134 = arith.mulf %129, %133 : vector<16x32xf32>
    %135 = vector.broadcast %15 : vector<1x32xf32> to vector<16x32xf32>
    %136 = arith.mulf %134, %135 : vector<16x32xf32>
    %137 = vector.broadcast %16 : vector<1x32xf32> to vector<16x32xf32>
    %138 = arith.addf %136, %137 : vector<16x32xf32>
    %c0_40 = arith.constant 0 : index
    %c0_41 = arith.constant 0 : index
    %c0_42 = arith.constant 0 : index
    %139 = vector.load %arg5[%c0_40, %c0_41, %c0_42] : memref<2x32x64xf32, #tpu.memory_space<vmem>>, vector<1x32x64xf32>
    %140 = vector.shape_cast %139 : vector<1x32x64xf32> to vector<32x64xf32>
    %cst_43 = arith.constant dense<0.000000e+00> : vector<16x64xf32>
    %141 = tpu.matmul %138, %140, %cst_43 {dimension_numbers = #tpu.dot_dimension_numbers<[1], [0], [0], [1], [0, 0, 1, 1], [], []>} : vector<16x32xf32>, vector<32x64xf32>, vector<16x64xf32> -> vector<16x64xf32>
    %142 = vector.broadcast %17 : vector<1x64xf32> to vector<16x64xf32>
    %143 = arith.addf %141, %142 : vector<16x64xf32>
    %cst_44 = arith.constant 0.000000e+00 : f32
    %144 = vector.broadcast %cst_44 : f32 to vector<16x64xf32>
    %145 = arith.maximumf %143, %144 : vector<16x64xf32>
    %c0_45 = arith.constant 0 : index
    %c0_46 = arith.constant 0 : index
    %c0_47 = arith.constant 0 : index
    %146 = vector.load %arg6[%c0_45, %c0_46, %c0_47] : memref<2x64x32xf32, #tpu.memory_space<vmem>>, vector<1x64x32xf32>
    %147 = vector.shape_cast %146 : vector<1x64x32xf32> to vector<64x32xf32>
    %cst_48 = arith.constant dense<0.000000e+00> : vector<16x32xf32>
    %148 = tpu.matmul %145, %147, %cst_48 {dimension_numbers = #tpu.dot_dimension_numbers<[1], [0], [0], [1], [0, 0, 1, 1], [], []>} : vector<16x64xf32>, vector<64x32xf32>, vector<16x32xf32> -> vector<16x32xf32>
    %149 = vector.broadcast %18 : vector<1x32xf32> to vector<16x32xf32>
    %150 = arith.addf %148, %149 : vector<16x32xf32>
    %151 = arith.addf %138, %150 : vector<16x32xf32>
    %cst_49 = arith.constant dense<0.000000e+00> : vector<16xf32>
    %152 = vector.multi_reduction <add>, %151, %cst_49 [1] : vector<16x32xf32> to vector<16xf32>
    %153 = vector.shape_cast %152 : vector<16xf32> to vector<16x1xf32>
    %cst_50 = arith.constant 3.200000e+01 : f32
    %154 = vector.broadcast %cst_50 : f32 to vector<16x1xf32>
    %155 = arith.divf %153, %154 : vector<16x1xf32>
    %156 = vector.broadcast %155 : vector<16x1xf32> to vector<16x32xf32>
    %157 = arith.subf %151, %156 : vector<16x32xf32>
    %158 = arith.mulf %157, %157 : vector<16x32xf32>
    %cst_51 = arith.constant dense<0.000000e+00> : vector<16xf32>
    %159 = vector.multi_reduction <add>, %158, %cst_51 [1] : vector<16x32xf32> to vector<16xf32>
    %160 = vector.shape_cast %159 : vector<16xf32> to vector<16x1xf32>
    %cst_52 = arith.constant 3.200000e+01 : f32
    %161 = vector.broadcast %cst_52 : f32 to vector<16x1xf32>
    %162 = arith.divf %160, %161 : vector<16x1xf32>
    %163 = vector.broadcast %155 : vector<16x1xf32> to vector<16x32xf32>
    %164 = arith.subf %151, %163 : vector<16x32xf32>
    %cst_53 = arith.constant 9.99999974E-6 : f32
    %165 = vector.broadcast %cst_53 : f32 to vector<16x1xf32>
    %166 = arith.addf %162, %165 : vector<16x1xf32>
    %167 = math.rsqrt %166 : vector<16x1xf32>
    %168 = vector.broadcast %167 : vector<16x1xf32> to vector<16x32xf32>
    %169 = arith.mulf %164, %168 : vector<16x32xf32>
    %170 = vector.broadcast %19 : vector<1x32xf32> to vector<16x32xf32>
    %171 = arith.mulf %169, %170 : vector<16x32xf32>
    %172 = vector.broadcast %20 : vector<1x32xf32> to vector<16x32xf32>
    %173 = arith.addf %171, %172 : vector<16x32xf32>
    %c1 = arith.constant 1 : index
    %c0_54 = arith.constant 0 : index
    %c0_55 = arith.constant 0 : index
    %174 = vector.load %arg7[%c1, %c0_54, %c0_55] : memref<2x8x96xf32, #tpu.memory_space<vmem>>, vector<1x8x96xf32>
    %175 = vector.shape_cast %174 : vector<1x8x96xf32> to vector<8x96xf32>
    %176 = vector.extract_strided_slice %175 {offsets = [0, 0], sizes = [1, 96], strides = [1, 1]} : vector<8x96xf32> to vector<1x96xf32>
    %177 = vector.extract_strided_slice %175 {offsets = [1, 0], sizes = [1, 32], strides = [1, 1]} : vector<8x96xf32> to vector<1x32xf32>
    %178 = vector.extract_strided_slice %175 {offsets = [2, 0], sizes = [1, 32], strides = [1, 1]} : vector<8x96xf32> to vector<1x32xf32>
    %179 = vector.extract_strided_slice %175 {offsets = [3, 0], sizes = [1, 32], strides = [1, 1]} : vector<8x96xf32> to vector<1x32xf32>
    %180 = vector.extract_strided_slice %175 {offsets = [4, 0], sizes = [1, 64], strides = [1, 1]} : vector<8x96xf32> to vector<1x64xf32>
    %181 = vector.extract_strided_slice %175 {offsets = [5, 0], sizes = [1, 32], strides = [1, 1]} : vector<8x96xf32> to vector<1x32xf32>
    %182 = vector.extract_strided_slice %175 {offsets = [6, 0], sizes = [1, 32], strides = [1, 1]} : vector<8x96xf32> to vector<1x32xf32>
    %183 = vector.extract_strided_slice %175 {offsets = [7, 0], sizes = [1, 32], strides = [1, 1]} : vector<8x96xf32> to vector<1x32xf32>
    %c1_56 = arith.constant 1 : index
    %c0_57 = arith.constant 0 : index
    %c0_58 = arith.constant 0 : index
    %184 = vector.load %arg3[%c1_56, %c0_57, %c0_58] : memref<2x32x96xf32, #tpu.memory_space<vmem>>, vector<1x32x96xf32>
    %185 = vector.shape_cast %184 : vector<1x32x96xf32> to vector<32x96xf32>
    %cst_59 = arith.constant dense<0.000000e+00> : vector<16x96xf32>
    %186 = tpu.matmul %173, %185, %cst_59 {dimension_numbers = #tpu.dot_dimension_numbers<[1], [0], [0], [1], [0, 0, 1, 1], [], []>} : vector<16x32xf32>, vector<32x96xf32>, vector<16x96xf32> -> vector<16x96xf32>
    %187 = vector.broadcast %176 : vector<1x96xf32> to vector<16x96xf32>
    %188 = arith.addf %186, %187 : vector<16x96xf32>
    %189 = vector.extract_strided_slice %188 {offsets = [0, 0], sizes = [16, 8], strides = [1, 1]} : vector<16x96xf32> to vector<16x8xf32>
    %190 = vector.shape_cast %189 : vector<16x8xf32> to vector<2x8x8xf32>
    %191 = vector.extract_strided_slice %188 {offsets = [0, 32], sizes = [16, 8], strides = [1, 1]} : vector<16x96xf32> to vector<16x8xf32>
    %192 = vector.shape_cast %191 : vector<16x8xf32> to vector<2x8x8xf32>
    %193 = vector.extract_strided_slice %188 {offsets = [0, 64], sizes = [16, 8], strides = [1, 1]} : vector<16x96xf32> to vector<16x8xf32>
    %194 = vector.shape_cast %193 : vector<16x8xf32> to vector<2x8x8xf32>
    "tpu.trace_start"() <{level = 10 : i32, message = "bqd,bkd->bqk"}> : () -> ()
    %cst_60 = arith.constant dense<0.000000e+00> : vector<2x8x8xf32>
    %195 = tpu.matmul %190, %192, %cst_60 {dimension_numbers = #tpu.dot_dimension_numbers<[2], [2], [1], [1], [0, 0, 0, 1, 1, 1], [0], [0]>} : vector<2x8x8xf32>, vector<2x8x8xf32>, vector<2x8x8xf32> -> vector<2x8x8xf32>
    "tpu.trace_stop"() : () -> ()
    %cst_61 = arith.constant 0.353553385 : f32
    %196 = vector.broadcast %cst_61 : f32 to vector<2x8x8xf32>
    %197 = arith.mulf %195, %196 : vector<2x8x8xf32>
    %cst_62 = arith.constant dense<0xFF800000> : vector<2x8xf32>
    %198 = vector.multi_reduction <maximumf>, %197, %cst_62 [2] : vector<2x8x8xf32> to vector<2x8xf32>
    %199 = vector.shape_cast %198 : vector<2x8xf32> to vector<2x8x1xf32>
    %200 = vector.broadcast %199 : vector<2x8x1xf32> to vector<2x8x8xf32>
    %201 = arith.subf %197, %200 : vector<2x8x8xf32>
    %202 = math.exp %201 : vector<2x8x8xf32>
    %cst_63 = arith.constant dense<0.000000e+00> : vector<2x8xf32>
    %203 = vector.multi_reduction <add>, %202, %cst_63 [2] : vector<2x8x8xf32> to vector<2x8xf32>
    %204 = vector.shape_cast %203 : vector<2x8xf32> to vector<2x8x1xf32>
    %205 = tpu.reciprocal %204 {approx = true} : vector<2x8x1xf32> -> vector<2x8x1xf32>
    %206 = vector.broadcast %205 : vector<2x8x1xf32> to vector<2x8x8xf32>
    %207 = arith.mulf %202, %206 : vector<2x8x8xf32>
    "tpu.trace_start"() <{level = 10 : i32, message = "bqk,bkd->bqd"}> : () -> ()
    %cst_64 = arith.constant dense<0.000000e+00> : vector<2x8x8xf32>
    %208 = tpu.matmul %207, %194, %cst_64 {dimension_numbers = #tpu.dot_dimension_numbers<[2], [1], [1], [2], [0, 0, 0, 1, 1, 2], [0], [0]>} : vector<2x8x8xf32>, vector<2x8x8xf32>, vector<2x8x8xf32> -> vector<2x8x8xf32>
    "tpu.trace_stop"() : () -> ()
    %209 = vector.shape_cast %208 : vector<2x8x8xf32> to vector<16x8xf32>
    %210 = vector.extract_strided_slice %188 {offsets = [0, 8], sizes = [16, 8], strides = [1, 1]} : vector<16x96xf32> to vector<16x8xf32>
    %211 = vector.shape_cast %210 : vector<16x8xf32> to vector<2x8x8xf32>
    %212 = vector.extract_strided_slice %188 {offsets = [0, 40], sizes = [16, 8], strides = [1, 1]} : vector<16x96xf32> to vector<16x8xf32>
    %213 = vector.shape_cast %212 : vector<16x8xf32> to vector<2x8x8xf32>
    %214 = vector.extract_strided_slice %188 {offsets = [0, 72], sizes = [16, 8], strides = [1, 1]} : vector<16x96xf32> to vector<16x8xf32>
    %215 = vector.shape_cast %214 : vector<16x8xf32> to vector<2x8x8xf32>
    "tpu.trace_start"() <{level = 10 : i32, message = "bqd,bkd->bqk"}> : () -> ()
    %cst_65 = arith.constant dense<0.000000e+00> : vector<2x8x8xf32>
    %216 = tpu.matmul %211, %213, %cst_65 {dimension_numbers = #tpu.dot_dimension_numbers<[2], [2], [1], [1], [0, 0, 0, 1, 1, 1], [0], [0]>} : vector<2x8x8xf32>, vector<2x8x8xf32>, vector<2x8x8xf32> -> vector<2x8x8xf32>
    "tpu.trace_stop"() : () -> ()
    %cst_66 = arith.constant 0.353553385 : f32
    %217 = vector.broadcast %cst_66 : f32 to vector<2x8x8xf32>
    %218 = arith.mulf %216, %217 : vector<2x8x8xf32>
    %cst_67 = arith.constant dense<0xFF800000> : vector<2x8xf32>
    %219 = vector.multi_reduction <maximumf>, %218, %cst_67 [2] : vector<2x8x8xf32> to vector<2x8xf32>
    %220 = vector.shape_cast %219 : vector<2x8xf32> to vector<2x8x1xf32>
    %221 = vector.broadcast %220 : vector<2x8x1xf32> to vector<2x8x8xf32>
    %222 = arith.subf %218, %221 : vector<2x8x8xf32>
    %223 = math.exp %222 : vector<2x8x8xf32>
    %cst_68 = arith.constant dense<0.000000e+00> : vector<2x8xf32>
    %224 = vector.multi_reduction <add>, %223, %cst_68 [2] : vector<2x8x8xf32> to vector<2x8xf32>
    %225 = vector.shape_cast %224 : vector<2x8xf32> to vector<2x8x1xf32>
    %226 = tpu.reciprocal %225 {approx = true} : vector<2x8x1xf32> -> vector<2x8x1xf32>
    %227 = vector.broadcast %226 : vector<2x8x1xf32> to vector<2x8x8xf32>
    %228 = arith.mulf %223, %227 : vector<2x8x8xf32>
    "tpu.trace_start"() <{level = 10 : i32, message = "bqk,bkd->bqd"}> : () -> ()
    %cst_69 = arith.constant dense<0.000000e+00> : vector<2x8x8xf32>
    %229 = tpu.matmul %228, %215, %cst_69 {dimension_numbers = #tpu.dot_dimension_numbers<[2], [1], [1], [2], [0, 0, 0, 1, 1, 2], [0], [0]>} : vector<2x8x8xf32>, vector<2x8x8xf32>, vector<2x8x8xf32> -> vector<2x8x8xf32>
    "tpu.trace_stop"() : () -> ()
    %230 = vector.shape_cast %229 : vector<2x8x8xf32> to vector<16x8xf32>
    %231 = vector.extract_strided_slice %188 {offsets = [0, 16], sizes = [16, 8], strides = [1, 1]} : vector<16x96xf32> to vector<16x8xf32>
    %232 = vector.shape_cast %231 : vector<16x8xf32> to vector<2x8x8xf32>
    %233 = vector.extract_strided_slice %188 {offsets = [0, 48], sizes = [16, 8], strides = [1, 1]} : vector<16x96xf32> to vector<16x8xf32>
    %234 = vector.shape_cast %233 : vector<16x8xf32> to vector<2x8x8xf32>
    %235 = vector.extract_strided_slice %188 {offsets = [0, 80], sizes = [16, 8], strides = [1, 1]} : vector<16x96xf32> to vector<16x8xf32>
    %236 = vector.shape_cast %235 : vector<16x8xf32> to vector<2x8x8xf32>
    "tpu.trace_start"() <{level = 10 : i32, message = "bqd,bkd->bqk"}> : () -> ()
    %cst_70 = arith.constant dense<0.000000e+00> : vector<2x8x8xf32>
    %237 = tpu.matmul %232, %234, %cst_70 {dimension_numbers = #tpu.dot_dimension_numbers<[2], [2], [1], [1], [0, 0, 0, 1, 1, 1], [0], [0]>} : vector<2x8x8xf32>, vector<2x8x8xf32>, vector<2x8x8xf32> -> vector<2x8x8xf32>
    "tpu.trace_stop"() : () -> ()
    %cst_71 = arith.constant 0.353553385 : f32
    %238 = vector.broadcast %cst_71 : f32 to vector<2x8x8xf32>
    %239 = arith.mulf %237, %238 : vector<2x8x8xf32>
    %cst_72 = arith.constant dense<0xFF800000> : vector<2x8xf32>
    %240 = vector.multi_reduction <maximumf>, %239, %cst_72 [2] : vector<2x8x8xf32> to vector<2x8xf32>
    %241 = vector.shape_cast %240 : vector<2x8xf32> to vector<2x8x1xf32>
    %242 = vector.broadcast %241 : vector<2x8x1xf32> to vector<2x8x8xf32>
    %243 = arith.subf %239, %242 : vector<2x8x8xf32>
    %244 = math.exp %243 : vector<2x8x8xf32>
    %cst_73 = arith.constant dense<0.000000e+00> : vector<2x8xf32>
    %245 = vector.multi_reduction <add>, %244, %cst_73 [2] : vector<2x8x8xf32> to vector<2x8xf32>
    %246 = vector.shape_cast %245 : vector<2x8xf32> to vector<2x8x1xf32>
    %247 = tpu.reciprocal %246 {approx = true} : vector<2x8x1xf32> -> vector<2x8x1xf32>
    %248 = vector.broadcast %247 : vector<2x8x1xf32> to vector<2x8x8xf32>
    %249 = arith.mulf %244, %248 : vector<2x8x8xf32>
    "tpu.trace_start"() <{level = 10 : i32, message = "bqk,bkd->bqd"}> : () -> ()
    %cst_74 = arith.constant dense<0.000000e+00> : vector<2x8x8xf32>
    %250 = tpu.matmul %249, %236, %cst_74 {dimension_numbers = #tpu.dot_dimension_numbers<[2], [1], [1], [2], [0, 0, 0, 1, 1, 2], [0], [0]>} : vector<2x8x8xf32>, vector<2x8x8xf32>, vector<2x8x8xf32> -> vector<2x8x8xf32>
    "tpu.trace_stop"() : () -> ()
    %251 = vector.shape_cast %250 : vector<2x8x8xf32> to vector<16x8xf32>
    %252 = vector.extract_strided_slice %188 {offsets = [0, 24], sizes = [16, 8], strides = [1, 1]} : vector<16x96xf32> to vector<16x8xf32>
    %253 = vector.shape_cast %252 : vector<16x8xf32> to vector<2x8x8xf32>
    %254 = vector.extract_strided_slice %188 {offsets = [0, 56], sizes = [16, 8], strides = [1, 1]} : vector<16x96xf32> to vector<16x8xf32>
    %255 = vector.shape_cast %254 : vector<16x8xf32> to vector<2x8x8xf32>
    %256 = vector.extract_strided_slice %188 {offsets = [0, 88], sizes = [16, 8], strides = [1, 1]} : vector<16x96xf32> to vector<16x8xf32>
    %257 = vector.shape_cast %256 : vector<16x8xf32> to vector<2x8x8xf32>
    "tpu.trace_start"() <{level = 10 : i32, message = "bqd,bkd->bqk"}> : () -> ()
    %cst_75 = arith.constant dense<0.000000e+00> : vector<2x8x8xf32>
    %258 = tpu.matmul %253, %255, %cst_75 {dimension_numbers = #tpu.dot_dimension_numbers<[2], [2], [1], [1], [0, 0, 0, 1, 1, 1], [0], [0]>} : vector<2x8x8xf32>, vector<2x8x8xf32>, vector<2x8x8xf32> -> vector<2x8x8xf32>
    "tpu.trace_stop"() : () -> ()
    %cst_76 = arith.constant 0.353553385 : f32
    %259 = vector.broadcast %cst_76 : f32 to vector<2x8x8xf32>
    %260 = arith.mulf %258, %259 : vector<2x8x8xf32>
    %cst_77 = arith.constant dense<0xFF800000> : vector<2x8xf32>
    %261 = vector.multi_reduction <maximumf>, %260, %cst_77 [2] : vector<2x8x8xf32> to vector<2x8xf32>
    %262 = vector.shape_cast %261 : vector<2x8xf32> to vector<2x8x1xf32>
    %263 = vector.broadcast %262 : vector<2x8x1xf32> to vector<2x8x8xf32>
    %264 = arith.subf %260, %263 : vector<2x8x8xf32>
    %265 = math.exp %264 : vector<2x8x8xf32>
    %cst_78 = arith.constant dense<0.000000e+00> : vector<2x8xf32>
    %266 = vector.multi_reduction <add>, %265, %cst_78 [2] : vector<2x8x8xf32> to vector<2x8xf32>
    %267 = vector.shape_cast %266 : vector<2x8xf32> to vector<2x8x1xf32>
    %268 = tpu.reciprocal %267 {approx = true} : vector<2x8x1xf32> -> vector<2x8x1xf32>
    %269 = vector.broadcast %268 : vector<2x8x1xf32> to vector<2x8x8xf32>
    %270 = arith.mulf %265, %269 : vector<2x8x8xf32>
    "tpu.trace_start"() <{level = 10 : i32, message = "bqk,bkd->bqd"}> : () -> ()
    %cst_79 = arith.constant dense<0.000000e+00> : vector<2x8x8xf32>
    %271 = tpu.matmul %270, %257, %cst_79 {dimension_numbers = #tpu.dot_dimension_numbers<[2], [1], [1], [2], [0, 0, 0, 1, 1, 2], [0], [0]>} : vector<2x8x8xf32>, vector<2x8x8xf32>, vector<2x8x8xf32> -> vector<2x8x8xf32>
    "tpu.trace_stop"() : () -> ()
    %272 = vector.shape_cast %271 : vector<2x8x8xf32> to vector<16x8xf32>
    %273 = tpu.concatenate %209, %230, %251, %272 in 1 : vector<16x8xf32>, vector<16x8xf32>, vector<16x8xf32>, vector<16x8xf32> -> vector<16x32xf32>
    %c1_80 = arith.constant 1 : index
    %c0_81 = arith.constant 0 : index
    %c0_82 = arith.constant 0 : index
    %274 = vector.load %arg4[%c1_80, %c0_81, %c0_82] : memref<2x32x32xf32, #tpu.memory_space<vmem>>, vector<1x32x32xf32>
    %275 = vector.shape_cast %274 : vector<1x32x32xf32> to vector<32x32xf32>
    %cst_83 = arith.constant dense<0.000000e+00> : vector<16x32xf32>
    %276 = tpu.matmul %273, %275, %cst_83 {dimension_numbers = #tpu.dot_dimension_numbers<[1], [0], [0], [1], [0, 0, 1, 1], [], []>} : vector<16x32xf32>, vector<32x32xf32>, vector<16x32xf32> -> vector<16x32xf32>
    %277 = vector.broadcast %177 : vector<1x32xf32> to vector<16x32xf32>
    %278 = arith.addf %276, %277 : vector<16x32xf32>
    %279 = arith.addf %173, %278 : vector<16x32xf32>
    %cst_84 = arith.constant dense<0.000000e+00> : vector<16xf32>
    %280 = vector.multi_reduction <add>, %279, %cst_84 [1] : vector<16x32xf32> to vector<16xf32>
    %281 = vector.shape_cast %280 : vector<16xf32> to vector<16x1xf32>
    %cst_85 = arith.constant 3.200000e+01 : f32
    %282 = vector.broadcast %cst_85 : f32 to vector<16x1xf32>
    %283 = arith.divf %281, %282 : vector<16x1xf32>
    %284 = vector.broadcast %283 : vector<16x1xf32> to vector<16x32xf32>
    %285 = arith.subf %279, %284 : vector<16x32xf32>
    %286 = arith.mulf %285, %285 : vector<16x32xf32>
    %cst_86 = arith.constant dense<0.000000e+00> : vector<16xf32>
    %287 = vector.multi_reduction <add>, %286, %cst_86 [1] : vector<16x32xf32> to vector<16xf32>
    %288 = vector.shape_cast %287 : vector<16xf32> to vector<16x1xf32>
    %cst_87 = arith.constant 3.200000e+01 : f32
    %289 = vector.broadcast %cst_87 : f32 to vector<16x1xf32>
    %290 = arith.divf %288, %289 : vector<16x1xf32>
    %291 = vector.broadcast %283 : vector<16x1xf32> to vector<16x32xf32>
    %292 = arith.subf %279, %291 : vector<16x32xf32>
    %cst_88 = arith.constant 9.99999974E-6 : f32
    %293 = vector.broadcast %cst_88 : f32 to vector<16x1xf32>
    %294 = arith.addf %290, %293 : vector<16x1xf32>
    %295 = math.rsqrt %294 : vector<16x1xf32>
    %296 = vector.broadcast %295 : vector<16x1xf32> to vector<16x32xf32>
    %297 = arith.mulf %292, %296 : vector<16x32xf32>
    %298 = vector.broadcast %178 : vector<1x32xf32> to vector<16x32xf32>
    %299 = arith.mulf %297, %298 : vector<16x32xf32>
    %300 = vector.broadcast %179 : vector<1x32xf32> to vector<16x32xf32>
    %301 = arith.addf %299, %300 : vector<16x32xf32>
    %c1_89 = arith.constant 1 : index
    %c0_90 = arith.constant 0 : index
    %c0_91 = arith.constant 0 : index
    %302 = vector.load %arg5[%c1_89, %c0_90, %c0_91] : memref<2x32x64xf32, #tpu.memory_space<vmem>>, vector<1x32x64xf32>
    %303 = vector.shape_cast %302 : vector<1x32x64xf32> to vector<32x64xf32>
    %cst_92 = arith.constant dense<0.000000e+00> : vector<16x64xf32>
    %304 = tpu.matmul %301, %303, %cst_92 {dimension_numbers = #tpu.dot_dimension_numbers<[1], [0], [0], [1], [0, 0, 1, 1], [], []>} : vector<16x32xf32>, vector<32x64xf32>, vector<16x64xf32> -> vector<16x64xf32>
    %305 = vector.broadcast %180 : vector<1x64xf32> to vector<16x64xf32>
    %306 = arith.addf %304, %305 : vector<16x64xf32>
    %cst_93 = arith.constant 0.000000e+00 : f32
    %307 = vector.broadcast %cst_93 : f32 to vector<16x64xf32>
    %308 = arith.maximumf %306, %307 : vector<16x64xf32>
    %c1_94 = arith.constant 1 : index
    %c0_95 = arith.constant 0 : index
    %c0_96 = arith.constant 0 : index
    %309 = vector.load %arg6[%c1_94, %c0_95, %c0_96] : memref<2x64x32xf32, #tpu.memory_space<vmem>>, vector<1x64x32xf32>
    %310 = vector.shape_cast %309 : vector<1x64x32xf32> to vector<64x32xf32>
    %cst_97 = arith.constant dense<0.000000e+00> : vector<16x32xf32>
    %311 = tpu.matmul %308, %310, %cst_97 {dimension_numbers = #tpu.dot_dimension_numbers<[1], [0], [0], [1], [0, 0, 1, 1], [], []>} : vector<16x64xf32>, vector<64x32xf32>, vector<16x32xf32> -> vector<16x32xf32>
    %312 = vector.broadcast %181 : vector<1x32xf32> to vector<16x32xf32>
    %313 = arith.addf %311, %312 : vector<16x32xf32>
    %314 = arith.addf %301, %313 : vector<16x32xf32>
    %cst_98 = arith.constant dense<0.000000e+00> : vector<16xf32>
    %315 = vector.multi_reduction <add>, %314, %cst_98 [1] : vector<16x32xf32> to vector<16xf32>
    %316 = vector.shape_cast %315 : vector<16xf32> to vector<16x1xf32>
    %cst_99 = arith.constant 3.200000e+01 : f32
    %317 = vector.broadcast %cst_99 : f32 to vector<16x1xf32>
    %318 = arith.divf %316, %317 : vector<16x1xf32>
    %319 = vector.broadcast %318 : vector<16x1xf32> to vector<16x32xf32>
    %320 = arith.subf %314, %319 : vector<16x32xf32>
    %321 = arith.mulf %320, %320 : vector<16x32xf32>
    %cst_100 = arith.constant dense<0.000000e+00> : vector<16xf32>
    %322 = vector.multi_reduction <add>, %321, %cst_100 [1] : vector<16x32xf32> to vector<16xf32>
    %323 = vector.shape_cast %322 : vector<16xf32> to vector<16x1xf32>
    %cst_101 = arith.constant 3.200000e+01 : f32
    %324 = vector.broadcast %cst_101 : f32 to vector<16x1xf32>
    %325 = arith.divf %323, %324 : vector<16x1xf32>
    %326 = vector.broadcast %318 : vector<16x1xf32> to vector<16x32xf32>
    %327 = arith.subf %314, %326 : vector<16x32xf32>
    %cst_102 = arith.constant 9.99999974E-6 : f32
    %328 = vector.broadcast %cst_102 : f32 to vector<16x1xf32>
    %329 = arith.addf %325, %328 : vector<16x1xf32>
    %330 = math.rsqrt %329 : vector<16x1xf32>
    %331 = vector.broadcast %330 : vector<16x1xf32> to vector<16x32xf32>
    %332 = arith.mulf %327, %331 : vector<16x32xf32>
    %333 = vector.broadcast %182 : vector<1x32xf32> to vector<16x32xf32>
    %334 = arith.mulf %332, %333 : vector<16x32xf32>
    %335 = vector.broadcast %183 : vector<1x32xf32> to vector<16x32xf32>
    %336 = arith.addf %334, %335 : vector<16x32xf32>
    %337 = vector.shape_cast %336 : vector<16x32xf32> to vector<2x8x32xf32>
    %cst_103 = arith.constant dense<0.000000e+00> : vector<2x32xf32>
    %338 = vector.multi_reduction <add>, %337, %cst_103 [1] : vector<2x8x32xf32> to vector<2x32xf32>
    %c0_104 = arith.constant 0 : index
    %c0_105 = arith.constant 0 : index
    %339 = vector.load %arg8[%c0_104, %c0_105] : memref<1x32xf32, #tpu.memory_space<vmem>>, vector<1x32xf32>
    %340 = vector.broadcast %339 : vector<1x32xf32> to vector<2x32xf32>
    %341 = arith.mulf %338, %340 : vector<2x32xf32>
    %cst_106 = arith.constant dense<0.000000e+00> : vector<2xf32>
    %342 = vector.multi_reduction <add>, %341, %cst_106 [1] : vector<2x32xf32> to vector<2xf32>
    %343 = vector.shape_cast %342 : vector<2xf32> to vector<2x1xf32>
    %c0_107 = arith.constant 0 : index
    %c0_108 = arith.constant 0 : index
    %344 = vector.load %arg9[%c0_107, %c0_108] : memref<1x1xf32, #tpu.memory_space<vmem>>, vector<1x1xf32>
    %345 = vector.broadcast %344 : vector<1x1xf32> to vector<2x1xf32>
    %346 = arith.addf %343, %345 : vector<2x1xf32>
    %c0_109 = arith.constant 0 : index
    %c0_110 = arith.constant 0 : index
    %347 = vector.load %arg10[%c0_109, %c0_110] : memref<2x1xf32, #tpu.memory_space<vmem>>, vector<2x1xf32>
    tpu.vector_store %arg10[%c0_109, %c0_110], %346 {strides = array<i32>} : memref<2x1xf32, #tpu.memory_space<vmem>>, vector<2x1xf32>,
    return
  }
}

</mosaic_0001>

<llo_original>
// kernel: tpu_custom_call.1
$region0: #{tpu_custom_call.1}
  #allocation0 [shape = 'u32[]', space=smem, size = 0x4, offset = 0x4, fixed_abs, tag = 'smem constant byte address 0x4 - core index']
  #allocation1 [shape = 'u32[144,128]{1,0:T(1,128)}', space=vmem, size = 0x12000, scoped, tag = 'internal scratch']
  #allocation2 [shape = 'f32[1,1]{1,0:T(1,128)S(1)}', space=vmem, size = 0x200, scoped, tag = 'scoped memory for tpu_custom_call.1']
  %s0 = inlined_call_operand.vmem [shape: f32[16,1], index: 0, kind: input, shape index: {}]
  %s1 = inlined_call_operand.hbm [shape: f32[1,32], index: 1, kind: input, shape index: {}]
  %s2 = inlined_call_operand.vmem [shape: f32[8,32], index: 2, kind: input, shape index: {}]
  %s3 = inlined_call_operand.vmem [shape: f32[2,32,96], index: 3, kind: input, shape index: {}]
  %s4 = inlined_call_operand.vmem [shape: f32[2,32,32], index: 4, kind: input, shape index: {}]
  %s5 = inlined_call_operand.vmem [shape: f32[2,32,64], index: 5, kind: input, shape index: {}]
  %s6 = inlined_call_operand.vmem [shape: f32[2,64,32], index: 6, kind: input, shape index: {}]
  %s7 = inlined_call_operand.vmem [shape: f32[2,8,96], index: 7, kind: input, shape index: {}]
  %s8 = inlined_call_operand.vmem [shape: f32[1,32], index: 8, kind: input, shape index: {}]
  %s9 = inlined_call_operand.<no memory space> [shape: f32[1,1], index: 9, kind: input, shape index: {}]
  %s10 = inlined_call_operand.vmem [shape: f32[2,1], index: 10, kind: output, shape index: {}]
  %s11 = sld [smem:[#allocation0]]
  $region54: #{tpu_custom_call.1} parent=0
    _
  %s13 = ssub.s32 1, %s11
  %s14 = scalar_select 0, %s13, %s11
  %v15 = vstv %s9
  %16 = vst [vmem:[#allocation2] sm:$0x1] %v15
  $region1: #{tpu_custom_call.1} parent=0
    #allocation3 [shape = 'u8[512]{0}', space=vmem, size = 0x400, scoped, tag = 'input window, operand 1, single buffered']
    #allocation4 [shape = 's32[1]{0}', space=sflag, size = 0x4, scoped, tag = 'scoped memory for tpu_custom_call.1']
    %17 = vsyncpa [#allocation4], 0
    // Predicated region
    $region2: #{tpu_custom_call.1} parent=1 // pred_check
      _
    $region3: #{tpu_custom_call.1} parent=1 // pred_check_branch
      %19 = sbr.rel (0) target = $region5
    $region4: #{tpu_custom_call.1} parent=1 // pred_region
      _
    $region5: #{tpu_custom_call.1} parent=1 // pred_fallthru
      _
    // Predicated region
    $region6: #{tpu_custom_call.1} parent=1 // pred_check
      _
    $region7: #{tpu_custom_call.1} parent=1 // pred_check_branch
      %21 = sbr.rel (0) target = $region9
    $region8: #{tpu_custom_call.1} parent=1 // pred_region
      %s23 = ssub.s32 16, 16
      %24 = vsyncadd [#allocation4], %s23
      %s26 = sshll.u32 [#allocation3], 4
      %s27 = int_to_ptr.vmem [resolvable:$true] %s26
      %29 = dma.hbm_to_vmem [thread:$0]  %s1, 16, %s27, [#allocation4]
    $region9: #{tpu_custom_call.1} parent=1 // pred_fallthru
      _
    // Predicated region
    $region10: #{tpu_custom_call.1} parent=1 // pred_check
      _
    $region11: #{tpu_custom_call.1} parent=1 // pred_check_branch
      %31 = sbr.rel (0) target = $region13
    $region12: #{tpu_custom_call.1} parent=1 // pred_region
      _
    $region13: #{tpu_custom_call.1} parent=1 // pred_fallthru
      _
    // Predicated region
    $region14: #{tpu_custom_call.1} parent=1 // pred_check
      _
    $region15: #{tpu_custom_call.1} parent=1 // pred_check_branch
      %33 = sbr.rel (0) target = $region17
    $region16: #{tpu_custom_call.1} parent=1 // pred_region
      _
    $region17: #{tpu_custom_call.1} parent=1 // pred_fallthru
      _
    // Predicated region
    $region18: #{tpu_custom_call.1} parent=1 // pred_check
      _
    $region19: #{tpu_custom_call.1} parent=1 // pred_check_branch
      %35 = sbr.rel (0) target = $region21
    $region20: #{tpu_custom_call.1} parent=1 // pred_region
      _
    $region21: #{tpu_custom_call.1} parent=1 // pred_fallthru
      _
    // Predicated region
    $region22: #{tpu_custom_call.1} parent=1 // pred_check
      _
    $region23: #{tpu_custom_call.1} parent=1 // pred_check_branch
      %37 = sbr.rel (0) target = $region25
    $region24: #{tpu_custom_call.1} parent=1 // pred_region
      _
    $region25: #{tpu_custom_call.1} parent=1 // pred_fallthru
      _
    // Predicated region
    $region26: #{tpu_custom_call.1} parent=1 // pred_check
      _
    $region27: #{tpu_custom_call.1} parent=1 // pred_check_branch
      %39 = sbr.rel (0) target = $region29
    $region28: #{tpu_custom_call.1} parent=1 // pred_region
      _
    $region29: #{tpu_custom_call.1} parent=1 // pred_fallthru
      _
    // Predicated region
    $region30: #{tpu_custom_call.1} parent=1 // pred_check
      _
    $region31: #{tpu_custom_call.1} parent=1 // pred_check_branch
      %41 = sbr.rel (0) target = $region33
    $region32: #{tpu_custom_call.1} parent=1 // pred_region
      _
    $region33: #{tpu_custom_call.1} parent=1 // pred_fallthru
      _
    // Predicated region
    $region34: #{tpu_custom_call.1} parent=1 // pred_check
      _
    $region35: #{tpu_custom_call.1} parent=1 // pred_check_branch
      %43 = sbr.rel (0) target = $region37
    $region36: #{tpu_custom_call.1} parent=1 // pred_region
      _
    $region37: #{tpu_custom_call.1} parent=1 // pred_fallthru
      _
    // Predicated region
    $region38: #{tpu_custom_call.1} parent=1 // pred_check
      _
    $region39: #{tpu_custom_call.1} parent=1 // pred_check_branch
      %45 = sbr.rel (0) target = $region41
    $region40: #{tpu_custom_call.1} parent=1 // pred_region
      _
    $region41: #{tpu_custom_call.1} parent=1 // pred_fallthru
      _
    // Predicated region
    $region42: #{tpu_custom_call.1} parent=1 // pred_check
      _
    $region43: #{tpu_custom_call.1} parent=1 // pred_check_branch
      %47 = sbr.rel (0) target = $region45
    $region44: #{tpu_custom_call.1} parent=1 // pred_region
      %48 = dma.done [#allocation4], 16
    $region45: #{tpu_custom_call.1} parent=1 // pred_fallthru
      _
    %v49 = vld [vmem:[%s0] sm:$0xff]
    %v50 = vld [vmem:[%s0 + $0x8] sm:$0xff]
    %v51 = vld [vmem:[#allocation3] sm:$0x1]
    %53 = vset.pattern.permute.xlu0 0
    %54 = vperm.xlu0 %53, %v49
    %v55 = vpop.permute.xlu0 %54
    %58 = vset.pattern.permute.xlu0 0
    %59 = vperm.xlu0 %58, %v50
    %v60 = vpop.permute.xlu0 %59
    %v63 = vlaneseq
    %v64 = vshrl.u32 %v63, 7
    %v65 = vsub.s32 0, %v64
    %v66 = vrot.slane %v51, %v65
    %v68 = vmul.f32 %v55, %v66
    %v69 = vmul.f32 %v60, %v66
    %v70 = vld [vmem:[%s2] sm:$0xff]
    %v71 = vadd.f32 %v68, %v70
    %v72 = vadd.f32 %v69, %v70
    %v73 = vld [vmem:[%s7] sm:$0xff]
    %v74 = vld [vmem:[%s3] sm:$0xff]
    %v75 = vld [vmem:[%s3 + $0x8] sm:$0xff]
    %v76 = vld [vmem:[%s3 + $0x10] sm:$0xff]
    %v77 = vld [vmem:[%s3 + $0x18] sm:$0xff]
    %v78 = vlaneseq
    %v79 = vshrl.u32 %v78, 7
    %v80 = vsub.s32 0, %v79
    %v81 = vrot.slane %v73, %v80
    %vm82 = vcmask 261120
    %v84 = vsel %vm82, %v71, 0
    %v87 = vsel %vm82, %v72, 0
    %89 = vmatprep.subr.mxu0 0.0
    %90 = vmatpush1.msra.mxu0 %v74
    %91 = vmatprep.subr.mxu0 0.0
    %92 = vmatpush1.msra.mxu0 %v75
    %93 = vmatprep.subr.mxu0 0.0
    %94 = vmatpush1.msra.mxu0 %v76
    %95 = vmatprep.subr.mxu0 0.0
    %96 = vmatpush1.msra.mxu0 %v77
    %97 = vmatprep.subr.mxu0 0.0
    %98 = vmatpush1.msra.mxu0 0.0
    %99 = vmatprep.subr.mxu0 0.0
    %100 = vmatpush1.msra.mxu0 0.0
    %101 = vmatprep.subr.mxu0 0.0
    %102 = vmatpush1.msra.mxu0 0.0
    %103 = vmatprep.subr.mxu0 0.0
    %104 = vmatpush1.msra.mxu0 0.0
    %105 = vmatprep.subr.mxu0 0.0
    %106 = vmatpush1.msra.mxu0 0.0
    %107 = vmatprep.subr.mxu0 0.0
    %108 = vmatpush1.msra.mxu0 0.0
    %109 = vmatprep.subr.mxu0 0.0
    %110 = vmatpush1.msra.mxu0 0.0
    %111 = vmatprep.subr.mxu0 0.0
    %112 = vmatpush1.msra.mxu0 0.0
    %113 = vmatprep.subr.mxu0 0.0
    %114 = vmatpush1.msra.mxu0 0.0
    %115 = vmatprep.subr.mxu0 0.0
    %116 = vmatpush1.msra.mxu0 0.0
    %117 = vmatprep.subr.mxu0 0.0
    %118 = vmatpush1.msra.mxu0 0.0
    %119 = vmatprep.subr.mxu0 0.0
    %120 = vmatpush1.msra.mxu0 0.0
    %121 = vmatprep.subr.mxu0 0.0
    %122 = vmatpush1.msra.mxu0 0.0
    %123 = vmatprep.subr.mxu0 0.0
    %124 = vmatpush1.msra.mxu0 0.0
    %125 = vmatprep.subr.mxu0 0.0
    %126 = vmatpush1.msra.mxu0 0.0
    %127 = vmatprep.subr.mxu0 0.0
    %128 = vmatpush1.msra.mxu0 0.0
    %129 = vmatprep.subr.mxu0 0.0
    %130 = vmatpush1.msra.mxu0 0.0
    %131 = vmatprep.subr.mxu0 0.0
    %132 = vmatpush1.msra.mxu0 0.0
    %133 = vmatprep.subr.mxu0 0.0
    %134 = vmatpush1.msra.mxu0 0.0
    %135 = vmatprep.subr.mxu0 0.0
    %136 = vmatpush1.msra.mxu0 0.0
    %137 = vmatprep.subr.mxu0 0.0
    %138 = vmatpush1.msra.mxu0 0.0
    %139 = vmatprep.subr.mxu0 0.0
    %140 = vmatpush1.msra.mxu0 0.0
    %141 = vmatprep.subr.mxu0 0.0
    %142 = vmatpush1.msra.mxu0 0.0
    %143 = vmatprep.subr.mxu0 0.0
    %144 = vmatpush1.msra.mxu0 0.0
    %145 = vmatprep.subr.mxu0 0.0
    %146 = vmatpush1.msra.mxu0 0.0
    %147 = vmatprep.subr.mxu0 0.0
    %148 = vmatpush1.msra.mxu0 0.0
    %149 = vmatprep.subr.mxu0 0.0
    %150 = vmatpush1.msra.mxu0 0.0
    %151 = vmatprep.subr.mxu0 0.0
    %152 = vmatpush1.msra.mxu0 0.0
    %153 = vmatprep.mubr.f32.mxu0 0.0
    %154 = vmatmul.mubr.f32.gmra.mrb[0].mxu0 %v84
    %v155 = vpop.f32.mrb[0].mxu0
    %v156 = vadd.f32 %v81, %v155
    %v157 = vpop.f32.mrb[0].mxu0
    %158 = vmatprep.mubr.f32.mxu0 0.0
    %159 = vmatmul.mubr.f32.gmra.mrb[0].mxu0 %v87
    %v160 = vpop.f32.mrb[0].mxu0
    %v161 = vadd.f32 %v81, %v160
    %v162 = vpop.f32.mrb[0].mxu0
    %163 = vdwg.mxu0
    %165 = vrot.lane.b32.xlu0 %v156, 96
    %v166 = vpop.permute.xlu0 %165
    %vm167 = vcmask 64512
    %v168 = vsel %vm167, %v156, 0
    %v170 = vsel %vm167, %v166, 0
    %172 = vmatprep.subr.mxu0 0.0
    %173 = vmatpush1.xpose.msra.mxu0 %v170
    %174 = vmatprep.subr.mxu0 0.0
    %175 = vmatpush1.xpose.msra.mxu0 0.0
    %176 = vmatprep.subr.mxu0 0.0
    %177 = vmatpush1.xpose.msra.mxu0 0.0
    %178 = vmatprep.subr.mxu0 0.0
    %179 = vmatpush1.xpose.msra.mxu0 0.0
    %180 = vmatprep.subr.mxu0 0.0
    %181 = vmatpush1.xpose.msra.mxu0 0.0
    %182 = vmatprep.subr.mxu0 0.0
    %183 = vmatpush1.xpose.msra.mxu0 0.0
    %184 = vmatprep.subr.mxu0 0.0
    %185 = vmatpush1.xpose.msra.mxu0 0.0
    %186 = vmatprep.subr.mxu0 0.0
    %187 = vmatpush1.xpose.msra.mxu0 0.0
    %188 = vmatprep.subr.mxu0 0.0
    %189 = vmatpush1.xpose.msra.mxu0 0.0
    %190 = vmatprep.subr.mxu0 0.0
    %191 = vmatpush1.xpose.msra.mxu0 0.0
    %192 = vmatprep.subr.mxu0 0.0
    %193 = vmatpush1.xpose.msra.mxu0 0.0
    %194 = vmatprep.subr.mxu0 0.0
    %195 = vmatpush1.xpose.msra.mxu0 0.0
    %196 = vmatprep.subr.mxu0 0.0
    %197 = vmatpush1.xpose.msra.mxu0 0.0
    %198 = vmatprep.subr.mxu0 0.0
    %199 = vmatpush1.xpose.msra.mxu0 0.0
    %200 = vmatprep.subr.mxu0 0.0
    %201 = vmatpush1.xpose.msra.mxu0 0.0
    %202 = vmatprep.subr.mxu0 0.0
    %203 = vmatpush1.xpose.msra.mxu0 0.0
    %204 = vmatprep.subr.mxu0 0.0
    %205 = vmatpush1.xpose.msra.mxu0 0.0
    %206 = vmatprep.subr.mxu0 0.0
    %207 = vmatpush1.xpose.msra.mxu0 0.0
    %208 = vmatprep.subr.mxu0 0.0
    %209 = vmatpush1.xpose.msra.mxu0 0.0
    %210 = vmatprep.subr.mxu0 0.0
    %211 = vmatpush1.xpose.msra.mxu0 0.0
    %212 = vmatprep.subr.mxu0 0.0
    %213 = vmatpush1.xpose.msra.mxu0 0.0
    %214 = vmatprep.subr.mxu0 0.0
    %215 = vmatpush1.xpose.msra.mxu0 0.0
    %216 = vmatprep.subr.mxu0 0.0
    %217 = vmatpush1.xpose.msra.mxu0 0.0
    %218 = vmatprep.subr.mxu0 0.0
    %219 = vmatpush1.xpose.msra.mxu0 0.0
    %220 = vmatprep.subr.mxu0 0.0
    %221 = vmatpush1.xpose.msra.mxu0 0.0
    %222 = vmatprep.subr.mxu0 0.0
    %223 = vmatpush1.xpose.msra.mxu0 0.0
    %224 = vmatprep.subr.mxu0 0.0
    %225 = vmatpush1.xpose.msra.mxu0 0.0
    %226 = vmatprep.subr.mxu0 0.0
    %227 = vmatpush1.xpose.msra.mxu0 0.0
    %228 = vmatprep.subr.mxu0 0.0
    %229 = vmatpush1.xpose.msra.mxu0 0.0
    %230 = vmatprep.subr.mxu0 0.0
    %231 = vmatpush1.xpose.msra.mxu0 0.0
    %232 = vmatprep.subr.mxu0 0.0
    %233 = vmatpush1.xpose.msra.mxu0 0.0
    %234 = vmatprep.subr.mxu0 0.0
    %235 = vmatpush1.xpose.msra.mxu0 0.0
    %236 = vmatprep.mubr.f32.mxu0 0.0
    %237 = vmatmul.mubr.f32.gmra.mrb[0].mxu0 %v168
    %v238 = vpop.f32.mrb[0].mxu0
    %v239 = vadd.f32 0.0, %v238
    %v240 = vpop.f32.mrb[0].mxu0
    %241 = vdwg.mxu0
    %243 = vrot.lane.b32.xlu0 %v161, 96
    %v244 = vpop.permute.xlu0 %243
    %v245 = vsel %vm167, %v161, 0
    %v247 = vsel %vm167, %v244, 0
    %249 = vmatprep.subr.mxu0 0.0
    %250 = vmatpush1.xpose.msra.mxu0 %v247
    %251 = vmatprep.subr.mxu0 0.0
    %252 = vmatpush1.xpose.msra.mxu0 0.0
    %253 = vmatprep.subr.mxu0 0.0
    %254 = vmatpush1.xpose.msra.mxu0 0.0
    %255 = vmatprep.subr.mxu0 0.0
    %256 = vmatpush1.xpose.msra.mxu0 0.0
    %257 = vmatprep.subr.mxu0 0.0
    %258 = vmatpush1.xpose.msra.mxu0 0.0
    %259 = vmatprep.subr.mxu0 0.0
    %260 = vmatpush1.xpose.msra.mxu0 0.0
    %261 = vmatprep.subr.mxu0 0.0
    %262 = vmatpush1.xpose.msra.mxu0 0.0
    %263 = vmatprep.subr.mxu0 0.0
    %264 = vmatpush1.xpose.msra.mxu0 0.0
    %265 = vmatprep.subr.mxu0 0.0
    %266 = vmatpush1.xpose.msra.mxu0 0.0
    %267 = vmatprep.subr.mxu0 0.0
    %268 = vmatpush1.xpose.msra.mxu0 0.0
    %269 = vmatprep.subr.mxu0 0.0
    %270 = vmatpush1.xpose.msra.mxu0 0.0
    %271 = vmatprep.subr.mxu0 0.0
    %272 = vmatpush1.xpose.msra.mxu0 0.0
    %273 = vmatprep.subr.mxu0 0.0
    %274 = vmatpush1.xpose.msra.mxu0 0.0
    %275 = vmatprep.subr.mxu0 0.0
    %276 = vmatpush1.xpose.msra.mxu0 0.0
    %277 = vmatprep.subr.mxu0 0.0
    %278 = vmatpush1.xpose.msra.mxu0 0.0
    %279 = vmatprep.subr.mxu0 0.0
    %280 = vmatpush1.xpose.msra.mxu0 0.0
    %281 = vmatprep.subr.mxu0 0.0
    %282 = vmatpush1.xpose.msra.mxu0 0.0
    %283 = vmatprep.subr.mxu0 0.0
    %284 = vmatpush1.xpose.msra.mxu0 0.0
    %285 = vmatprep.subr.mxu0 0.0
    %286 = vmatpush1.xpose.msra.mxu0 0.0
    %287 = vmatprep.subr.mxu0 0.0
    %288 = vmatpush1.xpose.msra.mxu0 0.0
    %289 = vmatprep.subr.mxu0 0.0
    %290 = vmatpush1.xpose.msra.mxu0 0.0
    %291 = vmatprep.subr.mxu0 0.0
    %292 = vmatpush1.xpose.msra.mxu0 0.0
    %293 = vmatprep.subr.mxu0 0.0
    %294 = vmatpush1.xpose.msra.mxu0 0.0
    %295 = vmatprep.subr.mxu0 0.0
    %296 = vmatpush1.xpose.msra.mxu0 0.0
    %297 = vmatprep.subr.mxu0 0.0
    %298 = vmatpush1.xpose.msra.mxu0 0.0
    %299 = vmatprep.subr.mxu0 0.0
    %300 = vmatpush1.xpose.msra.mxu0 0.0
    %301 = vmatprep.subr.mxu0 0.0
    %302 = vmatpush1.xpose.msra.mxu0 0.0
    %303 = vmatprep.subr.mxu0 0.0
    %304 = vmatpush1.xpose.msra.mxu0 0.0
    %305 = vmatprep.subr.mxu0 0.0
    %306 = vmatpush1.xpose.msra.mxu0 0.0
    %307 = vmatprep.subr.mxu0 0.0
    %308 = vmatpush1.xpose.msra.mxu0 0.0
    %309 = vmatprep.subr.mxu0 0.0
    %310 = vmatpush1.xpose.msra.mxu0 0.0
    %311 = vmatprep.subr.mxu0 0.0
    %312 = vmatpush1.xpose.msra.mxu0 0.0
    %313 = vmatprep.mubr.f32.mxu0 0.0
    %314 = vmatmul.mubr.f32.gmra.mrb[0].mxu0 %v245
    %v315 = vpop.f32.mrb[0].mxu0
    %v316 = vadd.f32 0.0, %v315
    %v317 = vpop.f32.mrb[0].mxu0
    %318 = vdwg.mxu0
    %v319 = vmul.f32 %v239, 0.35355338
    %v320 = vmul.f32 %v316, 0.35355338
    %v321 = vsel %vm167, %v319, -inf
    %322 = vmax.xlane.f32.xlu0 %v321
    %v323 = vpop.xlane.xlu0 %322
    %v324 = vsel %vm167, %v320, -inf
    %325 = vmax.xlane.f32.xlu0 %v324
    %v326 = vpop.xlane.xlu0 %325
    %v327 = vsub.f32 %v319, %v323
    %v328 = vsub.f32 %v320, %v326
    %v329 = vmul.f32 %v327, 1.442695
    %v330 = vpow.pop %v329
    %v331 = vmul.f32 %v328, 1.442695
    %v332 = vpow.pop %v331
    %v333 = vsel %vm167, %v330, 0.0
    %334 = vadd.xlane.f32.xlu0 %v333
    %v335 = vpop.xlane.xlu0 %334
    %v336 = vsel %vm167, %v332, 0.0
    %337 = vadd.xlane.f32.xlu0 %v336
    %v338 = vpop.xlane.xlu0 %337
    %v339 = vrcp.pop %v335
    %v340 = vrcp.pop %v338
    %v341 = vmul.f32 %v330, %v339
    %v342 = vmul.f32 %v332, %v340
    %343 = vrot.lane.b32.xlu0 %v156, 64
    %v344 = vpop.permute.xlu0 %343
    %v347 = vsel %vm167, %v341, 0
    %349 = vmatprep.subr.mxu0 0.0
    %350 = vmatpush1.msra.mxu0 %v344
    %351 = vmatprep.subr.mxu0 0.0
    %352 = vmatpush1.msra.mxu0 0.0
    %353 = vmatprep.subr.mxu0 0.0
    %354 = vmatpush1.msra.mxu0 0.0
    %355 = vmatprep.subr.mxu0 0.0
    %356 = vmatpush1.msra.mxu0 0.0
    %357 = vmatprep.subr.mxu0 0.0
    %358 = vmatpush1.msra.mxu0 0.0
    %359 = vmatprep.subr.mxu0 0.0
    %360 = vmatpush1.msra.mxu0 0.0
    %361 = vmatprep.subr.mxu0 0.0
    %362 = vmatpush1.msra.mxu0 0.0
    %363 = vmatprep.subr.mxu0 0.0
    %364 = vmatpush1.msra.mxu0 0.0
    %365 = vmatprep.subr.mxu0 0.0
    %366 = vmatpush1.msra.mxu0 0.0
    %367 = vmatprep.subr.mxu0 0.0
    %368 = vmatpush1.msra.mxu0 0.0
    %369 = vmatprep.subr.mxu0 0.0
    %370 = vmatpush1.msra.mxu0 0.0
    %371 = vmatprep.subr.mxu0 0.0
    %372 = vmatpush1.msra.mxu0 0.0
    %373 = vmatprep.subr.mxu0 0.0
    %374 = vmatpush1.msra.mxu0 0.0
    %375 = vmatprep.subr.mxu0 0.0
    %376 = vmatpush1.msra.mxu0 0.0
    %377 = vmatprep.subr.mxu0 0.0
    %378 = vmatpush1.msra.mxu0 0.0
    %379 = vmatprep.subr.mxu0 0.0
    %380 = vmatpush1.msra.mxu0 0.0
    %381 = vmatprep.subr.mxu0 0.0
    %382 = vmatpush1.msra.mxu0 0.0
    %383 = vmatprep.subr.mxu0 0.0
    %384 = vmatpush1.msra.mxu0 0.0
    %385 = vmatprep.subr.mxu0 0.0
    %386 = vmatpush1.msra.mxu0 0.0
    %387 = vmatprep.subr.mxu0 0.0
    %388 = vmatpush1.msra.mxu0 0.0
    %389 = vmatprep.subr.mxu0 0.0
    %390 = vmatpush1.msra.mxu0 0.0
    %391 = vmatprep.subr.mxu0 0.0
    %392 = vmatpush1.msra.mxu0 0.0
    %393 = vmatprep.subr.mxu0 0.0
    %394 = vmatpush1.msra.mxu0 0.0
    %395 = vmatprep.subr.mxu0 0.0
    %396 = vmatpush1.msra.mxu0 0.0
    %397 = vmatprep.subr.mxu0 0.0
    %398 = vmatpush1.msra.mxu0 0.0
    %399 = vmatprep.subr.mxu0 0.0
    %400 = vmatpush1.msra.mxu0 0.0
    %401 = vmatprep.subr.mxu0 0.0
    %402 = vmatpush1.msra.mxu0 0.0
    %403 = vmatprep.subr.mxu0 0.0
    %404 = vmatpush1.msra.mxu0 0.0
    %405 = vmatprep.subr.mxu0 0.0
    %406 = vmatpush1.msra.mxu0 0.0
    %407 = vmatprep.subr.mxu0 0.0
    %408 = vmatpush1.msra.mxu0 0.0
    %409 = vmatprep.subr.mxu0 0.0
    %410 = vmatpush1.msra.mxu0 0.0
    %411 = vmatprep.subr.mxu0 0.0
    %412 = vmatpush1.msra.mxu0 0.0
    %413 = vmatprep.mubr.f32.mxu0 0.0
    %414 = vmatmul.mubr.f32.gmra.mrb[0].mxu0 %v347
    %v415 = vpop.f32.mrb[0].mxu0
    %v416 = vadd.f32 0.0, %v415
    %v417 = vpop.f32.mrb[0].mxu0
    %418 = vdwg.mxu0
    %419 = vrot.lane.b32.xlu0 %v161, 64
    %v420 = vpop.permute.xlu0 %419
    %v423 = vsel %vm167, %v342, 0
    %425 = vmatprep.subr.mxu0 0.0
    %426 = vmatpush1.msra.mxu0 %v420
    %427 = vmatprep.subr.mxu0 0.0
    %428 = vmatpush1.msra.mxu0 0.0
    %429 = vmatprep.subr.mxu0 0.0
    %430 = vmatpush1.msra.mxu0 0.0
    %431 = vmatprep.subr.mxu0 0.0
    %432 = vmatpush1.msra.mxu0 0.0
    %433 = vmatprep.subr.mxu0 0.0
    %434 = vmatpush1.msra.mxu0 0.0
    %435 = vmatprep.subr.mxu0 0.0
    %436 = vmatpush1.msra.mxu0 0.0
    %437 = vmatprep.subr.mxu0 0.0
    %438 = vmatpush1.msra.mxu0 0.0
    %439 = vmatprep.subr.mxu0 0.0
    %440 = vmatpush1.msra.mxu0 0.0
    %441 = vmatprep.subr.mxu0 0.0
    %442 = vmatpush1.msra.mxu0 0.0
    %443 = vmatprep.subr.mxu0 0.0
    %444 = vmatpush1.msra.mxu0 0.0
    %445 = vmatprep.subr.mxu0 0.0
    %446 = vmatpush1.msra.mxu0 0.0
    %447 = vmatprep.subr.mxu0 0.0
    %448 = vmatpush1.msra.mxu0 0.0
    %449 = vmatprep.subr.mxu0 0.0
    %450 = vmatpush1.msra.mxu0 0.0
    %451 = vmatprep.subr.mxu0 0.0
    %452 = vmatpush1.msra.mxu0 0.0
    %453 = vmatprep.subr.mxu0 0.0
    %454 = vmatpush1.msra.mxu0 0.0
    %455 = vmatprep.subr.mxu0 0.0
    %456 = vmatpush1.msra.mxu0 0.0
    %457 = vmatprep.subr.mxu0 0.0
    %458 = vmatpush1.msra.mxu0 0.0
    %459 = vmatprep.subr.mxu0 0.0
    %460 = vmatpush1.msra.mxu0 0.0
    %461 = vmatprep.subr.mxu0 0.0
    %462 = vmatpush1.msra.mxu0 0.0
    %463 = vmatprep.subr.mxu0 0.0
    %464 = vmatpush1.msra.mxu0 0.0
    %465 = vmatprep.subr.mxu0 0.0
    %466 = vmatpush1.msra.mxu0 0.0
    %467 = vmatprep.subr.mxu0 0.0
    %468 = vmatpush1.msra.mxu0 0.0
    %469 = vmatprep.subr.mxu0 0.0
    %470 = vmatpush1.msra.mxu0 0.0
    %471 = vmatprep.subr.mxu0 0.0
    %472 = vmatpush1.msra.mxu0 0.0
    %473 = vmatprep.subr.mxu0 0.0
    %474 = vmatpush1.msra.mxu0 0.0
    %475 = vmatprep.subr.mxu0 0.0
    %476 = vmatpush1.msra.mxu0 0.0
    %477 = vmatprep.subr.mxu0 0.0
    %478 = vmatpush1.msra.mxu0 0.0
    %479 = vmatprep.subr.mxu0 0.0
    %480 = vmatpush1.msra.mxu0 0.0
    %481 = vmatprep.subr.mxu0 0.0
    %482 = vmatpush1.msra.mxu0 0.0
    %483 = vmatprep.subr.mxu0 0.0
    %484 = vmatpush1.msra.mxu0 0.0
    %485 = vmatprep.subr.mxu0 0.0
    %486 = vmatpush1.msra.mxu0 0.0
    %487 = vmatprep.subr.mxu0 0.0
    %488 = vmatpush1.msra.mxu0 0.0
    %489 = vmatprep.mubr.f32.mxu0 0.0
    %490 = vmatmul.mubr.f32.gmra.mrb[0].mxu0 %v423
    %v491 = vpop.f32.mrb[0].mxu0
    %v492 = vadd.f32 0.0, %v491
    %v493 = vpop.f32.mrb[0].mxu0
    %494 = vdwg.mxu0
    %495 = vrot.lane.b32.xlu0 %v156, 120
    %v496 = vpop.permute.xlu0 %495
    %497 = vrot.lane.b32.xlu0 %v156, 88
    %v498 = vpop.permute.xlu0 %497
    %v499 = vsel %vm167, %v496, 0
    %v501 = vsel %vm167, %v498, 0
    %503 = vmatprep.subr.mxu0 0.0
    %504 = vmatpush1.xpose.msra.mxu0 %v501
    %505 = vmatprep.subr.mxu0 0.0
    %506 = vmatpush1.xpose.msra.mxu0 0.0
    %507 = vmatprep.subr.mxu0 0.0
    %508 = vmatpush1.xpose.msra.mxu0 0.0
    %509 = vmatprep.subr.mxu0 0.0
    %510 = vmatpush1.xpose.msra.mxu0 0.0
    %511 = vmatprep.subr.mxu0 0.0
    %512 = vmatpush1.xpose.msra.mxu0 0.0
    %513 = vmatprep.subr.mxu0 0.0
    %514 = vmatpush1.xpose.msra.mxu0 0.0
    %515 = vmatprep.subr.mxu0 0.0
    %516 = vmatpush1.xpose.msra.mxu0 0.0
    %517 = vmatprep.subr.mxu0 0.0
    %518 = vmatpush1.xpose.msra.mxu0 0.0
    %519 = vmatprep.subr.mxu0 0.0
    %520 = vmatpush1.xpose.msra.mxu0 0.0
    %521 = vmatprep.subr.mxu0 0.0
    %522 = vmatpush1.xpose.msra.mxu0 0.0
    %523 = vmatprep.subr.mxu0 0.0
    %524 = vmatpush1.xpose.msra.mxu0 0.0
    %525 = vmatprep.subr.mxu0 0.0
    %526 = vmatpush1.xpose.msra.mxu0 0.0
    %527 = vmatprep.subr.mxu0 0.0
    %528 = vmatpush1.xpose.msra.mxu0 0.0
    %529 = vmatprep.subr.mxu0 0.0
    %530 = vmatpush1.xpose.msra.mxu0 0.0
    %531 = vmatprep.subr.mxu0 0.0
    %532 = vmatpush1.xpose.msra.mxu0 0.0
    %533 = vmatprep.subr.mxu0 0.0
    %534 = vmatpush1.xpose.msra.mxu0 0.0
    %535 = vmatprep.subr.mxu0 0.0
    %536 = vmatpush1.xpose.msra.mxu0 0.0
    %537 = vmatprep.subr.mxu0 0.0
    %538 = vmatpush1.xpose.msra.mxu0 0.0
    %539 = vmatprep.subr.mxu0 0.0
    %540 = vmatpush1.xpose.msra.mxu0 0.0
    %541 = vmatprep.subr.mxu0 0.0
    %542 = vmatpush1.xpose.msra.mxu0 0.0
    %543 = vmatprep.subr.mxu0 0.0
    %544 = vmatpush1.xpose.msra.mxu0 0.0
    %545 = vmatprep.subr.mxu0 0.0
    %546 = vmatpush1.xpose.msra.mxu0 0.0
    %547 = vmatprep.subr.mxu0 0.0
    %548 = vmatpush1.xpose.msra.mxu0 0.0
    %549 = vmatprep.subr.mxu0 0.0
    %550 = vmatpush1.xpose.msra.mxu0 0.0
    %551 = vmatprep.subr.mxu0 0.0
    %552 = vmatpush1.xpose.msra.mxu0 0.0
    %553 = vmatprep.subr.mxu0 0.0
    %554 = vmatpush1.xpose.msra.mxu0 0.0
    %555 = vmatprep.subr.mxu0 0.0
    %556 = vmatpush1.xpose.msra.mxu0 0.0
    %557 = vmatprep.subr.mxu0 0.0
    %558 = vmatpush1.xpose.msra.mxu0 0.0
    %559 = vmatprep.subr.mxu0 0.0
    %560 = vmatpush1.xpose.msra.mxu0 0.0
    %561 = vmatprep.subr.mxu0 0.0
    %562 = vmatpush1.xpose.msra.mxu0 0.0
    %563 = vmatprep.subr.mxu0 0.0
    %564 = vmatpush1.xpose.msra.mxu0 0.0
    %565 = vmatprep.subr.mxu0 0.0
    %566 = vmatpush1.xpose.msra.mxu0 0.0
    %567 = vmatprep.mubr.f32.mxu0 0.0
    %568 = vmatmul.mubr.f32.gmra.mrb[0].mxu0 %v499
    %v569 = vpop.f32.mrb[0].mxu0
    %v570 = vadd.f32 0.0, %v569
    %v571 = vpop.f32.mrb[0].mxu0
    %572 = vdwg.mxu0
    %573 = vrot.lane.b32.xlu0 %v161, 120
    %v574 = vpop.permute.xlu0 %573
    %575 = vrot.lane.b32.xlu0 %v161, 88
    %v576 = vpop.permute.xlu0 %575
    %v577 = vsel %vm167, %v574, 0
    %v579 = vsel %vm167, %v576, 0
    %581 = vmatprep.subr.mxu0 0.0
    %582 = vmatpush1.xpose.msra.mxu0 %v579
    %583 = vmatprep.subr.mxu0 0.0
    %584 = vmatpush1.xpose.msra.mxu0 0.0
    %585 = vmatprep.subr.mxu0 0.0
    %586 = vmatpush1.xpose.msra.mxu0 0.0
    %587 = vmatprep.subr.mxu0 0.0
    %588 = vmatpush1.xpose.msra.mxu0 0.0
    %589 = vmatprep.subr.mxu0 0.0
    %590 = vmatpush1.xpose.msra.mxu0 0.0
    %591 = vmatprep.subr.mxu0 0.0
    %592 = vmatpush1.xpose.msra.mxu0 0.0
    %593 = vmatprep.subr.mxu0 0.0
    %594 = vmatpush1.xpose.msra.mxu0 0.0
    %595 = vmatprep.subr.mxu0 0.0
    %596 = vmatpush1.xpose.msra.mxu0 0.0
    %597 = vmatprep.subr.mxu0 0.0
    %598 = vmatpush1.xpose.msra.mxu0 0.0
    %599 = vmatprep.subr.mxu0 0.0
    %600 = vmatpush1.xpose.msra.mxu0 0.0
    %601 = vmatprep.subr.mxu0 0.0
    %602 = vmatpush1.xpose.msra.mxu0 0.0
    %603 = vmatprep.subr.mxu0 0.0
    %604 = vmatpush1.xpose.msra.mxu0 0.0
    %605 = vmatprep.subr.mxu0 0.0
    %606 = vmatpush1.xpose.msra.mxu0 0.0
    %607 = vmatprep.subr.mxu0 0.0
    %608 = vmatpush1.xpose.msra.mxu0 0.0
    %609 = vmatprep.subr.mxu0 0.0
    %610 = vmatpush1.xpose.msra.mxu0 0.0
    %611 = vmatprep.subr.mxu0 0.0
    %612 = vmatpush1.xpose.msra.mxu0 0.0
    %613 = vmatprep.subr.mxu0 0.0
    %614 = vmatpush1.xpose.msra.mxu0 0.0
    %615 = vmatprep.subr.mxu0 0.0
    %616 = vmatpush1.xpose.msra.mxu0 0.0
    %617 = vmatprep.subr.mxu0 0.0
    %618 = vmatpush1.xpose.msra.mxu0 0.0
    %619 = vmatprep.subr.mxu0 0.0
    %620 = vmatpush1.xpose.msra.mxu0 0.0
    %621 = vmatprep.subr.mxu0 0.0
    %622 = vmatpush1.xpose.msra.mxu0 0.0
    %623 = vmatprep.subr.mxu0 0.0
    %624 = vmatpush1.xpose.msra.mxu0 0.0
    %625 = vmatprep.subr.mxu0 0.0
    %626 = vmatpush1.xpose.msra.mxu0 0.0
    %627 = vmatprep.subr.mxu0 0.0
    %628 = vmatpush1.xpose.msra.mxu0 0.0
    %629 = vmatprep.subr.mxu0 0.0
    %630 = vmatpush1.xpose.msra.mxu0 0.0
    %631 = vmatprep.subr.mxu0 0.0
    %632 = vmatpush1.xpose.msra.mxu0 0.0
    %633 = vmatprep.subr.mxu0 0.0
    %634 = vmatpush1.xpose.msra.mxu0 0.0
    %635 = vmatprep.subr.mxu0 0.0
    %636 = vmatpush1.xpose.msra.mxu0 0.0
    %637 = vmatprep.subr.mxu0 0.0
    %638 = vmatpush1.xpose.msra.mxu0 0.0
    %639 = vmatprep.subr.mxu0 0.0
    %640 = vmatpush1.xpose.msra.mxu0 0.0
    %641 = vmatprep.subr.mxu0 0.0
    %642 = vmatpush1.xpose.msra.mxu0 0.0
    %643 = vmatprep.subr.mxu0 0.0
    %644 = vmatpush1.xpose.msra.mxu0 0.0
    %645 = vmatprep.mubr.f32.mxu0 0.0
    %646 = vmatmul.mubr.f32.gmra.mrb[0].mxu0 %v577
    %v647 = vpop.f32.mrb[0].mxu0
    %v648 = vadd.f32 0.0, %v647
    %v649 = vpop.f32.mrb[0].mxu0
    %650 = vdwg.mxu0
    %v651 = vmul.f32 %v570, 0.35355338
    %v652 = vmul.f32 %v648, 0.35355338
    %v653 = vsel %vm167, %v651, -inf
    %654 = vmax.xlane.f32.xlu0 %v653
    %v655 = vpop.xlane.xlu0 %654
    %v656 = vsel %vm167, %v652, -inf
    %657 = vmax.xlane.f32.xlu0 %v656
    %v658 = vpop.xlane.xlu0 %657
    %v659 = vsub.f32 %v651, %v655
    %v660 = vsub.f32 %v652, %v658
    %v661 = vmul.f32 %v659, 1.442695
    %v662 = vpow.pop %v661
    %v663 = vmul.f32 %v660, 1.442695
    %v664 = vpow.pop %v663
    %v665 = vsel %vm167, %v662, 0.0
    %666 = vadd.xlane.f32.xlu0 %v665
    %v667 = vpop.xlane.xlu0 %666
    %v668 = vsel %vm167, %v664, 0.0
    %669 = vadd.xlane.f32.xlu0 %v668
    %v670 = vpop.xlane.xlu0 %669
    %v671 = vrcp.pop %v667
    %v672 = vrcp.pop %v670
    %v673 = vmul.f32 %v662, %v671
    %v674 = vmul.f32 %v664, %v672
    %675 = vrot.lane.b32.xlu0 %v156, 56
    %v676 = vpop.permute.xlu0 %675
    %v679 = vsel %vm167, %v673, 0
    %681 = vmatprep.subr.mxu0 0.0
    %682 = vmatpush1.msra.mxu0 %v676
    %683 = vmatprep.subr.mxu0 0.0
    %684 = vmatpush1.msra.mxu0 0.0
    %685 = vmatprep.subr.mxu0 0.0
    %686 = vmatpush1.msra.mxu0 0.0
    %687 = vmatprep.subr.mxu0 0.0
    %688 = vmatpush1.msra.mxu0 0.0
    %689 = vmatprep.subr.mxu0 0.0
    %690 = vmatpush1.msra.mxu0 0.0
    %691 = vmatprep.subr.mxu0 0.0
    %692 = vmatpush1.msra.mxu0 0.0
    %693 = vmatprep.subr.mxu0 0.0
    %694 = vmatpush1.msra.mxu0 0.0
    %695 = vmatprep.subr.mxu0 0.0
    %696 = vmatpush1.msra.mxu0 0.0
    %697 = vmatprep.subr.mxu0 0.0
    %698 = vmatpush1.msra.mxu0 0.0
    %699 = vmatprep.subr.mxu0 0.0
    %700 = vmatpush1.msra.mxu0 0.0
    %701 = vmatprep.subr.mxu0 0.0
    %702 = vmatpush1.msra.mxu0 0.0
    %703 = vmatprep.subr.mxu0 0.0
    %704 = vmatpush1.msra.mxu0 0.0
    %705 = vmatprep.subr.mxu0 0.0
    %706 = vmatpush1.msra.mxu0 0.0
    %707 = vmatprep.subr.mxu0 0.0
    %708 = vmatpush1.msra.mxu0 0.0
    %709 = vmatprep.subr.mxu0 0.0
    %710 = vmatpush1.msra.mxu0 0.0
    %711 = vmatprep.subr.mxu0 0.0
    %712 = vmatpush1.msra.mxu0 0.0
    %713 = vmatprep.subr.mxu0 0.0
    %714 = vmatpush1.msra.mxu0 0.0
    %715 = vmatprep.subr.mxu0 0.0
    %716 = vmatpush1.msra.mxu0 0.0
    %717 = vmatprep.subr.mxu0 0.0
    %718 = vmatpush1.msra.mxu0 0.0
    %719 = vmatprep.subr.mxu0 0.0
    %720 = vmatpush1.msra.mxu0 0.0
    %721 = vmatprep.subr.mxu0 0.0
    %722 = vmatpush1.msra.mxu0 0.0
    %723 = vmatprep.subr.mxu0 0.0
    %724 = vmatpush1.msra.mxu0 0.0
    %725 = vmatprep.subr.mxu0 0.0
    %726 = vmatpush1.msra.mxu0 0.0
    %727 = vmatprep.subr.mxu0 0.0
    %728 = vmatpush1.msra.mxu0 0.0
    %729 = vmatprep.subr.mxu0 0.0
    %730 = vmatpush1.msra.mxu0 0.0
    %731 = vmatprep.subr.mxu0 0.0
    %732 = vmatpush1.msra.mxu0 0.0
    %733 = vmatprep.subr.mxu0 0.0
    %734 = vmatpush1.msra.mxu0 0.0
    %735 = vmatprep.subr.mxu0 0.0
    %736 = vmatpush1.msra.mxu0 0.0
    %737 = vmatprep.subr.mxu0 0.0
    %738 = vmatpush1.msra.mxu0 0.0
    %739 = vmatprep.subr.mxu0 0.0
    %740 = vmatpush1.msra.mxu0 0.0
    %741 = vmatprep.subr.mxu0 0.0
    %742 = vmatpush1.msra.mxu0 0.0
    %743 = vmatprep.subr.mxu0 0.0
    %744 = vmatpush1.msra.mxu0 0.0
    %745 = vmatprep.mubr.f32.mxu0 0.0
    %746 = vmatmul.mubr.f32.gmra.mrb[0].mxu0 %v679
    %v747 = vpop.f32.mrb[0].mxu0
    %v748 = vadd.f32 0.0, %v747
    %v749 = vpop.f32.mrb[0].mxu0
    %750 = vdwg.mxu0
    %751 = vrot.lane.b32.xlu0 %v161, 56
    %v752 = vpop.permute.xlu0 %751
    %v755 = vsel %vm167, %v674, 0
    %757 = vmatprep.subr.mxu0 0.0
    %758 = vmatpush1.msra.mxu0 %v752
    %759 = vmatprep.subr.mxu0 0.0
    %760 = vmatpush1.msra.mxu0 0.0
    %761 = vmatprep.subr.mxu0 0.0
    %762 = vmatpush1.msra.mxu0 0.0
    %763 = vmatprep.subr.mxu0 0.0
    %764 = vmatpush1.msra.mxu0 0.0
    %765 = vmatprep.subr.mxu0 0.0
    %766 = vmatpush1.msra.mxu0 0.0
    %767 = vmatprep.subr.mxu0 0.0
    %768 = vmatpush1.msra.mxu0 0.0
    %769 = vmatprep.subr.mxu0 0.0
    %770 = vmatpush1.msra.mxu0 0.0
    %771 = vmatprep.subr.mxu0 0.0
    %772 = vmatpush1.msra.mxu0 0.0
    %773 = vmatprep.subr.mxu0 0.0
    %774 = vmatpush1.msra.mxu0 0.0
    %775 = vmatprep.subr.mxu0 0.0
    %776 = vmatpush1.msra.mxu0 0.0
    %777 = vmatprep.subr.mxu0 0.0
    %778 = vmatpush1.msra.mxu0 0.0
    %779 = vmatprep.subr.mxu0 0.0
    %780 = vmatpush1.msra.mxu0 0.0
    %781 = vmatprep.subr.mxu0 0.0
    %782 = vmatpush1.msra.mxu0 0.0
    %783 = vmatprep.subr.mxu0 0.0
    %784 = vmatpush1.msra.mxu0 0.0
    %785 = vmatprep.subr.mxu0 0.0
    %786 = vmatpush1.msra.mxu0 0.0
    %787 = vmatprep.subr.mxu0 0.0
    %788 = vmatpush1.msra.mxu0 0.0
    %789 = vmatprep.subr.mxu0 0.0
    %790 = vmatpush1.msra.mxu0 0.0
    %791 = vmatprep.subr.mxu0 0.0
    %792 = vmatpush1.msra.mxu0 0.0
    %793 = vmatprep.subr.mxu0 0.0
    %794 = vmatpush1.msra.mxu0 0.0
    %795 = vmatprep.subr.mxu0 0.0
    %796 = vmatpush1.msra.mxu0 0.0
    %797 = vmatprep.subr.mxu0 0.0
    %798 = vmatpush1.msra.mxu0 0.0
    %799 = vmatprep.subr.mxu0 0.0
    %800 = vmatpush1.msra.mxu0 0.0
    %801 = vmatprep.subr.mxu0 0.0
    %802 = vmatpush1.msra.mxu0 0.0
    %803 = vmatprep.subr.mxu0 0.0
    %804 = vmatpush1.msra.mxu0 0.0
    %805 = vmatprep.subr.mxu0 0.0
    %806 = vmatpush1.msra.mxu0 0.0
    %807 = vmatprep.subr.mxu0 0.0
    %808 = vmatpush1.msra.mxu0 0.0
    %809 = vmatprep.subr.mxu0 0.0
    %810 = vmatpush1.msra.mxu0 0.0
    %811 = vmatprep.subr.mxu0 0.0
    %812 = vmatpush1.msra.mxu0 0.0
    %813 = vmatprep.subr.mxu0 0.0
    %814 = vmatpush1.msra.mxu0 0.0
    %815 = vmatprep.subr.mxu0 0.0
    %816 = vmatpush1.msra.mxu0 0.0
    %817 = vmatprep.subr.mxu0 0.0
    %818 = vmatpush1.msra.mxu0 0.0
    %819 = vmatprep.subr.mxu0 0.0
    %820 = vmatpush1.msra.mxu0 0.0
    %821 = vmatprep.mubr.f32.mxu0 0.0
    %822 = vmatmul.mubr.f32.gmra.mrb[0].mxu0 %v755
    %v823 = vpop.f32.mrb[0].mxu0
    %v824 = vadd.f32 0.0, %v823
    %v825 = vpop.f32.mrb[0].mxu0
    %826 = vdwg.mxu0
    %827 = vrot.lane.b32.xlu0 %v156, 112
    %v828 = vpop.permute.xlu0 %827
    %829 = vrot.lane.b32.xlu0 %v156, 80
    %v830 = vpop.permute.xlu0 %829
    %v831 = vsel %vm167, %v828, 0
    %v833 = vsel %vm167, %v830, 0
    %835 = vmatprep.subr.mxu0 0.0
    %836 = vmatpush1.xpose.msra.mxu0 %v833
    %837 = vmatprep.subr.mxu0 0.0
    %838 = vmatpush1.xpose.msra.mxu0 0.0
    %839 = vmatprep.subr.mxu0 0.0
    %840 = vmatpush1.xpose.msra.mxu0 0.0
    %841 = vmatprep.subr.mxu0 0.0
    %842 = vmatpush1.xpose.msra.mxu0 0.0
    %843 = vmatprep.subr.mxu0 0.0
    %844 = vmatpush1.xpose.msra.mxu0 0.0
    %845 = vmatprep.subr.mxu0 0.0
    %846 = vmatpush1.xpose.msra.mxu0 0.0
    %847 = vmatprep.subr.mxu0 0.0
    %848 = vmatpush1.xpose.msra.mxu0 0.0
    %849 = vmatprep.subr.mxu0 0.0
    %850 = vmatpush1.xpose.msra.mxu0 0.0
    %851 = vmatprep.subr.mxu0 0.0
    %852 = vmatpush1.xpose.msra.mxu0 0.0
    %853 = vmatprep.subr.mxu0 0.0
    %854 = vmatpush1.xpose.msra.mxu0 0.0
    %855 = vmatprep.subr.mxu0 0.0
    %856 = vmatpush1.xpose.msra.mxu0 0.0
    %857 = vmatprep.subr.mxu0 0.0
    %858 = vmatpush1.xpose.msra.mxu0 0.0
    %859 = vmatprep.subr.mxu0 0.0
    %860 = vmatpush1.xpose.msra.mxu0 0.0
    %861 = vmatprep.subr.mxu0 0.0
    %862 = vmatpush1.xpose.msra.mxu0 0.0
    %863 = vmatprep.subr.mxu0 0.0
    %864 = vmatpush1.xpose.msra.mxu0 0.0
    %865 = vmatprep.subr.mxu0 0.0
    %866 = vmatpush1.xpose.msra.mxu0 0.0
    %867 = vmatprep.subr.mxu0 0.0
    %868 = vmatpush1.xpose.msra.mxu0 0.0
    %869 = vmatprep.subr.mxu0 0.0
    %870 = vmatpush1.xpose.msra.mxu0 0.0
    %871 = vmatprep.subr.mxu0 0.0
    %872 = vmatpush1.xpose.msra.mxu0 0.0
    %873 = vmatprep.subr.mxu0 0.0
    %874 = vmatpush1.xpose.msra.mxu0 0.0
    %875 = vmatprep.subr.mxu0 0.0
    %876 = vmatpush1.xpose.msra.mxu0 0.0
    %877 = vmatprep.subr.mxu0 0.0
    %878 = vmatpush1.xpose.msra.mxu0 0.0
    %879 = vmatprep.subr.mxu0 0.0
    %880 = vmatpush1.xpose.msra.mxu0 0.0
    %881 = vmatprep.subr.mxu0 0.0
    %882 = vmatpush1.xpose.msra.mxu0 0.0
    %883 = vmatprep.subr.mxu0 0.0
    %884 = vmatpush1.xpose.msra.mxu0 0.0
    %885 = vmatprep.subr.mxu0 0.0
    %886 = vmatpush1.xpose.msra.mxu0 0.0
    %887 = vmatprep.subr.mxu0 0.0
    %888 = vmatpush1.xpose.msra.mxu0 0.0
    %889 = vmatprep.subr.mxu0 0.0
    %890 = vmatpush1.xpose.msra.mxu0 0.0
    %891 = vmatprep.subr.mxu0 0.0
    %892 = vmatpush1.xpose.msra.mxu0 0.0
    %893 = vmatprep.subr.mxu0 0.0
    %894 = vmatpush1.xpose.msra.mxu0 0.0
    %895 = vmatprep.subr.mxu0 0.0
    %896 = vmatpush1.xpose.msra.mxu0 0.0
    %897 = vmatprep.subr.mxu0 0.0
    %898 = vmatpush1.xpose.msra.mxu0 0.0
    %899 = vmatprep.mubr.f32.mxu0 0.0
    %900 = vmatmul.mubr.f32.gmra.mrb[0].mxu0 %v831
    %v901 = vpop.f32.mrb[0].mxu0
    %v902 = vadd.f32 0.0, %v901
    %v903 = vpop.f32.mrb[0].mxu0
    %904 = vdwg.mxu0
    %905 = vrot.lane.b32.xlu0 %v161, 112
    %v906 = vpop.permute.xlu0 %905
    %907 = vrot.lane.b32.xlu0 %v161, 80
    %v908 = vpop.permute.xlu0 %907
    %v909 = vsel %vm167, %v906, 0
    %v911 = vsel %vm167, %v908, 0
    %913 = vmatprep.subr.mxu0 0.0
    %914 = vmatpush1.xpose.msra.mxu0 %v911
    %915 = vmatprep.subr.mxu0 0.0
    %916 = vmatpush1.xpose.msra.mxu0 0.0
    %917 = vmatprep.subr.mxu0 0.0
    %918 = vmatpush1.xpose.msra.mxu0 0.0
    %919 = vmatprep.subr.mxu0 0.0
    %920 = vmatpush1.xpose.msra.mxu0 0.0
    %921 = vmatprep.subr.mxu0 0.0
    %922 = vmatpush1.xpose.msra.mxu0 0.0
    %923 = vmatprep.subr.mxu0 0.0
    %924 = vmatpush1.xpose.msra.mxu0 0.0
    %925 = vmatprep.subr.mxu0 0.0
    %926 = vmatpush1.xpose.msra.mxu0 0.0
    %927 = vmatprep.subr.mxu0 0.0
    %928 = vmatpush1.xpose.msra.mxu0 0.0
    %929 = vmatprep.subr.mxu0 0.0
    %930 = vmatpush1.xpose.msra.mxu0 0.0
    %931 = vmatprep.subr.mxu0 0.0
    %932 = vmatpush1.xpose.msra.mxu0 0.0
    %933 = vmatprep.subr.mxu0 0.0
    %934 = vmatpush1.xpose.msra.mxu0 0.0
    %935 = vmatprep.subr.mxu0 0.0
    %936 = vmatpush1.xpose.msra.mxu0 0.0
    %937 = vmatprep.subr.mxu0 0.0
    %938 = vmatpush1.xpose.msra.mxu0 0.0
    %939 = vmatprep.subr.mxu0 0.0
    %940 = vmatpush1.xpose.msra.mxu0 0.0
    %941 = vmatprep.subr.mxu0 0.0
    %942 = vmatpush1.xpose.msra.mxu0 0.0
    %943 = vmatprep.subr.mxu0 0.0
    %944 = vmatpush1.xpose.msra.mxu0 0.0
    %945 = vmatprep.subr.mxu0 0.0
    %946 = vmatpush1.xpose.msra.mxu0 0.0
    %947 = vmatprep.subr.mxu0 0.0
    %948 = vmatpush1.xpose.msra.mxu0 0.0
    %949 = vmatprep.subr.mxu0 0.0
    %950 = vmatpush1.xpose.msra.mxu0 0.0
    %951 = vmatprep.subr.mxu0 0.0
    %952 = vmatpush1.xpose.msra.mxu0 0.0
    %953 = vmatprep.subr.mxu0 0.0
    %954 = vmatpush1.xpose.msra.mxu0 0.0
    %955 = vmatprep.subr.mxu0 0.0
    %956 = vmatpush1.xpose.msra.mxu0 0.0
    %957 = vmatprep.subr.mxu0 0.0
    %958 = vmatpush1.xpose.msra.mxu0 0.0
    %959 = vmatprep.subr.mxu0 0.0
    %960 = vmatpush1.xpose.msra.mxu0 0.0
    %961 = vmatprep.subr.mxu0 0.0
    %962 = vmatpush1.xpose.msra.mxu0 0.0
    %963 = vmatprep.subr.mxu0 0.0
    %964 = vmatpush1.xpose.msra.mxu0 0.0
    %965 = vmatprep.subr.mxu0 0.0
    %966 = vmatpush1.xpose.msra.mxu0 0.0
    %967 = vmatprep.subr.mxu0 0.0
    %968 = vmatpush1.xpose.msra.mxu0 0.0
    %969 = vmatprep.subr.mxu0 0.0
    %970 = vmatpush1.xpose.msra.mxu0 0.0
    %971 = vmatprep.subr.mxu0 0.0
    %972 = vmatpush1.xpose.msra.mxu0 0.0
    %973 = vmatprep.subr.mxu0 0.0
    %974 = vmatpush1.xpose.msra.mxu0 0.0
    %975 = vmatprep.subr.mxu0 0.0
    %976 = vmatpush1.xpose.msra.mxu0 0.0
    %977 = vmatprep.mubr.f32.mxu0 0.0
    %978 = vmatmul.mubr.f32.gmra.mrb[0].mxu0 %v909
    %v979 = vpop.f32.mrb[0].mxu0
    %v980 = vadd.f32 0.0, %v979
    %v981 = vpop.f32.mrb[0].mxu0
    %982 = vdwg.mxu0
    %v983 = vmul.f32 %v902, 0.35355338
    %v984 = vmul.f32 %v980, 0.35355338
    %v985 = vsel %vm167, %v983, -inf
    %986 = vmax.xlane.f32.xlu0 %v985
    %v987 = vpop.xlane.xlu0 %986
    %v988 = vsel %vm167, %v984, -inf
    %989 = vmax.xlane.f32.xlu0 %v988
    %v990 = vpop.xlane.xlu0 %989
    %v991 = vsub.f32 %v983, %v987
    %v992 = vsub.f32 %v984, %v990
    %v993 = vmul.f32 %v991, 1.442695
    %v994 = vpow.pop %v993
    %v995 = vmul.f32 %v992, 1.442695
    %v996 = vpow.pop %v995
    %v997 = vsel %vm167, %v994, 0.0
    %998 = vadd.xlane.f32.xlu0 %v997
    %v999 = vpop.xlane.xlu0 %998
    %v1000 = vsel %vm167, %v996, 0.0
    %1001 = vadd.xlane.f32.xlu0 %v1000
    %v1002 = vpop.xlane.xlu0 %1001
    %v1003 = vrcp.pop %v999
    %v1004 = vrcp.pop %v1002
    %v1005 = vmul.f32 %v994, %v1003
    %v1006 = vmul.f32 %v996, %v1004
    %1007 = vrot.lane.b32.xlu0 %v156, 48
    %v1008 = vpop.permute.xlu0 %1007
    %v1011 = vsel %vm167, %v1005, 0
    %1013 = vmatprep.subr.mxu0 0.0
    %1014 = vmatpush1.msra.mxu0 %v1008
    %1015 = vmatprep.subr.mxu0 0.0
    %1016 = vmatpush1.msra.mxu0 0.0
    %1017 = vmatprep.subr.mxu0 0.0
    %1018 = vmatpush1.msra.mxu0 0.0
    %1019 = vmatprep.subr.mxu0 0.0
    %1020 = vmatpush1.msra.mxu0 0.0
    %1021 = vmatprep.subr.mxu0 0.0
    %1022 = vmatpush1.msra.mxu0 0.0
    %1023 = vmatprep.subr.mxu0 0.0
    %1024 = vmatpush1.msra.mxu0 0.0
    %1025 = vmatprep.subr.mxu0 0.0
    %1026 = vmatpush1.msra.mxu0 0.0
    %1027 = vmatprep.subr.mxu0 0.0
    %1028 = vmatpush1.msra.mxu0 0.0
    %1029 = vmatprep.subr.mxu0 0.0
    %1030 = vmatpush1.msra.mxu0 0.0
    %1031 = vmatprep.subr.mxu0 0.0
    %1032 = vmatpush1.msra.mxu0 0.0
    %1033 = vmatprep.subr.mxu0 0.0
    %1034 = vmatpush1.msra.mxu0 0.0
    %1035 = vmatprep.subr.mxu0 0.0
    %1036 = vmatpush1.msra.mxu0 0.0
    %1037 = vmatprep.subr.mxu0 0.0
    %1038 = vmatpush1.msra.mxu0 0.0
    %1039 = vmatprep.subr.mxu0 0.0
    %1040 = vmatpush1.msra.mxu0 0.0
    %1041 = vmatprep.subr.mxu0 0.0
    %1042 = vmatpush1.msra.mxu0 0.0
    %1043 = vmatprep.subr.mxu0 0.0
    %1044 = vmatpush1.msra.mxu0 0.0
    %1045 = vmatprep.subr.mxu0 0.0
    %1046 = vmatpush1.msra.mxu0 0.0
    %1047 = vmatprep.subr.mxu0 0.0
    %1048 = vmatpush1.msra.mxu0 0.0
    %1049 = vmatprep.subr.mxu0 0.0
    %1050 = vmatpush1.msra.mxu0 0.0
    %1051 = vmatprep.subr.mxu0 0.0
    %1052 = vmatpush1.msra.mxu0 0.0
    %1053 = vmatprep.subr.mxu0 0.0
    %1054 = vmatpush1.msra.mxu0 0.0
    %1055 = vmatprep.subr.mxu0 0.0
    %1056 = vmatpush1.msra.mxu0 0.0
    %1057 = vmatprep.subr.mxu0 0.0
    %1058 = vmatpush1.msra.mxu0 0.0
    %1059 = vmatprep.subr.mxu0 0.0
    %1060 = vmatpush1.msra.mxu0 0.0
    %1061 = vmatprep.subr.mxu0 0.0
    %1062 = vmatpush1.msra.mxu0 0.0
    %1063 = vmatprep.subr.mxu0 0.0
    %1064 = vmatpush1.msra.mxu0 0.0
    %1065 = vmatprep.subr.mxu0 0.0
    %1066 = vmatpush1.msra.mxu0 0.0
    %1067 = vmatprep.subr.mxu0 0.0
    %1068 = vmatpush1.msra.mxu0 0.0
    %1069 = vmatprep.subr.mxu0 0.0
    %1070 = vmatpush1.msra.mxu0 0.0
    %1071 = vmatprep.subr.mxu0 0.0
    %1072 = vmatpush1.msra.mxu0 0.0
    %1073 = vmatprep.subr.mxu0 0.0
    %1074 = vmatpush1.msra.mxu0 0.0
    %1075 = vmatprep.subr.mxu0 0.0
    %1076 = vmatpush1.msra.mxu0 0.0
    %1077 = vmatprep.mubr.f32.mxu0 0.0
    %1078 = vmatmul.mubr.f32.gmra.mrb[0].mxu0 %v1011
    %v1079 = vpop.f32.mrb[0].mxu0
    %v1080 = vadd.f32 0.0, %v1079
    %v1081 = vpop.f32.mrb[0].mxu0
    %1082 = vdwg.mxu0
    %1083 = vrot.lane.b32.xlu0 %v161, 48
    %v1084 = vpop.permute.xlu0 %1083
    %v1087 = vsel %vm167, %v1006, 0
    %1089 = vmatprep.subr.mxu0 0.0
    %1090 = vmatpush1.msra.mxu0 %v1084
    %1091 = vmatprep.subr.mxu0 0.0
    %1092 = vmatpush1.msra.mxu0 0.0
    %1093 = vmatprep.subr.mxu0 0.0
    %1094 = vmatpush1.msra.mxu0 0.0
    %1095 = vmatprep.subr.mxu0 0.0
    %1096 = vmatpush1.msra.mxu0 0.0
    %1097 = vmatprep.subr.mxu0 0.0
    %1098 = vmatpush1.msra.mxu0 0.0
    %1099 = vmatprep.subr.mxu0 0.0
    %1100 = vmatpush1.msra.mxu0 0.0
    %1101 = vmatprep.subr.mxu0 0.0
    %1102 = vmatpush1.msra.mxu0 0.0
    %1103 = vmatprep.subr.mxu0 0.0
    %1104 = vmatpush1.msra.mxu0 0.0
    %1105 = vmatprep.subr.mxu0 0.0
    %1106 = vmatpush1.msra.mxu0 0.0
    %1107 = vmatprep.subr.mxu0 0.0
    %1108 = vmatpush1.msra.mxu0 0.0
    %1109 = vmatprep.subr.mxu0 0.0
    %1110 = vmatpush1.msra.mxu0 0.0
    %1111 = vmatprep.subr.mxu0 0.0
    %1112 = vmatpush1.msra.mxu0 0.0
    %1113 = vmatprep.subr.mxu0 0.0
    %1114 = vmatpush1.msra.mxu0 0.0
    %1115 = vmatprep.subr.mxu0 0.0
    %1116 = vmatpush1.msra.mxu0 0.0
    %1117 = vmatprep.subr.mxu0 0.0
    %1118 = vmatpush1.msra.mxu0 0.0
    %1119 = vmatprep.subr.mxu0 0.0
    %1120 = vmatpush1.msra.mxu0 0.0
    %1121 = vmatprep.subr.mxu0 0.0
    %1122 = vmatpush1.msra.mxu0 0.0
    %1123 = vmatprep.subr.mxu0 0.0
    %1124 = vmatpush1.msra.mxu0 0.0
    %1125 = vmatprep.subr.mxu0 0.0
    %1126 = vmatpush1.msra.mxu0 0.0
    %1127 = vmatprep.subr.mxu0 0.0
    %1128 = vmatpush1.msra.mxu0 0.0
    %1129 = vmatprep.subr.mxu0 0.0
    %1130 = vmatpush1.msra.mxu0 0.0
    %1131 = vmatprep.subr.mxu0 0.0
    %1132 = vmatpush1.msra.mxu0 0.0
    %1133 = vmatprep.subr.mxu0 0.0
    %1134 = vmatpush1.msra.mxu0 0.0
    %1135 = vmatprep.subr.mxu0 0.0
    %1136 = vmatpush1.msra.mxu0 0.0
    %1137 = vmatprep.subr.mxu0 0.0
    %1138 = vmatpush1.msra.mxu0 0.0
    %1139 = vmatprep.subr.mxu0 0.0
    %1140 = vmatpush1.msra.mxu0 0.0
    %1141 = vmatprep.subr.mxu0 0.0
    %1142 = vmatpush1.msra.mxu0 0.0
    %1143 = vmatprep.subr.mxu0 0.0
    %1144 = vmatpush1.msra.mxu0 0.0
    %1145 = vmatprep.subr.mxu0 0.0
    %1146 = vmatpush1.msra.mxu0 0.0
    %1147 = vmatprep.subr.mxu0 0.0
    %1148 = vmatpush1.msra.mxu0 0.0
    %1149 = vmatprep.subr.mxu0 0.0
    %1150 = vmatpush1.msra.mxu0 0.0
    %1151 = vmatprep.subr.mxu0 0.0
    %1152 = vmatpush1.msra.mxu0 0.0
    %1153 = vmatprep.mubr.f32.mxu0 0.0
    %1154 = vmatmul.mubr.f32.gmra.mrb[0].mxu0 %v1087
    %v1155 = vpop.f32.mrb[0].mxu0
    %v1156 = vadd.f32 0.0, %v1155
    %v1157 = vpop.f32.mrb[0].mxu0
    %1158 = vdwg.mxu0
    %1159 = vrot.lane.b32.xlu0 %v156, 104
    %v1160 = vpop.permute.xlu0 %1159
    %1161 = vrot.lane.b32.xlu0 %v156, 72
    %v1162 = vpop.permute.xlu0 %1161
    %v1163 = vsel %vm167, %v1160, 0
    %v1165 = vsel %vm167, %v1162, 0
    %1167 = vmatprep.subr.mxu0 0.0
    %1168 = vmatpush1.xpose.msra.mxu0 %v1165
    %1169 = vmatprep.subr.mxu0 0.0
    %1170 = vmatpush1.xpose.msra.mxu0 0.0
    %1171 = vmatprep.subr.mxu0 0.0
    %1172 = vmatpush1.xpose.msra.mxu0 0.0
    %1173 = vmatprep.subr.mxu0 0.0
    %1174 = vmatpush1.xpose.msra.mxu0 0.0
    %1175 = vmatprep.subr.mxu0 0.0
    %1176 = vmatpush1.xpose.msra.mxu0 0.0
    %1177 = vmatprep.subr.mxu0 0.0
    %1178 = vmatpush1.xpose.msra.mxu0 0.0
    %1179 = vmatprep.subr.mxu0 0.0
    %1180 = vmatpush1.xpose.msra.mxu0 0.0
    %1181 = vmatprep.subr.mxu0 0.0
    %1182 = vmatpush1.xpose.msra.mxu0 0.0
    %1183 = vmatprep.subr.mxu0 0.0
    %1184 = vmatpush1.xpose.msra.mxu0 0.0
    %1185 = vmatprep.subr.mxu0 0.0
    %1186 = vmatpush1.xpose.msra.mxu0 0.0
    %1187 = vmatprep.subr.mxu0 0.0
    %1188 = vmatpush1.xpose.msra.mxu0 0.0
    %1189 = vmatprep.subr.mxu0 0.0
    %1190 = vmatpush1.xpose.msra.mxu0 0.0
    %1191 = vmatprep.subr.mxu0 0.0
    %1192 = vmatpush1.xpose.msra.mxu0 0.0
    %1193 = vmatprep.subr.mxu0 0.0
    %1194 = vmatpush1.xpose.msra.mxu0 0.0
    %1195 = vmatprep.subr.mxu0 0.0
    %1196 = vmatpush1.xpose.msra.mxu0 0.0
    %1197 = vmatprep.subr.mxu0 0.0
    %1198 = vmatpush1.xpose.msra.mxu0 0.0
    %1199 = vmatprep.subr.mxu0 0.0
    %1200 = vmatpush1.xpose.msra.mxu0 0.0
    %1201 = vmatprep.subr.mxu0 0.0
    %1202 = vmatpush1.xpose.msra.mxu0 0.0
    %1203 = vmatprep.subr.mxu0 0.0
    %1204 = vmatpush1.xpose.msra.mxu0 0.0
    %1205 = vmatprep.subr.mxu0 0.0
    %1206 = vmatpush1.xpose.msra.mxu0 0.0
    %1207 = vmatprep.subr.mxu0 0.0
    %1208 = vmatpush1.xpose.msra.mxu0 0.0
    %1209 = vmatprep.subr.mxu0 0.0
    %1210 = vmatpush1.xpose.msra.mxu0 0.0
    %1211 = vmatprep.subr.mxu0 0.0
    %1212 = vmatpush1.xpose.msra.mxu0 0.0
    %1213 = vmatprep.subr.mxu0 0.0
    %1214 = vmatpush1.xpose.msra.mxu0 0.0
    %1215 = vmatprep.subr.mxu0 0.0
    %1216 = vmatpush1.xpose.msra.mxu0 0.0
    %1217 = vmatprep.subr.mxu0 0.0
    %1218 = vmatpush1.xpose.msra.mxu0 0.0
    %1219 = vmatprep.subr.mxu0 0.0
    %1220 = vmatpush1.xpose.msra.mxu0 0.0
    %1221 = vmatprep.subr.mxu0 0.0
    %1222 = vmatpush1.xpose.msra.mxu0 0.0
    %1223 = vmatprep.subr.mxu0 0.0
    %1224 = vmatpush1.xpose.msra.mxu0 0.0
    %1225 = vmatprep.subr.mxu0 0.0
    %1226 = vmatpush1.xpose.msra.mxu0 0.0
    %1227 = vmatprep.subr.mxu0 0.0
    %1228 = vmatpush1.xpose.msra.mxu0 0.0
    %1229 = vmatprep.subr.mxu0 0.0
    %1230 = vmatpush1.xpose.msra.mxu0 0.0
    %1231 = vmatprep.mubr.f32.mxu0 0.0
    %1232 = vmatmul.mubr.f32.gmra.mrb[0].mxu0 %v1163
    %v1233 = vpop.f32.mrb[0].mxu0
    %v1234 = vadd.f32 0.0, %v1233
    %v1235 = vpop.f32.mrb[0].mxu0
    %1236 = vdwg.mxu0
    %1237 = vrot.lane.b32.xlu0 %v161, 104
    %v1238 = vpop.permute.xlu0 %1237
    %1239 = vrot.lane.b32.xlu0 %v161, 72
    %v1240 = vpop.permute.xlu0 %1239
    %v1241 = vsel %vm167, %v1238, 0
    %v1243 = vsel %vm167, %v1240, 0
    %1245 = vmatprep.subr.mxu0 0.0
    %1246 = vmatpush1.xpose.msra.mxu0 %v1243
    %1247 = vmatprep.subr.mxu0 0.0
    %1248 = vmatpush1.xpose.msra.mxu0 0.0
    %1249 = vmatprep.subr.mxu0 0.0
    %1250 = vmatpush1.xpose.msra.mxu0 0.0
    %1251 = vmatprep.subr.mxu0 0.0
    %1252 = vmatpush1.xpose.msra.mxu0 0.0
    %1253 = vmatprep.subr.mxu0 0.0
    %1254 = vmatpush1.xpose.msra.mxu0 0.0
    %1255 = vmatprep.subr.mxu0 0.0
    %1256 = vmatpush1.xpose.msra.mxu0 0.0
    %1257 = vmatprep.subr.mxu0 0.0
    %1258 = vmatpush1.xpose.msra.mxu0 0.0
    %1259 = vmatprep.subr.mxu0 0.0
    %1260 = vmatpush1.xpose.msra.mxu0 0.0
    %1261 = vmatprep.subr.mxu0 0.0
    %1262 = vmatpush1.xpose.msra.mxu0 0.0
    %1263 = vmatprep.subr.mxu0 0.0
    %1264 = vmatpush1.xpose.msra.mxu0 0.0
    %1265 = vmatprep.subr.mxu0 0.0
    %1266 = vmatpush1.xpose.msra.mxu0 0.0
    %1267 = vmatprep.subr.mxu0 0.0
    %1268 = vmatpush1.xpose.msra.mxu0 0.0
    %1269 = vmatprep.subr.mxu0 0.0
    %1270 = vmatpush1.xpose.msra.mxu0 0.0
    %1271 = vmatprep.subr.mxu0 0.0
    %1272 = vmatpush1.xpose.msra.mxu0 0.0
    %1273 = vmatprep.subr.mxu0 0.0
    %1274 = vmatpush1.xpose.msra.mxu0 0.0
    %1275 = vmatprep.subr.mxu0 0.0
    %1276 = vmatpush1.xpose.msra.mxu0 0.0
    %1277 = vmatprep.subr.mxu0 0.0
    %1278 = vmatpush1.xpose.msra.mxu0 0.0
    %1279 = vmatprep.subr.mxu0 0.0
    %1280 = vmatpush1.xpose.msra.mxu0 0.0
    %1281 = vmatprep.subr.mxu0 0.0
    %1282 = vmatpush1.xpose.msra.mxu0 0.0
    %1283 = vmatprep.subr.mxu0 0.0
    %1284 = vmatpush1.xpose.msra.mxu0 0.0
    %1285 = vmatprep.subr.mxu0 0.0
    %1286 = vmatpush1.xpose.msra.mxu0 0.0
    %1287 = vmatprep.subr.mxu0 0.0
    %1288 = vmatpush1.xpose.msra.mxu0 0.0
    %1289 = vmatprep.subr.mxu0 0.0
    %1290 = vmatpush1.xpose.msra.mxu0 0.0
    %1291 = vmatprep.subr.mxu0 0.0
    %1292 = vmatpush1.xpose.msra.mxu0 0.0
    %1293 = vmatprep.subr.mxu0 0.0
    %1294 = vmatpush1.xpose.msra.mxu0 0.0
    %1295 = vmatprep.subr.mxu0 0.0
    %1296 = vmatpush1.xpose.msra.mxu0 0.0
    %1297 = vmatprep.subr.mxu0 0.0
    %1298 = vmatpush1.xpose.msra.mxu0 0.0
    %1299 = vmatprep.subr.mxu0 0.0
    %1300 = vmatpush1.xpose.msra.mxu0 0.0
    %1301 = vmatprep.subr.mxu0 0.0
    %1302 = vmatpush1.xpose.msra.mxu0 0.0
    %1303 = vmatprep.subr.mxu0 0.0
    %1304 = vmatpush1.xpose.msra.mxu0 0.0
    %1305 = vmatprep.subr.mxu0 0.0
    %1306 = vmatpush1.xpose.msra.mxu0 0.0
    %1307 = vmatprep.subr.mxu0 0.0
    %1308 = vmatpush1.xpose.msra.mxu0 0.0
    %1309 = vmatprep.mubr.f32.mxu0 0.0
    %1310 = vmatmul.mubr.f32.gmra.mrb[0].mxu0 %v1241
    %v1311 = vpop.f32.mrb[0].mxu0
    %v1312 = vadd.f32 0.0, %v1311
    %v1313 = vpop.f32.mrb[0].mxu0
    %1314 = vdwg.mxu0
    %v1315 = vmul.f32 %v1234, 0.35355338
    %v1316 = vmul.f32 %v1312, 0.35355338
    %v1317 = vsel %vm167, %v1315, -inf
    %1318 = vmax.xlane.f32.xlu0 %v1317
    %v1319 = vpop.xlane.xlu0 %1318
    %v1320 = vsel %vm167, %v1316, -inf
    %1321 = vmax.xlane.f32.xlu0 %v1320
    %v1322 = vpop.xlane.xlu0 %1321
    %v1323 = vsub.f32 %v1315, %v1319
    %v1324 = vsub.f32 %v1316, %v1322
    %v1325 = vmul.f32 %v1323, 1.442695
    %v1326 = vpow.pop %v1325
    %v1327 = vmul.f32 %v1324, 1.442695
    %v1328 = vpow.pop %v1327
    %v1329 = vsel %vm167, %v1326, 0.0
    %1330 = vadd.xlane.f32.xlu0 %v1329
    %v1331 = vpop.xlane.xlu0 %1330
    %v1332 = vsel %vm167, %v1328, 0.0
    %1333 = vadd.xlane.f32.xlu0 %v1332
    %v1334 = vpop.xlane.xlu0 %1333
    %v1335 = vrcp.pop %v1331
    %v1336 = vrcp.pop %v1334
    %v1337 = vmul.f32 %v1326, %v1335
    %v1338 = vmul.f32 %v1328, %v1336
    %1339 = vrot.lane.b32.xlu0 %v156, 40
    %v1340 = vpop.permute.xlu0 %1339
    %v1343 = vsel %vm167, %v1337, 0
    %1345 = vmatprep.subr.mxu0 0.0
    %1346 = vmatpush1.msra.mxu0 %v1340
    %1347 = vmatprep.subr.mxu0 0.0
    %1348 = vmatpush1.msra.mxu0 0.0
    %1349 = vmatprep.subr.mxu0 0.0
    %1350 = vmatpush1.msra.mxu0 0.0
    %1351 = vmatprep.subr.mxu0 0.0
    %1352 = vmatpush1.msra.mxu0 0.0
    %1353 = vmatprep.subr.mxu0 0.0
    %1354 = vmatpush1.msra.mxu0 0.0
    %1355 = vmatprep.subr.mxu0 0.0
    %1356 = vmatpush1.msra.mxu0 0.0
    %1357 = vmatprep.subr.mxu0 0.0
    %1358 = vmatpush1.msra.mxu0 0.0
    %1359 = vmatprep.subr.mxu0 0.0
    %1360 = vmatpush1.msra.mxu0 0.0
    %1361 = vmatprep.subr.mxu0 0.0
    %1362 = vmatpush1.msra.mxu0 0.0
    %1363 = vmatprep.subr.mxu0 0.0
    %1364 = vmatpush1.msra.mxu0 0.0
    %1365 = vmatprep.subr.mxu0 0.0
    %1366 = vmatpush1.msra.mxu0 0.0
    %1367 = vmatprep.subr.mxu0 0.0
    %1368 = vmatpush1.msra.mxu0 0.0
    %1369 = vmatprep.subr.mxu0 0.0
    %1370 = vmatpush1.msra.mxu0 0.0
    %1371 = vmatprep.subr.mxu0 0.0
    %1372 = vmatpush1.msra.mxu0 0.0
    %1373 = vmatprep.subr.mxu0 0.0
    %1374 = vmatpush1.msra.mxu0 0.0
    %1375 = vmatprep.subr.mxu0 0.0
    %1376 = vmatpush1.msra.mxu0 0.0
    %1377 = vmatprep.subr.mxu0 0.0
    %1378 = vmatpush1.msra.mxu0 0.0
    %1379 = vmatprep.subr.mxu0 0.0
    %1380 = vmatpush1.msra.mxu0 0.0
    %1381 = vmatprep.subr.mxu0 0.0
    %1382 = vmatpush1.msra.mxu0 0.0
    %1383 = vmatprep.subr.mxu0 0.0
    %1384 = vmatpush1.msra.mxu0 0.0
    %1385 = vmatprep.subr.mxu0 0.0
    %1386 = vmatpush1.msra.mxu0 0.0
    %1387 = vmatprep.subr.mxu0 0.0
    %1388 = vmatpush1.msra.mxu0 0.0
    %1389 = vmatprep.subr.mxu0 0.0
    %1390 = vmatpush1.msra.mxu0 0.0
    %1391 = vmatprep.subr.mxu0 0.0
    %1392 = vmatpush1.msra.mxu0 0.0
    %1393 = vmatprep.subr.mxu0 0.0
    %1394 = vmatpush1.msra.mxu0 0.0
    %1395 = vmatprep.subr.mxu0 0.0
    %1396 = vmatpush1.msra.mxu0 0.0
    %1397 = vmatprep.subr.mxu0 0.0
    %1398 = vmatpush1.msra.mxu0 0.0
    %1399 = vmatprep.subr.mxu0 0.0
    %1400 = vmatpush1.msra.mxu0 0.0
    %1401 = vmatprep.subr.mxu0 0.0
    %1402 = vmatpush1.msra.mxu0 0.0
    %1403 = vmatprep.subr.mxu0 0.0
    %1404 = vmatpush1.msra.mxu0 0.0
    %1405 = vmatprep.subr.mxu0 0.0
    %1406 = vmatpush1.msra.mxu0 0.0
    %1407 = vmatprep.subr.mxu0 0.0
    %1408 = vmatpush1.msra.mxu0 0.0
    %1409 = vmatprep.mubr.f32.mxu0 0.0
    %1410 = vmatmul.mubr.f32.gmra.mrb[0].mxu0 %v1343
    %v1411 = vpop.f32.mrb[0].mxu0
    %v1412 = vadd.f32 0.0, %v1411
    %v1413 = vpop.f32.mrb[0].mxu0
    %1414 = vdwg.mxu0
    %1415 = vrot.lane.b32.xlu0 %v161, 40
    %v1416 = vpop.permute.xlu0 %1415
    %v1419 = vsel %vm167, %v1338, 0
    %1421 = vmatprep.subr.mxu0 0.0
    %1422 = vmatpush1.msra.mxu0 %v1416
    %1423 = vmatprep.subr.mxu0 0.0
    %1424 = vmatpush1.msra.mxu0 0.0
    %1425 = vmatprep.subr.mxu0 0.0
    %1426 = vmatpush1.msra.mxu0 0.0
    %1427 = vmatprep.subr.mxu0 0.0
    %1428 = vmatpush1.msra.mxu0 0.0
    %1429 = vmatprep.subr.mxu0 0.0
    %1430 = vmatpush1.msra.mxu0 0.0
    %1431 = vmatprep.subr.mxu0 0.0
    %1432 = vmatpush1.msra.mxu0 0.0
    %1433 = vmatprep.subr.mxu0 0.0
    %1434 = vmatpush1.msra.mxu0 0.0
    %1435 = vmatprep.subr.mxu0 0.0
    %1436 = vmatpush1.msra.mxu0 0.0
    %1437 = vmatprep.subr.mxu0 0.0
    %1438 = vmatpush1.msra.mxu0 0.0
    %1439 = vmatprep.subr.mxu0 0.0
    %1440 = vmatpush1.msra.mxu0 0.0
    %1441 = vmatprep.subr.mxu0 0.0
    %1442 = vmatpush1.msra.mxu0 0.0
    %1443 = vmatprep.subr.mxu0 0.0
    %1444 = vmatpush1.msra.mxu0 0.0
    %1445 = vmatprep.subr.mxu0 0.0
    %1446 = vmatpush1.msra.mxu0 0.0
    %1447 = vmatprep.subr.mxu0 0.0
    %1448 = vmatpush1.msra.mxu0 0.0
    %1449 = vmatprep.subr.mxu0 0.0
    %1450 = vmatpush1.msra.mxu0 0.0
    %1451 = vmatprep.subr.mxu0 0.0
    %1452 = vmatpush1.msra.mxu0 0.0
    %1453 = vmatprep.subr.mxu0 0.0
    %1454 = vmatpush1.msra.mxu0 0.0
    %1455 = vmatprep.subr.mxu0 0.0
    %1456 = vmatpush1.msra.mxu0 0.0
    %1457 = vmatprep.subr.mxu0 0.0
    %1458 = vmatpush1.msra.mxu0 0.0
    %1459 = vmatprep.subr.mxu0 0.0
    %1460 = vmatpush1.msra.mxu0 0.0
    %1461 = vmatprep.subr.mxu0 0.0
    %1462 = vmatpush1.msra.mxu0 0.0
    %1463 = vmatprep.subr.mxu0 0.0
    %1464 = vmatpush1.msra.mxu0 0.0
    %1465 = vmatprep.subr.mxu0 0.0
    %1466 = vmatpush1.msra.mxu0 0.0
    %1467 = vmatprep.subr.mxu0 0.0
    %1468 = vmatpush1.msra.mxu0 0.0
    %1469 = vmatprep.subr.mxu0 0.0
    %1470 = vmatpush1.msra.mxu0 0.0
    %1471 = vmatprep.subr.mxu0 0.0
    %1472 = vmatpush1.msra.mxu0 0.0
    %1473 = vmatprep.subr.mxu0 0.0
    %1474 = vmatpush1.msra.mxu0 0.0
    %1475 = vmatprep.subr.mxu0 0.0
    %1476 = vmatpush1.msra.mxu0 0.0
    %1477 = vmatprep.subr.mxu0 0.0
    %1478 = vmatpush1.msra.mxu0 0.0
    %1479 = vmatprep.subr.mxu0 0.0
    %1480 = vmatpush1.msra.mxu0 0.0
    %1481 = vmatprep.subr.mxu0 0.0
    %1482 = vmatpush1.msra.mxu0 0.0
    %1483 = vmatprep.subr.mxu0 0.0
    %1484 = vmatpush1.msra.mxu0 0.0
    %1485 = vmatprep.mubr.f32.mxu0 0.0
    %1486 = vmatmul.mubr.f32.gmra.mrb[0].mxu0 %v1419
    %v1487 = vpop.f32.mrb[0].mxu0
    %v1488 = vadd.f32 0.0, %v1487
    %v1489 = vpop.f32.mrb[0].mxu0
    %1490 = vdwg.mxu0
    %1493 = vrot.lane.b32.xlu0 %v748, 8
    %v1494 = vpop.permute.xlu0 %1493
    %1495 = vrot.lane.b32.xlu0 %v824, 8
    %v1496 = vpop.permute.xlu0 %1495
    %1501 = vrot.lane.b32.xlu0 %v1080, 16
    %v1502 = vpop.permute.xlu0 %1501
    %1503 = vrot.lane.b32.xlu0 %v1156, 16
    %v1504 = vpop.permute.xlu0 %1503
    %1509 = vrot.lane.b32.xlu0 %v1412, 24
    %v1510 = vpop.permute.xlu0 %1509
    %1511 = vrot.lane.b32.xlu0 %v1488, 24
    %v1512 = vpop.permute.xlu0 %1511
    %v1515 = vsel %vm167, %v416, %v1494
    %v1516 = vsel %vm167, %v492, %v1496
    %vm1517 = vcmask 130048
    %v1518 = vsel %vm1517, %v1515, %v1502
    %v1519 = vsel %vm1517, %v1516, %v1504
    %vm1520 = vcmask 195584
    %v1521 = vsel %vm1520, %v1518, %v1510
    %v1522 = vsel %vm1520, %v1519, %v1512
    %v1523 = vld [vmem:[%s4] sm:$0xff]
    %v1524 = vld [vmem:[%s4 + $0x8] sm:$0xff]
    %v1525 = vld [vmem:[%s4 + $0x10] sm:$0xff]
    %v1526 = vld [vmem:[%s4 + $0x18] sm:$0xff]
    %v1527 = vlaneseq
    %v1528 = vshrl.u32 %v1527, 7
    %v1529 = vsub.s32 1, %v1528
    %v1530 = vrot.slane %v73, %v1529
    %v1532 = vsel %vm82, %v1521, 0
    %v1535 = vsel %vm82, %v1522, 0
    %1537 = vmatprep.subr.mxu0 0.0
    %1538 = vmatpush1.msra.mxu0 %v1523
    %1539 = vmatprep.subr.mxu0 0.0
    %1540 = vmatpush1.msra.mxu0 %v1524
    %1541 = vmatprep.subr.mxu0 0.0
    %1542 = vmatpush1.msra.mxu0 %v1525
    %1543 = vmatprep.subr.mxu0 0.0
    %1544 = vmatpush1.msra.mxu0 %v1526
    %1545 = vmatprep.subr.mxu0 0.0
    %1546 = vmatpush1.msra.mxu0 0.0
    %1547 = vmatprep.subr.mxu0 0.0
    %1548 = vmatpush1.msra.mxu0 0.0
    %1549 = vmatprep.subr.mxu0 0.0
    %1550 = vmatpush1.msra.mxu0 0.0
    %1551 = vmatprep.subr.mxu0 0.0
    %1552 = vmatpush1.msra.mxu0 0.0
    %1553 = vmatprep.subr.mxu0 0.0
    %1554 = vmatpush1.msra.mxu0 0.0
    %1555 = vmatprep.subr.mxu0 0.0
    %1556 = vmatpush1.msra.mxu0 0.0
    %1557 = vmatprep.subr.mxu0 0.0
    %1558 = vmatpush1.msra.mxu0 0.0
    %1559 = vmatprep.subr.mxu0 0.0
    %1560 = vmatpush1.msra.mxu0 0.0
    %1561 = vmatprep.subr.mxu0 0.0
    %1562 = vmatpush1.msra.mxu0 0.0
    %1563 = vmatprep.subr.mxu0 0.0
    %1564 = vmatpush1.msra.mxu0 0.0
    %1565 = vmatprep.subr.mxu0 0.0
    %1566 = vmatpush1.msra.mxu0 0.0
    %1567 = vmatprep.subr.mxu0 0.0
    %1568 = vmatpush1.msra.mxu0 0.0
    %1569 = vmatprep.subr.mxu0 0.0
    %1570 = vmatpush1.msra.mxu0 0.0
    %1571 = vmatprep.subr.mxu0 0.0
    %1572 = vmatpush1.msra.mxu0 0.0
    %1573 = vmatprep.subr.mxu0 0.0
    %1574 = vmatpush1.msra.mxu0 0.0
    %1575 = vmatprep.subr.mxu0 0.0
    %1576 = vmatpush1.msra.mxu0 0.0
    %1577 = vmatprep.subr.mxu0 0.0
    %1578 = vmatpush1.msra.mxu0 0.0
    %1579 = vmatprep.subr.mxu0 0.0
    %1580 = vmatpush1.msra.mxu0 0.0
    %1581 = vmatprep.subr.mxu0 0.0
    %1582 = vmatpush1.msra.mxu0 0.0
    %1583 = vmatprep.subr.mxu0 0.0
    %1584 = vmatpush1.msra.mxu0 0.0
    %1585 = vmatprep.subr.mxu0 0.0
    %1586 = vmatpush1.msra.mxu0 0.0
    %1587 = vmatprep.subr.mxu0 0.0
    %1588 = vmatpush1.msra.mxu0 0.0
    %1589 = vmatprep.subr.mxu0 0.0
    %1590 = vmatpush1.msra.mxu0 0.0
    %1591 = vmatprep.subr.mxu0 0.0
    %1592 = vmatpush1.msra.mxu0 0.0
    %1593 = vmatprep.subr.mxu0 0.0
    %1594 = vmatpush1.msra.mxu0 0.0
    %1595 = vmatprep.subr.mxu0 0.0
    %1596 = vmatpush1.msra.mxu0 0.0
    %1597 = vmatprep.subr.mxu0 0.0
    %1598 = vmatpush1.msra.mxu0 0.0
    %1599 = vmatprep.subr.mxu0 0.0
    %1600 = vmatpush1.msra.mxu0 0.0
    %1601 = vmatprep.mubr.f32.mxu0 0.0
    %1602 = vmatmul.mubr.f32.gmra.mrb[0].mxu0 %v1532
    %v1603 = vpop.f32.mrb[0].mxu0
    %v1604 = vadd.f32 %v1530, %v1603
    %v1605 = vpop.f32.mrb[0].mxu0
    %1606 = vmatprep.mubr.f32.mxu0 0.0
    %1607 = vmatmul.mubr.f32.gmra.mrb[0].mxu0 %v1535
    %v1608 = vpop.f32.mrb[0].mxu0
    %v1609 = vadd.f32 %v1530, %v1608
    %v1610 = vpop.f32.mrb[0].mxu0
    %1611 = vdwg.mxu0
    %v1612 = vadd.f32 %v71, %v1604
    %v1613 = vadd.f32 %v72, %v1609
    %v1614 = vsel %vm82, %v1612, 0.0
    %1615 = vadd.xlane.f32.xlu0 %v1614
    %v1616 = vpop.xlane.xlu0 %1615
    %v1617 = vsel %vm82, %v1613, 0.0
    %1618 = vadd.xlane.f32.xlu0 %v1617
    %v1619 = vpop.xlane.xlu0 %1618
    %v1620 = vrcp.pop 32.0
    %v1621 = vmul.f32 %v1616, %v1620
    %v1622 = vmul.f32 %v1619, %v1620
    %v1623 = vsub.f32 %v1612, %v1621
    %v1624 = vsub.f32 %v1613, %v1622
    %v1625 = vmul.f32 %v1623, %v1623
    %v1626 = vmul.f32 %v1624, %v1624
    %v1627 = vsel %vm82, %v1625, 0.0
    %1628 = vadd.xlane.f32.xlu0 %v1627
    %v1629 = vpop.xlane.xlu0 %1628
    %v1630 = vsel %vm82, %v1626, 0.0
    %1631 = vadd.xlane.f32.xlu0 %v1630
    %v1632 = vpop.xlane.xlu0 %1631
    %v1633 = vmul.f32 %v1629, %v1620
    %v1634 = vmul.f32 %v1632, %v1620
    %v1635 = vadd.f32 %v1633, 1e-05
    %v1636 = vadd.f32 %v1634, 1e-05
    %v1637 = vrsqrt.pop %v1635
    %v1638 = vrsqrt.pop %v1636
    %v1639 = vmul.f32 %v1623, %v1637
    %v1640 = vmul.f32 %v1624, %v1638
    %v1641 = vlaneseq
    %v1642 = vshrl.u32 %v1641, 7
    %v1643 = vsub.s32 2, %v1642
    %v1644 = vrot.slane %v73, %v1643
    %v1645 = vmul.f32 %v1639, %v1644
    %v1646 = vmul.f32 %v1640, %v1644
    %v1647 = vlaneseq
    %v1648 = vshrl.u32 %v1647, 7
    %v1649 = vsub.s32 3, %v1648
    %v1650 = vrot.slane %v73, %v1649
    %v1651 = vadd.f32 %v1645, %v1650
    %v1652 = vadd.f32 %v1646, %v1650
    %v1653 = vld [vmem:[%s5] sm:$0xff]
    %v1654 = vld [vmem:[%s5 + $0x8] sm:$0xff]
    %v1655 = vld [vmem:[%s5 + $0x10] sm:$0xff]
    %v1656 = vld [vmem:[%s5 + $0x18] sm:$0xff]
    %v1657 = vlaneseq
    %v1658 = vshrl.u32 %v1657, 7
    %v1659 = vsub.s32 4, %v1658
    %v1660 = vrot.slane %v73, %v1659
    %v1662 = vsel %vm82, %v1651, 0
    %v1665 = vsel %vm82, %v1652, 0
    %1667 = vmatprep.subr.mxu0 0.0
    %1668 = vmatpush1.msra.mxu0 %v1653
    %1669 = vmatprep.subr.mxu0 0.0
    %1670 = vmatpush1.msra.mxu0 %v1654
    %1671 = vmatprep.subr.mxu0 0.0
    %1672 = vmatpush1.msra.mxu0 %v1655
    %1673 = vmatprep.subr.mxu0 0.0
    %1674 = vmatpush1.msra.mxu0 %v1656
    %1675 = vmatprep.subr.mxu0 0.0
    %1676 = vmatpush1.msra.mxu0 0.0
    %1677 = vmatprep.subr.mxu0 0.0
    %1678 = vmatpush1.msra.mxu0 0.0
    %1679 = vmatprep.subr.mxu0 0.0
    %1680 = vmatpush1.msra.mxu0 0.0
    %1681 = vmatprep.subr.mxu0 0.0
    %1682 = vmatpush1.msra.mxu0 0.0
    %1683 = vmatprep.subr.mxu0 0.0
    %1684 = vmatpush1.msra.mxu0 0.0
    %1685 = vmatprep.subr.mxu0 0.0
    %1686 = vmatpush1.msra.mxu0 0.0
    %1687 = vmatprep.subr.mxu0 0.0
    %1688 = vmatpush1.msra.mxu0 0.0
    %1689 = vmatprep.subr.mxu0 0.0
    %1690 = vmatpush1.msra.mxu0 0.0
    %1691 = vmatprep.subr.mxu0 0.0
    %1692 = vmatpush1.msra.mxu0 0.0
    %1693 = vmatprep.subr.mxu0 0.0
    %1694 = vmatpush1.msra.mxu0 0.0
    %1695 = vmatprep.subr.mxu0 0.0
    %1696 = vmatpush1.msra.mxu0 0.0
    %1697 = vmatprep.subr.mxu0 0.0
    %1698 = vmatpush1.msra.mxu0 0.0
    %1699 = vmatprep.subr.mxu0 0.0
    %1700 = vmatpush1.msra.mxu0 0.0
    %1701 = vmatprep.subr.mxu0 0.0
    %1702 = vmatpush1.msra.mxu0 0.0
    %1703 = vmatprep.subr.mxu0 0.0
    %1704 = vmatpush1.msra.mxu0 0.0
    %1705 = vmatprep.subr.mxu0 0.0
    %1706 = vmatpush1.msra.mxu0 0.0
    %1707 = vmatprep.subr.mxu0 0.0
    %1708 = vmatpush1.msra.mxu0 0.0
    %1709 = vmatprep.subr.mxu0 0.0
    %1710 = vmatpush1.msra.mxu0 0.0
    %1711 = vmatprep.subr.mxu0 0.0
    %1712 = vmatpush1.msra.mxu0 0.0
    %1713 = vmatprep.subr.mxu0 0.0
    %1714 = vmatpush1.msra.mxu0 0.0
    %1715 = vmatprep.subr.mxu0 0.0
    %1716 = vmatpush1.msra.mxu0 0.0
    %1717 = vmatprep.subr.mxu0 0.0
    %1718 = vmatpush1.msra.mxu0 0.0
    %1719 = vmatprep.subr.mxu0 0.0
    %1720 = vmatpush1.msra.mxu0 0.0
    %1721 = vmatprep.subr.mxu0 0.0
    %1722 = vmatpush1.msra.mxu0 0.0
    %1723 = vmatprep.subr.mxu0 0.0
    %1724 = vmatpush1.msra.mxu0 0.0
    %1725 = vmatprep.subr.mxu0 0.0
    %1726 = vmatpush1.msra.mxu0 0.0
    %1727 = vmatprep.subr.mxu0 0.0
    %1728 = vmatpush1.msra.mxu0 0.0
    %1729 = vmatprep.subr.mxu0 0.0
    %1730 = vmatpush1.msra.mxu0 0.0
    %1731 = vmatprep.mubr.f32.mxu0 0.0
    %1732 = vmatmul.mubr.f32.gmra.mrb[0].mxu0 %v1662
    %v1733 = vpop.f32.mrb[0].mxu0
    %v1734 = vadd.f32 %v1660, %v1733
    %v1735 = vpop.f32.mrb[0].mxu0
    %1736 = vmatprep.mubr.f32.mxu0 0.0
    %1737 = vmatmul.mubr.f32.gmra.mrb[0].mxu0 %v1665
    %v1738 = vpop.f32.mrb[0].mxu0
    %v1739 = vadd.f32 %v1660, %v1738
    %v1740 = vpop.f32.mrb[0].mxu0
    %1741 = vdwg.mxu0
    %v1742 = vmax.f32 %v1734, 0.0
    %v1743 = vmax.f32 %v1739, 0.0
    %v1744 = vld [vmem:[%s6] sm:$0xff]
    %v1745 = vld [vmem:[%s6 + $0x8] sm:$0xff]
    %v1746 = vld [vmem:[%s6 + $0x10] sm:$0xff]
    %v1747 = vld [vmem:[%s6 + $0x18] sm:$0xff]
    %v1748 = vld [vmem:[%s6 + $0x20] sm:$0xff]
    %v1749 = vld [vmem:[%s6 + $0x28] sm:$0xff]
    %v1750 = vld [vmem:[%s6 + $0x30] sm:$0xff]
    %v1751 = vld [vmem:[%s6 + $0x38] sm:$0xff]
    %v1752 = vlaneseq
    %v1753 = vshrl.u32 %v1752, 7
    %v1754 = vsub.s32 5, %v1753
    %v1755 = vrot.slane %v73, %v1754
    %vm1756 = vcmask 523264
    %v1758 = vsel %vm1756, %v1742, 0
    %v1761 = vsel %vm1756, %v1743, 0
    %1763 = vmatprep.subr.mxu0 0.0
    %1764 = vmatpush1.msra.mxu0 %v1744
    %1765 = vmatprep.subr.mxu0 0.0
    %1766 = vmatpush1.msra.mxu0 %v1745
    %1767 = vmatprep.subr.mxu0 0.0
    %1768 = vmatpush1.msra.mxu0 %v1746
    %1769 = vmatprep.subr.mxu0 0.0
    %1770 = vmatpush1.msra.mxu0 %v1747
    %1771 = vmatprep.subr.mxu0 0.0
    %1772 = vmatpush1.msra.mxu0 %v1748
    %1773 = vmatprep.subr.mxu0 0.0
    %1774 = vmatpush1.msra.mxu0 %v1749
    %1775 = vmatprep.subr.mxu0 0.0
    %1776 = vmatpush1.msra.mxu0 %v1750
    %1777 = vmatprep.subr.mxu0 0.0
    %1778 = vmatpush1.msra.mxu0 %v1751
    %1779 = vmatprep.subr.mxu0 0.0
    %1780 = vmatpush1.msra.mxu0 0.0
    %1781 = vmatprep.subr.mxu0 0.0
    %1782 = vmatpush1.msra.mxu0 0.0
    %1783 = vmatprep.subr.mxu0 0.0
    %1784 = vmatpush1.msra.mxu0 0.0
    %1785 = vmatprep.subr.mxu0 0.0
    %1786 = vmatpush1.msra.mxu0 0.0
    %1787 = vmatprep.subr.mxu0 0.0
    %1788 = vmatpush1.msra.mxu0 0.0
    %1789 = vmatprep.subr.mxu0 0.0
    %1790 = vmatpush1.msra.mxu0 0.0
    %1791 = vmatprep.subr.mxu0 0.0
    %1792 = vmatpush1.msra.mxu0 0.0
    %1793 = vmatprep.subr.mxu0 0.0
    %1794 = vmatpush1.msra.mxu0 0.0
    %1795 = vmatprep.subr.mxu0 0.0
    %1796 = vmatpush1.msra.mxu0 0.0
    %1797 = vmatprep.subr.mxu0 0.0
    %1798 = vmatpush1.msra.mxu0 0.0
    %1799 = vmatprep.subr.mxu0 0.0
    %1800 = vmatpush1.msra.mxu0 0.0
    %1801 = vmatprep.subr.mxu0 0.0
    %1802 = vmatpush1.msra.mxu0 0.0
    %1803 = vmatprep.subr.mxu0 0.0
    %1804 = vmatpush1.msra.mxu0 0.0
    %1805 = vmatprep.subr.mxu0 0.0
    %1806 = vmatpush1.msra.mxu0 0.0
    %1807 = vmatprep.subr.mxu0 0.0
    %1808 = vmatpush1.msra.mxu0 0.0
    %1809 = vmatprep.subr.mxu0 0.0
    %1810 = vmatpush1.msra.mxu0 0.0
    %1811 = vmatprep.subr.mxu0 0.0
    %1812 = vmatpush1.msra.mxu0 0.0
    %1813 = vmatprep.subr.mxu0 0.0
    %1814 = vmatpush1.msra.mxu0 0.0
    %1815 = vmatprep.subr.mxu0 0.0
    %1816 = vmatpush1.msra.mxu0 0.0
    %1817 = vmatprep.subr.mxu0 0.0
    %1818 = vmatpush1.msra.mxu0 0.0
    %1819 = vmatprep.subr.mxu0 0.0
    %1820 = vmatpush1.msra.mxu0 0.0
    %1821 = vmatprep.subr.mxu0 0.0
    %1822 = vmatpush1.msra.mxu0 0.0
    %1823 = vmatprep.subr.mxu0 0.0
    %1824 = vmatpush1.msra.mxu0 0.0
    %1825 = vmatprep.subr.mxu0 0.0
    %1826 = vmatpush1.msra.mxu0 0.0
    %1827 = vmatprep.mubr.f32.mxu0 0.0
    %1828 = vmatmul.mubr.f32.gmra.mrb[0].mxu0 %v1758
    %v1829 = vpop.f32.mrb[0].mxu0
    %v1830 = vadd.f32 %v1755, %v1829
    %v1831 = vpop.f32.mrb[0].mxu0
    %1832 = vmatprep.mubr.f32.mxu0 0.0
    %1833 = vmatmul.mubr.f32.gmra.mrb[0].mxu0 %v1761
    %v1834 = vpop.f32.mrb[0].mxu0
    %v1835 = vadd.f32 %v1755, %v1834
    %v1836 = vpop.f32.mrb[0].mxu0
    %1837 = vdwg.mxu0
    %v1838 = vadd.f32 %v1651, %v1830
    %v1839 = vadd.f32 %v1652, %v1835
    %v1840 = vsel %vm82, %v1838, 0.0
    %1841 = vadd.xlane.f32.xlu0 %v1840
    %v1842 = vpop.xlane.xlu0 %1841
    %v1843 = vsel %vm82, %v1839, 0.0
    %1844 = vadd.xlane.f32.xlu0 %v1843
    %v1845 = vpop.xlane.xlu0 %1844
    %v1846 = vmul.f32 %v1842, %v1620
    %v1847 = vmul.f32 %v1845, %v1620
    %v1848 = vsub.f32 %v1838, %v1846
    %v1849 = vsub.f32 %v1839, %v1847
    %v1850 = vmul.f32 %v1848, %v1848
    %v1851 = vmul.f32 %v1849, %v1849
    %v1852 = vsel %vm82, %v1850, 0.0
    %1853 = vadd.xlane.f32.xlu0 %v1852
    %v1854 = vpop.xlane.xlu0 %1853
    %v1855 = vsel %vm82, %v1851, 0.0
    %1856 = vadd.xlane.f32.xlu0 %v1855
    %v1857 = vpop.xlane.xlu0 %1856
    %v1858 = vmul.f32 %v1854, %v1620
    %v1859 = vmul.f32 %v1857, %v1620
    %v1860 = vadd.f32 %v1858, 1e-05
    %v1861 = vadd.f32 %v1859, 1e-05
    %v1862 = vrsqrt.pop %v1860
    %v1863 = vrsqrt.pop %v1861
    %v1864 = vmul.f32 %v1848, %v1862
    %v1865 = vmul.f32 %v1849, %v1863
    %v1866 = vlaneseq
    %v1867 = vshrl.u32 %v1866, 7
    %v1868 = vsub.s32 6, %v1867
    %v1869 = vrot.slane %v73, %v1868
    %v1870 = vmul.f32 %v1864, %v1869
    %v1871 = vmul.f32 %v1865, %v1869
    %v1872 = vlaneseq
    %v1873 = vshrl.u32 %v1872, 7
    %v1874 = vsub.s32 7, %v1873
    %v1875 = vrot.slane %v73, %v1874
    %v1876 = vadd.f32 %v1870, %v1875
    %v1877 = vadd.f32 %v1871, %v1875
    %s1878 = scalar_lea.vmem %s7, 8
    %v1879 = vld [vmem:[%s1878] sm:$0xff]
    %s1880 = scalar_lea.vmem %s3, 32
    %v1881 = vld [vmem:[%s1880] sm:$0xff]
    %v1882 = vld [vmem:[%s1880 + $0x8] sm:$0xff]
    %v1883 = vld [vmem:[%s1880 + $0x10] sm:$0xff]
    %v1884 = vld [vmem:[%s1880 + $0x18] sm:$0xff]
    %v1885 = vlaneseq
    %v1886 = vshrl.u32 %v1885, 7
    %v1887 = vsub.s32 0, %v1886
    %v1888 = vrot.slane %v1879, %v1887
    %v1890 = vsel %vm82, %v1876, 0
    %v1893 = vsel %vm82, %v1877, 0
    %1895 = vmatprep.subr.mxu0 0.0
    %1896 = vmatpush1.msra.mxu0 %v1881
    %1897 = vmatprep.subr.mxu0 0.0
    %1898 = vmatpush1.msra.mxu0 %v1882
    %1899 = vmatprep.subr.mxu0 0.0
    %1900 = vmatpush1.msra.mxu0 %v1883
    %1901 = vmatprep.subr.mxu0 0.0
    %1902 = vmatpush1.msra.mxu0 %v1884
    %1903 = vmatprep.subr.mxu0 0.0
    %1904 = vmatpush1.msra.mxu0 0.0
    %1905 = vmatprep.subr.mxu0 0.0
    %1906 = vmatpush1.msra.mxu0 0.0
    %1907 = vmatprep.subr.mxu0 0.0
    %1908 = vmatpush1.msra.mxu0 0.0
    %1909 = vmatprep.subr.mxu0 0.0
    %1910 = vmatpush1.msra.mxu0 0.0
    %1911 = vmatprep.subr.mxu0 0.0
    %1912 = vmatpush1.msra.mxu0 0.0
    %1913 = vmatprep.subr.mxu0 0.0
    %1914 = vmatpush1.msra.mxu0 0.0
    %1915 = vmatprep.subr.mxu0 0.0
    %1916 = vmatpush1.msra.mxu0 0.0
    %1917 = vmatprep.subr.mxu0 0.0
    %1918 = vmatpush1.msra.mxu0 0.0
    %1919 = vmatprep.subr.mxu0 0.0
    %1920 = vmatpush1.msra.mxu0 0.0
    %1921 = vmatprep.subr.mxu0 0.0
    %1922 = vmatpush1.msra.mxu0 0.0
    %1923 = vmatprep.subr.mxu0 0.0
    %1924 = vmatpush1.msra.mxu0 0.0
    %1925 = vmatprep.subr.mxu0 0.0
    %1926 = vmatpush1.msra.mxu0 0.0
    %1927 = vmatprep.subr.mxu0 0.0
    %1928 = vmatpush1.msra.mxu0 0.0
    %1929 = vmatprep.subr.mxu0 0.0
    %1930 = vmatpush1.msra.mxu0 0.0
    %1931 = vmatprep.subr.mxu0 0.0
    %1932 = vmatpush1.msra.mxu0 0.0
    %1933 = vmatprep.subr.mxu0 0.0
    %1934 = vmatpush1.msra.mxu0 0.0
    %1935 = vmatprep.subr.mxu0 0.0
    %1936 = vmatpush1.msra.mxu0 0.0
    %1937 = vmatprep.subr.mxu0 0.0
    %1938 = vmatpush1.msra.mxu0 0.0
    %1939 = vmatprep.subr.mxu0 0.0
    %1940 = vmatpush1.msra.mxu0 0.0
    %1941 = vmatprep.subr.mxu0 0.0
    %1942 = vmatpush1.msra.mxu0 0.0
    %1943 = vmatprep.subr.mxu0 0.0
    %1944 = vmatpush1.msra.mxu0 0.0
    %1945 = vmatprep.subr.mxu0 0.0
    %1946 = vmatpush1.msra.mxu0 0.0
    %1947 = vmatprep.subr.mxu0 0.0
    %1948 = vmatpush1.msra.mxu0 0.0
    %1949 = vmatprep.subr.mxu0 0.0
    %1950 = vmatpush1.msra.mxu0 0.0
    %1951 = vmatprep.subr.mxu0 0.0
    %1952 = vmatpush1.msra.mxu0 0.0
    %1953 = vmatprep.subr.mxu0 0.0
    %1954 = vmatpush1.msra.mxu0 0.0
    %1955 = vmatprep.subr.mxu0 0.0
    %1956 = vmatpush1.msra.mxu0 0.0
    %1957 = vmatprep.subr.mxu0 0.0
    %1958 = vmatpush1.msra.mxu0 0.0
    %1959 = vmatprep.mubr.f32.mxu0 0.0
    %1960 = vmatmul.mubr.f32.gmra.mrb[0].mxu0 %v1890
    %v1961 = vpop.f32.mrb[0].mxu0
    %v1962 = vadd.f32 %v1888, %v1961
    %v1963 = vpop.f32.mrb[0].mxu0
    %1964 = vmatprep.mubr.f32.mxu0 0.0
    %1965 = vmatmul.mubr.f32.gmra.mrb[0].mxu0 %v1893
    %v1966 = vpop.f32.mrb[0].mxu0
    %v1967 = vadd.f32 %v1888, %v1966
    %v1968 = vpop.f32.mrb[0].mxu0
    %1969 = vdwg.mxu0
    %1971 = vrot.lane.b32.xlu0 %v1962, 96
    %v1972 = vpop.permute.xlu0 %1971
    %v1973 = vsel %vm167, %v1962, 0
    %v1975 = vsel %vm167, %v1972, 0
    %1977 = vmatprep.subr.mxu0 0.0
    %1978 = vmatpush1.xpose.msra.mxu0 %v1975
    %1979 = vmatprep.subr.mxu0 0.0
    %1980 = vmatpush1.xpose.msra.mxu0 0.0
    %1981 = vmatprep.subr.mxu0 0.0
    %1982 = vmatpush1.xpose.msra.mxu0 0.0
    %1983 = vmatprep.subr.mxu0 0.0
    %1984 = vmatpush1.xpose.msra.mxu0 0.0
    %1985 = vmatprep.subr.mxu0 0.0
    %1986 = vmatpush1.xpose.msra.mxu0 0.0
    %1987 = vmatprep.subr.mxu0 0.0
    %1988 = vmatpush1.xpose.msra.mxu0 0.0
    %1989 = vmatprep.subr.mxu0 0.0
    %1990 = vmatpush1.xpose.msra.mxu0 0.0
    %1991 = vmatprep.subr.mxu0 0.0
    %1992 = vmatpush1.xpose.msra.mxu0 0.0
    %1993 = vmatprep.subr.mxu0 0.0
    %1994 = vmatpush1.xpose.msra.mxu0 0.0
    %1995 = vmatprep.subr.mxu0 0.0
    %1996 = vmatpush1.xpose.msra.mxu0 0.0
    %1997 = vmatprep.subr.mxu0 0.0
    %1998 = vmatpush1.xpose.msra.mxu0 0.0
    %1999 = vmatprep.subr.mxu0 0.0
    %2000 = vmatpush1.xpose.msra.mxu0 0.0
    %2001 = vmatprep.subr.mxu0 0.0
    %2002 = vmatpush1.xpose.msra.mxu0 0.0
    %2003 = vmatprep.subr.mxu0 0.0
    %2004 = vmatpush1.xpose.msra.mxu0 0.0
    %2005 = vmatprep.subr.mxu0 0.0
    %2006 = vmatpush1.xpose.msra.mxu0 0.0
    %2007 = vmatprep.subr.mxu0 0.0
    %2008 = vmatpush1.xpose.msra.mxu0 0.0
    %2009 = vmatprep.subr.mxu0 0.0
    %2010 = vmatpush1.xpose.msra.mxu0 0.0
    %2011 = vmatprep.subr.mxu0 0.0
    %2012 = vmatpush1.xpose.msra.mxu0 0.0
    %2013 = vmatprep.subr.mxu0 0.0
    %2014 = vmatpush1.xpose.msra.mxu0 0.0
    %2015 = vmatprep.subr.mxu0 0.0
    %2016 = vmatpush1.xpose.msra.mxu0 0.0
    %2017 = vmatprep.subr.mxu0 0.0
    %2018 = vmatpush1.xpose.msra.mxu0 0.0
    %2019 = vmatprep.subr.mxu0 0.0
    %2020 = vmatpush1.xpose.msra.mxu0 0.0
    %2021 = vmatprep.subr.mxu0 0.0
    %2022 = vmatpush1.xpose.msra.mxu0 0.0
    %2023 = vmatprep.subr.mxu0 0.0
    %2024 = vmatpush1.xpose.msra.mxu0 0.0
    %2025 = vmatprep.subr.mxu0 0.0
    %2026 = vmatpush1.xpose.msra.mxu0 0.0
    %2027 = vmatprep.subr.mxu0 0.0
    %2028 = vmatpush1.xpose.msra.mxu0 0.0
    %2029 = vmatprep.subr.mxu0 0.0
    %2030 = vmatpush1.xpose.msra.mxu0 0.0
    %2031 = vmatprep.subr.mxu0 0.0
    %2032 = vmatpush1.xpose.msra.mxu0 0.0
    %2033 = vmatprep.subr.mxu0 0.0
    %2034 = vmatpush1.xpose.msra.mxu0 0.0
    %2035 = vmatprep.subr.mxu0 0.0
    %2036 = vmatpush1.xpose.msra.mxu0 0.0
    %2037 = vmatprep.subr.mxu0 0.0
    %2038 = vmatpush1.xpose.msra.mxu0 0.0
    %2039 = vmatprep.subr.mxu0 0.0
    %2040 = vmatpush1.xpose.msra.mxu0 0.0
    %2041 = vmatprep.mubr.f32.mxu0 0.0
    %2042 = vmatmul.mubr.f32.gmra.mrb[0].mxu0 %v1973
    %v2043 = vpop.f32.mrb[0].mxu0
    %v2044 = vadd.f32 0.0, %v2043
    %v2045 = vpop.f32.mrb[0].mxu0
    %2046 = vdwg.mxu0
    %2048 = vrot.lane.b32.xlu0 %v1967, 96
    %v2049 = vpop.permute.xlu0 %2048
    %v2050 = vsel %vm167, %v1967, 0
    %v2052 = vsel %vm167, %v2049, 0
    %2054 = vmatprep.subr.mxu0 0.0
    %2055 = vmatpush1.xpose.msra.mxu0 %v2052
    %2056 = vmatprep.subr.mxu0 0.0
    %2057 = vmatpush1.xpose.msra.mxu0 0.0
    %2058 = vmatprep.subr.mxu0 0.0
    %2059 = vmatpush1.xpose.msra.mxu0 0.0
    %2060 = vmatprep.subr.mxu0 0.0
    %2061 = vmatpush1.xpose.msra.mxu0 0.0
    %2062 = vmatprep.subr.mxu0 0.0
    %2063 = vmatpush1.xpose.msra.mxu0 0.0
    %2064 = vmatprep.subr.mxu0 0.0
    %2065 = vmatpush1.xpose.msra.mxu0 0.0
    %2066 = vmatprep.subr.mxu0 0.0
    %2067 = vmatpush1.xpose.msra.mxu0 0.0
    %2068 = vmatprep.subr.mxu0 0.0
    %2069 = vmatpush1.xpose.msra.mxu0 0.0
    %2070 = vmatprep.subr.mxu0 0.0
    %2071 = vmatpush1.xpose.msra.mxu0 0.0
    %2072 = vmatprep.subr.mxu0 0.0
    %2073 = vmatpush1.xpose.msra.mxu0 0.0
    %2074 = vmatprep.subr.mxu0 0.0
    %2075 = vmatpush1.xpose.msra.mxu0 0.0
    %2076 = vmatprep.subr.mxu0 0.0
    %2077 = vmatpush1.xpose.msra.mxu0 0.0
    %2078 = vmatprep.subr.mxu0 0.0
    %2079 = vmatpush1.xpose.msra.mxu0 0.0
    %2080 = vmatprep.subr.mxu0 0.0
    %2081 = vmatpush1.xpose.msra.mxu0 0.0
    %2082 = vmatprep.subr.mxu0 0.0
    %2083 = vmatpush1.xpose.msra.mxu0 0.0
    %2084 = vmatprep.subr.mxu0 0.0
    %2085 = vmatpush1.xpose.msra.mxu0 0.0
    %2086 = vmatprep.subr.mxu0 0.0
    %2087 = vmatpush1.xpose.msra.mxu0 0.0
    %2088 = vmatprep.subr.mxu0 0.0
    %2089 = vmatpush1.xpose.msra.mxu0 0.0
    %2090 = vmatprep.subr.mxu0 0.0
    %2091 = vmatpush1.xpose.msra.mxu0 0.0
    %2092 = vmatprep.subr.mxu0 0.0
    %2093 = vmatpush1.xpose.msra.mxu0 0.0
    %2094 = vmatprep.subr.mxu0 0.0
    %2095 = vmatpush1.xpose.msra.mxu0 0.0
    %2096 = vmatprep.subr.mxu0 0.0
    %2097 = vmatpush1.xpose.msra.mxu0 0.0
    %2098 = vmatprep.subr.mxu0 0.0
    %2099 = vmatpush1.xpose.msra.mxu0 0.0
    %2100 = vmatprep.subr.mxu0 0.0
    %2101 = vmatpush1.xpose.msra.mxu0 0.0
    %2102 = vmatprep.subr.mxu0 0.0
    %2103 = vmatpush1.xpose.msra.mxu0 0.0
    %2104 = vmatprep.subr.mxu0 0.0
    %2105 = vmatpush1.xpose.msra.mxu0 0.0
    %2106 = vmatprep.subr.mxu0 0.0
    %2107 = vmatpush1.xpose.msra.mxu0 0.0
    %2108 = vmatprep.subr.mxu0 0.0
    %2109 = vmatpush1.xpose.msra.mxu0 0.0
    %2110 = vmatprep.subr.mxu0 0.0
    %2111 = vmatpush1.xpose.msra.mxu0 0.0
    %2112 = vmatprep.subr.mxu0 0.0
    %2113 = vmatpush1.xpose.msra.mxu0 0.0
    %2114 = vmatprep.subr.mxu0 0.0
    %2115 = vmatpush1.xpose.msra.mxu0 0.0
    %2116 = vmatprep.subr.mxu0 0.0
    %2117 = vmatpush1.xpose.msra.mxu0 0.0
    %2118 = vmatprep.mubr.f32.mxu0 0.0
    %2119 = vmatmul.mubr.f32.gmra.mrb[0].mxu0 %v2050
    %v2120 = vpop.f32.mrb[0].mxu0
    %v2121 = vadd.f32 0.0, %v2120
    %v2122 = vpop.f32.mrb[0].mxu0
    %2123 = vdwg.mxu0
    %v2124 = vmul.f32 %v2044, 0.35355338
    %v2125 = vmul.f32 %v2121, 0.35355338
    %v2126 = vsel %vm167, %v2124, -inf
    %2127 = vmax.xlane.f32.xlu0 %v2126
    %v2128 = vpop.xlane.xlu0 %2127
    %v2129 = vsel %vm167, %v2125, -inf
    %2130 = vmax.xlane.f32.xlu0 %v2129
    %v2131 = vpop.xlane.xlu0 %2130
    %v2132 = vsub.f32 %v2124, %v2128
    %v2133 = vsub.f32 %v2125, %v2131
    %v2134 = vmul.f32 %v2132, 1.442695
    %v2135 = vpow.pop %v2134
    %v2136 = vmul.f32 %v2133, 1.442695
    %v2137 = vpow.pop %v2136
    %v2138 = vsel %vm167, %v2135, 0.0
    %2139 = vadd.xlane.f32.xlu0 %v2138
    %v2140 = vpop.xlane.xlu0 %2139
    %v2141 = vsel %vm167, %v2137, 0.0
    %2142 = vadd.xlane.f32.xlu0 %v2141
    %v2143 = vpop.xlane.xlu0 %2142
    %v2144 = vrcp.pop %v2140
    %v2145 = vrcp.pop %v2143
    %v2146 = vmul.f32 %v2135, %v2144
    %v2147 = vmul.f32 %v2137, %v2145
    %2148 = vrot.lane.b32.xlu0 %v1962, 64
    %v2149 = vpop.permute.xlu0 %2148
    %v2152 = vsel %vm167, %v2146, 0
    %2154 = vmatprep.subr.mxu0 0.0
    %2155 = vmatpush1.msra.mxu0 %v2149
    %2156 = vmatprep.subr.mxu0 0.0
    %2157 = vmatpush1.msra.mxu0 0.0
    %2158 = vmatprep.subr.mxu0 0.0
    %2159 = vmatpush1.msra.mxu0 0.0
    %2160 = vmatprep.subr.mxu0 0.0
    %2161 = vmatpush1.msra.mxu0 0.0
    %2162 = vmatprep.subr.mxu0 0.0
    %2163 = vmatpush1.msra.mxu0 0.0
    %2164 = vmatprep.subr.mxu0 0.0
    %2165 = vmatpush1.msra.mxu0 0.0
    %2166 = vmatprep.subr.mxu0 0.0
    %2167 = vmatpush1.msra.mxu0 0.0
    %2168 = vmatprep.subr.mxu0 0.0
    %2169 = vmatpush1.msra.mxu0 0.0
    %2170 = vmatprep.subr.mxu0 0.0
    %2171 = vmatpush1.msra.mxu0 0.0
    %2172 = vmatprep.subr.mxu0 0.0
    %2173 = vmatpush1.msra.mxu0 0.0
    %2174 = vmatprep.subr.mxu0 0.0
    %2175 = vmatpush1.msra.mxu0 0.0
    %2176 = vmatprep.subr.mxu0 0.0
    %2177 = vmatpush1.msra.mxu0 0.0
    %2178 = vmatprep.subr.mxu0 0.0
    %2179 = vmatpush1.msra.mxu0 0.0
    %2180 = vmatprep.subr.mxu0 0.0
    %2181 = vmatpush1.msra.mxu0 0.0
    %2182 = vmatprep.subr.mxu0 0.0
    %2183 = vmatpush1.msra.mxu0 0.0
    %2184 = vmatprep.subr.mxu0 0.0
    %2185 = vmatpush1.msra.mxu0 0.0
    %2186 = vmatprep.subr.mxu0 0.0
    %2187 = vmatpush1.msra.mxu0 0.0
    %2188 = vmatprep.subr.mxu0 0.0
    %2189 = vmatpush1.msra.mxu0 0.0
    %2190 = vmatprep.subr.mxu0 0.0
    %2191 = vmatpush1.msra.mxu0 0.0
    %2192 = vmatprep.subr.mxu0 0.0
    %2193 = vmatpush1.msra.mxu0 0.0
    %2194 = vmatprep.subr.mxu0 0.0
    %2195 = vmatpush1.msra.mxu0 0.0
    %2196 = vmatprep.subr.mxu0 0.0
    %2197 = vmatpush1.msra.mxu0 0.0
    %2198 = vmatprep.subr.mxu0 0.0
    %2199 = vmatpush1.msra.mxu0 0.0
    %2200 = vmatprep.subr.mxu0 0.0
    %2201 = vmatpush1.msra.mxu0 0.0
    %2202 = vmatprep.subr.mxu0 0.0
    %2203 = vmatpush1.msra.mxu0 0.0
    %2204 = vmatprep.subr.mxu0 0.0
    %2205 = vmatpush1.msra.mxu0 0.0
    %2206 = vmatprep.subr.mxu0 0.0
    %2207 = vmatpush1.msra.mxu0 0.0
    %2208 = vmatprep.subr.mxu0 0.0
    %2209 = vmatpush1.msra.mxu0 0.0
    %2210 = vmatprep.subr.mxu0 0.0
    %2211 = vmatpush1.msra.mxu0 0.0
    %2212 = vmatprep.subr.mxu0 0.0
    %2213 = vmatpush1.msra.mxu0 0.0
    %2214 = vmatprep.subr.mxu0 0.0
    %2215 = vmatpush1.msra.mxu0 0.0
    %2216 = vmatprep.subr.mxu0 0.0
    %2217 = vmatpush1.msra.mxu0 0.0
    %2218 = vmatprep.mubr.f32.mxu0 0.0
    %2219 = vmatmul.mubr.f32.gmra.mrb[0].mxu0 %v2152
    %v2220 = vpop.f32.mrb[0].mxu0
    %v2221 = vadd.f32 0.0, %v2220
    %v2222 = vpop.f32.mrb[0].mxu0
    %2223 = vdwg.mxu0
    %2224 = vrot.lane.b32.xlu0 %v1967, 64
    %v2225 = vpop.permute.xlu0 %2224
    %v2228 = vsel %vm167, %v2147, 0
    %2230 = vmatprep.subr.mxu0 0.0
    %2231 = vmatpush1.msra.mxu0 %v2225
    %2232 = vmatprep.subr.mxu0 0.0
    %2233 = vmatpush1.msra.mxu0 0.0
    %2234 = vmatprep.subr.mxu0 0.0
    %2235 = vmatpush1.msra.mxu0 0.0
    %2236 = vmatprep.subr.mxu0 0.0
    %2237 = vmatpush1.msra.mxu0 0.0
    %2238 = vmatprep.subr.mxu0 0.0
    %2239 = vmatpush1.msra.mxu0 0.0
    %2240 = vmatprep.subr.mxu0 0.0
    %2241 = vmatpush1.msra.mxu0 0.0
    %2242 = vmatprep.subr.mxu0 0.0
    %2243 = vmatpush1.msra.mxu0 0.0
    %2244 = vmatprep.subr.mxu0 0.0
    %2245 = vmatpush1.msra.mxu0 0.0
    %2246 = vmatprep.subr.mxu0 0.0
    %2247 = vmatpush1.msra.mxu0 0.0
    %2248 = vmatprep.subr.mxu0 0.0
    %2249 = vmatpush1.msra.mxu0 0.0
    %2250 = vmatprep.subr.mxu0 0.0
    %2251 = vmatpush1.msra.mxu0 0.0
    %2252 = vmatprep.subr.mxu0 0.0
    %2253 = vmatpush1.msra.mxu0 0.0
    %2254 = vmatprep.subr.mxu0 0.0
    %2255 = vmatpush1.msra.mxu0 0.0
    %2256 = vmatprep.subr.mxu0 0.0
    %2257 = vmatpush1.msra.mxu0 0.0
    %2258 = vmatprep.subr.mxu0 0.0
    %2259 = vmatpush1.msra.mxu0 0.0
    %2260 = vmatprep.subr.mxu0 0.0
    %2261 = vmatpush1.msra.mxu0 0.0
    %2262 = vmatprep.subr.mxu0 0.0
    %2263 = vmatpush1.msra.mxu0 0.0
    %2264 = vmatprep.subr.mxu0 0.0
    %2265 = vmatpush1.msra.mxu0 0.0
    %2266 = vmatprep.subr.mxu0 0.0
    %2267 = vmatpush1.msra.mxu0 0.0
    %2268 = vmatprep.subr.mxu0 0.0
    %2269 = vmatpush1.msra.mxu0 0.0
    %2270 = vmatprep.subr.mxu0 0.0
    %2271 = vmatpush1.msra.mxu0 0.0
    %2272 = vmatprep.subr.mxu0 0.0
    %2273 = vmatpush1.msra.mxu0 0.0
    %2274 = vmatprep.subr.mxu0 0.0
    %2275 = vmatpush1.msra.mxu0 0.0
    %2276 = vmatprep.subr.mxu0 0.0
    %2277 = vmatpush1.msra.mxu0 0.0
    %2278 = vmatprep.subr.mxu0 0.0
    %2279 = vmatpush1.msra.mxu0 0.0
    %2280 = vmatprep.subr.mxu0 0.0
    %2281 = vmatpush1.msra.mxu0 0.0
    %2282 = vmatprep.subr.mxu0 0.0
    %2283 = vmatpush1.msra.mxu0 0.0
    %2284 = vmatprep.subr.mxu0 0.0
    %2285 = vmatpush1.msra.mxu0 0.0
    %2286 = vmatprep.subr.mxu0 0.0
    %2287 = vmatpush1.msra.mxu0 0.0
    %2288 = vmatprep.subr.mxu0 0.0
    %2289 = vmatpush1.msra.mxu0 0.0
    %2290 = vmatprep.subr.mxu0 0.0
    %2291 = vmatpush1.msra.mxu0 0.0
    %2292 = vmatprep.subr.mxu0 0.0
    %2293 = vmatpush1.msra.mxu0 0.0
    %2294 = vmatprep.mubr.f32.mxu0 0.0
    %2295 = vmatmul.mubr.f32.gmra.mrb[0].mxu0 %v2228
    %v2296 = vpop.f32.mrb[0].mxu0
    %v2297 = vadd.f32 0.0, %v2296
    %v2298 = vpop.f32.mrb[0].mxu0
    %2299 = vdwg.mxu0
    %2300 = vrot.lane.b32.xlu0 %v1962, 120
    %v2301 = vpop.permute.xlu0 %2300
    %2302 = vrot.lane.b32.xlu0 %v1962, 88
    %v2303 = vpop.permute.xlu0 %2302
    %v2304 = vsel %vm167, %v2301, 0
    %v2306 = vsel %vm167, %v2303, 0
    %2308 = vmatprep.subr.mxu0 0.0
    %2309 = vmatpush1.xpose.msra.mxu0 %v2306
    %2310 = vmatprep.subr.mxu0 0.0
    %2311 = vmatpush1.xpose.msra.mxu0 0.0
    %2312 = vmatprep.subr.mxu0 0.0
    %2313 = vmatpush1.xpose.msra.mxu0 0.0
    %2314 = vmatprep.subr.mxu0 0.0
    %2315 = vmatpush1.xpose.msra.mxu0 0.0
    %2316 = vmatprep.subr.mxu0 0.0
    %2317 = vmatpush1.xpose.msra.mxu0 0.0
    %2318 = vmatprep.subr.mxu0 0.0
    %2319 = vmatpush1.xpose.msra.mxu0 0.0
    %2320 = vmatprep.subr.mxu0 0.0
    %2321 = vmatpush1.xpose.msra.mxu0 0.0
    %2322 = vmatprep.subr.mxu0 0.0
    %2323 = vmatpush1.xpose.msra.mxu0 0.0
    %2324 = vmatprep.subr.mxu0 0.0
    %2325 = vmatpush1.xpose.msra.mxu0 0.0
    %2326 = vmatprep.subr.mxu0 0.0
    %2327 = vmatpush1.xpose.msra.mxu0 0.0
    %2328 = vmatprep.subr.mxu0 0.0
    %2329 = vmatpush1.xpose.msra.mxu0 0.0
    %2330 = vmatprep.subr.mxu0 0.0
    %2331 = vmatpush1.xpose.msra.mxu0 0.0
    %2332 = vmatprep.subr.mxu0 0.0
    %2333 = vmatpush1.xpose.msra.mxu0 0.0
    %2334 = vmatprep.subr.mxu0 0.0
    %2335 = vmatpush1.xpose.msra.mxu0 0.0
    %2336 = vmatprep.subr.mxu0 0.0
    %2337 = vmatpush1.xpose.msra.mxu0 0.0
    %2338 = vmatprep.subr.mxu0 0.0
    %2339 = vmatpush1.xpose.msra.mxu0 0.0
    %2340 = vmatprep.subr.mxu0 0.0
    %2341 = vmatpush1.xpose.msra.mxu0 0.0
    %2342 = vmatprep.subr.mxu0 0.0
    %2343 = vmatpush1.xpose.msra.mxu0 0.0
    %2344 = vmatprep.subr.mxu0 0.0
    %2345 = vmatpush1.xpose.msra.mxu0 0.0
    %2346 = vmatprep.subr.mxu0 0.0
    %2347 = vmatpush1.xpose.msra.mxu0 0.0
    %2348 = vmatprep.subr.mxu0 0.0
    %2349 = vmatpush1.xpose.msra.mxu0 0.0
    %2350 = vmatprep.subr.mxu0 0.0
    %2351 = vmatpush1.xpose.msra.mxu0 0.0
    %2352 = vmatprep.subr.mxu0 0.0
    %2353 = vmatpush1.xpose.msra.mxu0 0.0
    %2354 = vmatprep.subr.mxu0 0.0
    %2355 = vmatpush1.xpose.msra.mxu0 0.0
    %2356 = vmatprep.subr.mxu0 0.0
    %2357 = vmatpush1.xpose.msra.mxu0 0.0
    %2358 = vmatprep.subr.mxu0 0.0
    %2359 = vmatpush1.xpose.msra.mxu0 0.0
    %2360 = vmatprep.subr.mxu0 0.0
    %2361 = vmatpush1.xpose.msra.mxu0 0.0
    %2362 = vmatprep.subr.mxu0 0.0
    %2363 = vmatpush1.xpose.msra.mxu0 0.0
    %2364 = vmatprep.subr.mxu0 0.0
    %2365 = vmatpush1.xpose.msra.mxu0 0.0
    %2366 = vmatprep.subr.mxu0 0.0
    %2367 = vmatpush1.xpose.msra.mxu0 0.0
    %2368 = vmatprep.subr.mxu0 0.0
    %2369 = vmatpush1.xpose.msra.mxu0 0.0
    %2370 = vmatprep.subr.mxu0 0.0
    %2371 = vmatpush1.xpose.msra.mxu0 0.0
    %2372 = vmatprep.mubr.f32.mxu0 0.0
    %2373 = vmatmul.mubr.f32.gmra.mrb[0].mxu0 %v2304
    %v2374 = vpop.f32.mrb[0].mxu0
    %v2375 = vadd.f32 0.0, %v2374
    %v2376 = vpop.f32.mrb[0].mxu0
    %2377 = vdwg.mxu0
    %2378 = vrot.lane.b32.xlu0 %v1967, 120
    %v2379 = vpop.permute.xlu0 %2378
    %2380 = vrot.lane.b32.xlu0 %v1967, 88
    %v2381 = vpop.permute.xlu0 %2380
    %v2382 = vsel %vm167, %v2379, 0
    %v2384 = vsel %vm167, %v2381, 0
    %2386 = vmatprep.subr.mxu0 0.0
    %2387 = vmatpush1.xpose.msra.mxu0 %v2384
    %2388 = vmatprep.subr.mxu0 0.0
    %2389 = vmatpush1.xpose.msra.mxu0 0.0
    %2390 = vmatprep.subr.mxu0 0.0
    %2391 = vmatpush1.xpose.msra.mxu0 0.0
    %2392 = vmatprep.subr.mxu0 0.0
    %2393 = vmatpush1.xpose.msra.mxu0 0.0
    %2394 = vmatprep.subr.mxu0 0.0
    %2395 = vmatpush1.xpose.msra.mxu0 0.0
    %2396 = vmatprep.subr.mxu0 0.0
    %2397 = vmatpush1.xpose.msra.mxu0 0.0
    %2398 = vmatprep.subr.mxu0 0.0
    %2399 = vmatpush1.xpose.msra.mxu0 0.0
    %2400 = vmatprep.subr.mxu0 0.0
    %2401 = vmatpush1.xpose.msra.mxu0 0.0
    %2402 = vmatprep.subr.mxu0 0.0
    %2403 = vmatpush1.xpose.msra.mxu0 0.0
    %2404 = vmatprep.subr.mxu0 0.0
    %2405 = vmatpush1.xpose.msra.mxu0 0.0
    %2406 = vmatprep.subr.mxu0 0.0
    %2407 = vmatpush1.xpose.msra.mxu0 0.0
    %2408 = vmatprep.subr.mxu0 0.0
    %2409 = vmatpush1.xpose.msra.mxu0 0.0
    %2410 = vmatprep.subr.mxu0 0.0
    %2411 = vmatpush1.xpose.msra.mxu0 0.0
    %2412 = vmatprep.subr.mxu0 0.0
    %2413 = vmatpush1.xpose.msra.mxu0 0.0
    %2414 = vmatprep.subr.mxu0 0.0
    %2415 = vmatpush1.xpose.msra.mxu0 0.0
    %2416 = vmatprep.subr.mxu0 0.0
    %2417 = vmatpush1.xpose.msra.mxu0 0.0
    %2418 = vmatprep.subr.mxu0 0.0
    %2419 = vmatpush1.xpose.msra.mxu0 0.0
    %2420 = vmatprep.subr.mxu0 0.0
    %2421 = vmatpush1.xpose.msra.mxu0 0.0
    %2422 = vmatprep.subr.mxu0 0.0
    %2423 = vmatpush1.xpose.msra.mxu0 0.0
    %2424 = vmatprep.subr.mxu0 0.0
    %2425 = vmatpush1.xpose.msra.mxu0 0.0
    %2426 = vmatprep.subr.mxu0 0.0
    %2427 = vmatpush1.xpose.msra.mxu0 0.0
    %2428 = vmatprep.subr.mxu0 0.0
    %2429 = vmatpush1.xpose.msra.mxu0 0.0
    %2430 = vmatprep.subr.mxu0 0.0
    %2431 = vmatpush1.xpose.msra.mxu0 0.0
    %2432 = vmatprep.subr.mxu0 0.0
    %2433 = vmatpush1.xpose.msra.mxu0 0.0
    %2434 = vmatprep.subr.mxu0 0.0
    %2435 = vmatpush1.xpose.msra.mxu0 0.0
    %2436 = vmatprep.subr.mxu0 0.0
    %2437 = vmatpush1.xpose.msra.mxu0 0.0
    %2438 = vmatprep.subr.mxu0 0.0
    %2439 = vmatpush1.xpose.msra.mxu0 0.0
    %2440 = vmatprep.subr.mxu0 0.0
    %2441 = vmatpush1.xpose.msra.mxu0 0.0
    %2442 = vmatprep.subr.mxu0 0.0
    %2443 = vmatpush1.xpose.msra.mxu0 0.0
    %2444 = vmatprep.subr.mxu0 0.0
    %2445 = vmatpush1.xpose.msra.mxu0 0.0
    %2446 = vmatprep.subr.mxu0 0.0
    %2447 = vmatpush1.xpose.msra.mxu0 0.0
    %2448 = vmatprep.subr.mxu0 0.0
    %2449 = vmatpush1.xpose.msra.mxu0 0.0
    %2450 = vmatprep.mubr.f32.mxu0 0.0
    %2451 = vmatmul.mubr.f32.gmra.mrb[0].mxu0 %v2382
    %v2452 = vpop.f32.mrb[0].mxu0
    %v2453 = vadd.f32 0.0, %v2452
    %v2454 = vpop.f32.mrb[0].mxu0
    %2455 = vdwg.mxu0
    %v2456 = vmul.f32 %v2375, 0.35355338
    %v2457 = vmul.f32 %v2453, 0.35355338
    %v2458 = vsel %vm167, %v2456, -inf
    %2459 = vmax.xlane.f32.xlu0 %v2458
    %v2460 = vpop.xlane.xlu0 %2459
    %v2461 = vsel %vm167, %v2457, -inf
    %2462 = vmax.xlane.f32.xlu0 %v2461
    %v2463 = vpop.xlane.xlu0 %2462
    %v2464 = vsub.f32 %v2456, %v2460
    %v2465 = vsub.f32 %v2457, %v2463
    %v2466 = vmul.f32 %v2464, 1.442695
    %v2467 = vpow.pop %v2466
    %v2468 = vmul.f32 %v2465, 1.442695
    %v2469 = vpow.pop %v2468
    %v2470 = vsel %vm167, %v2467, 0.0
    %2471 = vadd.xlane.f32.xlu0 %v2470
    %v2472 = vpop.xlane.xlu0 %2471
    %v2473 = vsel %vm167, %v2469, 0.0
    %2474 = vadd.xlane.f32.xlu0 %v2473
    %v2475 = vpop.xlane.xlu0 %2474
    %v2476 = vrcp.pop %v2472
    %v2477 = vrcp.pop %v2475
    %v2478 = vmul.f32 %v2467, %v2476
    %v2479 = vmul.f32 %v2469, %v2477
    %2480 = vrot.lane.b32.xlu0 %v1962, 56
    %v2481 = vpop.permute.xlu0 %2480
    %v2484 = vsel %vm167, %v2478, 0
    %2486 = vmatprep.subr.mxu0 0.0
    %2487 = vmatpush1.msra.mxu0 %v2481
    %2488 = vmatprep.subr.mxu0 0.0
    %2489 = vmatpush1.msra.mxu0 0.0
    %2490 = vmatprep.subr.mxu0 0.0
    %2491 = vmatpush1.msra.mxu0 0.0
    %2492 = vmatprep.subr.mxu0 0.0
    %2493 = vmatpush1.msra.mxu0 0.0
    %2494 = vmatprep.subr.mxu0 0.0
    %2495 = vmatpush1.msra.mxu0 0.0
    %2496 = vmatprep.subr.mxu0 0.0
    %2497 = vmatpush1.msra.mxu0 0.0
    %2498 = vmatprep.subr.mxu0 0.0
    %2499 = vmatpush1.msra.mxu0 0.0
    %2500 = vmatprep.subr.mxu0 0.0
    %2501 = vmatpush1.msra.mxu0 0.0
    %2502 = vmatprep.subr.mxu0 0.0
    %2503 = vmatpush1.msra.mxu0 0.0
    %2504 = vmatprep.subr.mxu0 0.0
    %2505 = vmatpush1.msra.mxu0 0.0
    %2506 = vmatprep.subr.mxu0 0.0
    %2507 = vmatpush1.msra.mxu0 0.0
    %2508 = vmatprep.subr.mxu0 0.0
    %2509 = vmatpush1.msra.mxu0 0.0
    %2510 = vmatprep.subr.mxu0 0.0
    %2511 = vmatpush1.msra.mxu0 0.0
    %2512 = vmatprep.subr.mxu0 0.0
    %2513 = vmatpush1.msra.mxu0 0.0
    %2514 = vmatprep.subr.mxu0 0.0
    %2515 = vmatpush1.msra.mxu0 0.0
    %2516 = vmatprep.subr.mxu0 0.0
    %2517 = vmatpush1.msra.mxu0 0.0
    %2518 = vmatprep.subr.mxu0 0.0
    %2519 = vmatpush1.msra.mxu0 0.0
    %2520 = vmatprep.subr.mxu0 0.0
    %2521 = vmatpush1.msra.mxu0 0.0
    %2522 = vmatprep.subr.mxu0 0.0
    %2523 = vmatpush1.msra.mxu0 0.0
    %2524 = vmatprep.subr.mxu0 0.0
    %2525 = vmatpush1.msra.mxu0 0.0
    %2526 = vmatprep.subr.mxu0 0.0
    %2527 = vmatpush1.msra.mxu0 0.0
    %2528 = vmatprep.subr.mxu0 0.0
    %2529 = vmatpush1.msra.mxu0 0.0
    %2530 = vmatprep.subr.mxu0 0.0
    %2531 = vmatpush1.msra.mxu0 0.0
    %2532 = vmatprep.subr.mxu0 0.0
    %2533 = vmatpush1.msra.mxu0 0.0
    %2534 = vmatprep.subr.mxu0 0.0
    %2535 = vmatpush1.msra.mxu0 0.0
    %2536 = vmatprep.subr.mxu0 0.0
    %2537 = vmatpush1.msra.mxu0 0.0
    %2538 = vmatprep.subr.mxu0 0.0
    %2539 = vmatpush1.msra.mxu0 0.0
    %2540 = vmatprep.subr.mxu0 0.0
    %2541 = vmatpush1.msra.mxu0 0.0
    %2542 = vmatprep.subr.mxu0 0.0
    %2543 = vmatpush1.msra.mxu0 0.0
    %2544 = vmatprep.subr.mxu0 0.0
    %2545 = vmatpush1.msra.mxu0 0.0
    %2546 = vmatprep.subr.mxu0 0.0
    %2547 = vmatpush1.msra.mxu0 0.0
    %2548 = vmatprep.subr.mxu0 0.0
    %2549 = vmatpush1.msra.mxu0 0.0
    %2550 = vmatprep.mubr.f32.mxu0 0.0
    %2551 = vmatmul.mubr.f32.gmra.mrb[0].mxu0 %v2484
    %v2552 = vpop.f32.mrb[0].mxu0
    %v2553 = vadd.f32 0.0, %v2552
    %v2554 = vpop.f32.mrb[0].mxu0
    %2555 = vdwg.mxu0
    %2556 = vrot.lane.b32.xlu0 %v1967, 56
    %v2557 = vpop.permute.xlu0 %2556
    %v2560 = vsel %vm167, %v2479, 0
    %2562 = vmatprep.subr.mxu0 0.0
    %2563 = vmatpush1.msra.mxu0 %v2557
    %2564 = vmatprep.subr.mxu0 0.0
    %2565 = vmatpush1.msra.mxu0 0.0
    %2566 = vmatprep.subr.mxu0 0.0
    %2567 = vmatpush1.msra.mxu0 0.0
    %2568 = vmatprep.subr.mxu0 0.0
    %2569 = vmatpush1.msra.mxu0 0.0
    %2570 = vmatprep.subr.mxu0 0.0
    %2571 = vmatpush1.msra.mxu0 0.0
    %2572 = vmatprep.subr.mxu0 0.0
    %2573 = vmatpush1.msra.mxu0 0.0
    %2574 = vmatprep.subr.mxu0 0.0
    %2575 = vmatpush1.msra.mxu0 0.0
    %2576 = vmatprep.subr.mxu0 0.0
    %2577 = vmatpush1.msra.mxu0 0.0
    %2578 = vmatprep.subr.mxu0 0.0
    %2579 = vmatpush1.msra.mxu0 0.0
    %2580 = vmatprep.subr.mxu0 0.0
    %2581 = vmatpush1.msra.mxu0 0.0
    %2582 = vmatprep.subr.mxu0 0.0
    %2583 = vmatpush1.msra.mxu0 0.0
    %2584 = vmatprep.subr.mxu0 0.0
    %2585 = vmatpush1.msra.mxu0 0.0
    %2586 = vmatprep.subr.mxu0 0.0
    %2587 = vmatpush1.msra.mxu0 0.0
    %2588 = vmatprep.subr.mxu0 0.0
    %2589 = vmatpush1.msra.mxu0 0.0
    %2590 = vmatprep.subr.mxu0 0.0
    %2591 = vmatpush1.msra.mxu0 0.0
    %2592 = vmatprep.subr.mxu0 0.0
    %2593 = vmatpush1.msra.mxu0 0.0
    %2594 = vmatprep.subr.mxu0 0.0
    %2595 = vmatpush1.msra.mxu0 0.0
    %2596 = vmatprep.subr.mxu0 0.0
    %2597 = vmatpush1.msra.mxu0 0.0
    %2598 = vmatprep.subr.mxu0 0.0
    %2599 = vmatpush1.msra.mxu0 0.0
    %2600 = vmatprep.subr.mxu0 0.0
    %2601 = vmatpush1.msra.mxu0 0.0
    %2602 = vmatprep.subr.mxu0 0.0
    %2603 = vmatpush1.msra.mxu0 0.0
    %2604 = vmatprep.subr.mxu0 0.0
    %2605 = vmatpush1.msra.mxu0 0.0
    %2606 = vmatprep.subr.mxu0 0.0
    %2607 = vmatpush1.msra.mxu0 0.0
    %2608 = vmatprep.subr.mxu0 0.0
    %2609 = vmatpush1.msra.mxu0 0.0
    %2610 = vmatprep.subr.mxu0 0.0
    %2611 = vmatpush1.msra.mxu0 0.0
    %2612 = vmatprep.subr.mxu0 0.0
    %2613 = vmatpush1.msra.mxu0 0.0
    %2614 = vmatprep.subr.mxu0 0.0
    %2615 = vmatpush1.msra.mxu0 0.0
    %2616 = vmatprep.subr.mxu0 0.0
    %2617 = vmatpush1.msra.mxu0 0.0
    %2618 = vmatprep.subr.mxu0 0.0
    %2619 = vmatpush1.msra.mxu0 0.0
    %2620 = vmatprep.subr.mxu0 0.0
    %2621 = vmatpush1.msra.mxu0 0.0
    %2622 = vmatprep.subr.mxu0 0.0
    %2623 = vmatpush1.msra.mxu0 0.0
    %2624 = vmatprep.subr.mxu0 0.0
    %2625 = vmatpush1.msra.mxu0 0.0
    %2626 = vmatprep.mubr.f32.mxu0 0.0
    %2627 = vmatmul.mubr.f32.gmra.mrb[0].mxu0 %v2560
    %v2628 = vpop.f32.mrb[0].mxu0
    %v2629 = vadd.f32 0.0, %v2628
    %v2630 = vpop.f32.mrb[0].mxu0
    %2631 = vdwg.mxu0
    %2632 = vrot.lane.b32.xlu0 %v1962, 112
    %v2633 = vpop.permute.xlu0 %2632
    %2634 = vrot.lane.b32.xlu0 %v1962, 80
    %v2635 = vpop.permute.xlu0 %2634
    %v2636 = vsel %vm167, %v2633, 0
    %v2638 = vsel %vm167, %v2635, 0
    %2640 = vmatprep.subr.mxu0 0.0
    %2641 = vmatpush1.xpose.msra.mxu0 %v2638
    %2642 = vmatprep.subr.mxu0 0.0
    %2643 = vmatpush1.xpose.msra.mxu0 0.0
    %2644 = vmatprep.subr.mxu0 0.0
    %2645 = vmatpush1.xpose.msra.mxu0 0.0
    %2646 = vmatprep.subr.mxu0 0.0
    %2647 = vmatpush1.xpose.msra.mxu0 0.0
    %2648 = vmatprep.subr.mxu0 0.0
    %2649 = vmatpush1.xpose.msra.mxu0 0.0
    %2650 = vmatprep.subr.mxu0 0.0
    %2651 = vmatpush1.xpose.msra.mxu0 0.0
    %2652 = vmatprep.subr.mxu0 0.0
    %2653 = vmatpush1.xpose.msra.mxu0 0.0
    %2654 = vmatprep.subr.mxu0 0.0
    %2655 = vmatpush1.xpose.msra.mxu0 0.0
    %2656 = vmatprep.subr.mxu0 0.0
    %2657 = vmatpush1.xpose.msra.mxu0 0.0
    %2658 = vmatprep.subr.mxu0 0.0
    %2659 = vmatpush1.xpose.msra.mxu0 0.0
    %2660 = vmatprep.subr.mxu0 0.0
    %2661 = vmatpush1.xpose.msra.mxu0 0.0
    %2662 = vmatprep.subr.mxu0 0.0
    %2663 = vmatpush1.xpose.msra.mxu0 0.0
    %2664 = vmatprep.subr.mxu0 0.0
    %2665 = vmatpush1.xpose.msra.mxu0 0.0
    %2666 = vmatprep.subr.mxu0 0.0
    %2667 = vmatpush1.xpose.msra.mxu0 0.0
    %2668 = vmatprep.subr.mxu0 0.0
    %2669 = vmatpush1.xpose.msra.mxu0 0.0
    %2670 = vmatprep.subr.mxu0 0.0
    %2671 = vmatpush1.xpose.msra.mxu0 0.0
    %2672 = vmatprep.subr.mxu0 0.0
    %2673 = vmatpush1.xpose.msra.mxu0 0.0
    %2674 = vmatprep.subr.mxu0 0.0
    %2675 = vmatpush1.xpose.msra.mxu0 0.0
    %2676 = vmatprep.subr.mxu0 0.0
    %2677 = vmatpush1.xpose.msra.mxu0 0.0
    %2678 = vmatprep.subr.mxu0 0.0
    %2679 = vmatpush1.xpose.msra.mxu0 0.0
    %2680 = vmatprep.subr.mxu0 0.0
    %2681 = vmatpush1.xpose.msra.mxu0 0.0
    %2682 = vmatprep.subr.mxu0 0.0
    %2683 = vmatpush1.xpose.msra.mxu0 0.0
    %2684 = vmatprep.subr.mxu0 0.0
    %2685 = vmatpush1.xpose.msra.mxu0 0.0
    %2686 = vmatprep.subr.mxu0 0.0
    %2687 = vmatpush1.xpose.msra.mxu0 0.0
    %2688 = vmatprep.subr.mxu0 0.0
    %2689 = vmatpush1.xpose.msra.mxu0 0.0
    %2690 = vmatprep.subr.mxu0 0.0
    %2691 = vmatpush1.xpose.msra.mxu0 0.0
    %2692 = vmatprep.subr.mxu0 0.0
    %2693 = vmatpush1.xpose.msra.mxu0 0.0
    %2694 = vmatprep.subr.mxu0 0.0
    %2695 = vmatpush1.xpose.msra.mxu0 0.0
    %2696 = vmatprep.subr.mxu0 0.0
    %2697 = vmatpush1.xpose.msra.mxu0 0.0
    %2698 = vmatprep.subr.mxu0 0.0
    %2699 = vmatpush1.xpose.msra.mxu0 0.0
    %2700 = vmatprep.subr.mxu0 0.0
    %2701 = vmatpush1.xpose.msra.mxu0 0.0
    %2702 = vmatprep.subr.mxu0 0.0
    %2703 = vmatpush1.xpose.msra.mxu0 0.0
    %2704 = vmatprep.mubr.f32.mxu0 0.0
    %2705 = vmatmul.mubr.f32.gmra.mrb[0].mxu0 %v2636
    %v2706 = vpop.f32.mrb[0].mxu0
    %v2707 = vadd.f32 0.0, %v2706
    %v2708 = vpop.f32.mrb[0].mxu0
    %2709 = vdwg.mxu0
    %2710 = vrot.lane.b32.xlu0 %v1967, 112
    %v2711 = vpop.permute.xlu0 %2710
    %2712 = vrot.lane.b32.xlu0 %v1967, 80
    %v2713 = vpop.permute.xlu0 %2712
    %v2714 = vsel %vm167, %v2711, 0
    %v2716 = vsel %vm167, %v2713, 0
    %2718 = vmatprep.subr.mxu0 0.0
    %2719 = vmatpush1.xpose.msra.mxu0 %v2716
    %2720 = vmatprep.subr.mxu0 0.0
    %2721 = vmatpush1.xpose.msra.mxu0 0.0
    %2722 = vmatprep.subr.mxu0 0.0
    %2723 = vmatpush1.xpose.msra.mxu0 0.0
    %2724 = vmatprep.subr.mxu0 0.0
    %2725 = vmatpush1.xpose.msra.mxu0 0.0
    %2726 = vmatprep.subr.mxu0 0.0
    %2727 = vmatpush1.xpose.msra.mxu0 0.0
    %2728 = vmatprep.subr.mxu0 0.0
    %2729 = vmatpush1.xpose.msra.mxu0 0.0
    %2730 = vmatprep.subr.mxu0 0.0
    %2731 = vmatpush1.xpose.msra.mxu0 0.0
    %2732 = vmatprep.subr.mxu0 0.0
    %2733 = vmatpush1.xpose.msra.mxu0 0.0
    %2734 = vmatprep.subr.mxu0 0.0
    %2735 = vmatpush1.xpose.msra.mxu0 0.0
    %2736 = vmatprep.subr.mxu0 0.0
    %2737 = vmatpush1.xpose.msra.mxu0 0.0
    %2738 = vmatprep.subr.mxu0 0.0
    %2739 = vmatpush1.xpose.msra.mxu0 0.0
    %2740 = vmatprep.subr.mxu0 0.0
    %2741 = vmatpush1.xpose.msra.mxu0 0.0
    %2742 = vmatprep.subr.mxu0 0.0
    %2743 = vmatpush1.xpose.msra.mxu0 0.0
    %2744 = vmatprep.subr.mxu0 0.0
    %2745 = vmatpush1.xpose.msra.mxu0 0.0
    %2746 = vmatprep.subr.mxu0 0.0
    %2747 = vmatpush1.xpose.msra.mxu0 0.0
    %2748 = vmatprep.subr.mxu0 0.0
    %2749 = vmatpush1.xpose.msra.mxu0 0.0
    %2750 = vmatprep.subr.mxu0 0.0
    %2751 = vmatpush1.xpose.msra.mxu0 0.0
    %2752 = vmatprep.subr.mxu0 0.0
    %2753 = vmatpush1.xpose.msra.mxu0 0.0
    %2754 = vmatprep.subr.mxu0 0.0
    %2755 = vmatpush1.xpose.msra.mxu0 0.0
    %2756 = vmatprep.subr.mxu0 0.0
    %2757 = vmatpush1.xpose.msra.mxu0 0.0
    %2758 = vmatprep.subr.mxu0 0.0
    %2759 = vmatpush1.xpose.msra.mxu0 0.0
    %2760 = vmatprep.subr.mxu0 0.0
    %2761 = vmatpush1.xpose.msra.mxu0 0.0
    %2762 = vmatprep.subr.mxu0 0.0
    %2763 = vmatpush1.xpose.msra.mxu0 0.0
    %2764 = vmatprep.subr.mxu0 0.0
    %2765 = vmatpush1.xpose.msra.mxu0 0.0
    %2766 = vmatprep.subr.mxu0 0.0
    %2767 = vmatpush1.xpose.msra.mxu0 0.0
    %2768 = vmatprep.subr.mxu0 0.0
    %2769 = vmatpush1.xpose.msra.mxu0 0.0
    %2770 = vmatprep.subr.mxu0 0.0
    %2771 = vmatpush1.xpose.msra.mxu0 0.0
    %2772 = vmatprep.subr.mxu0 0.0
    %2773 = vmatpush1.xpose.msra.mxu0 0.0
    %2774 = vmatprep.subr.mxu0 0.0
    %2775 = vmatpush1.xpose.msra.mxu0 0.0
    %2776 = vmatprep.subr.mxu0 0.0
    %2777 = vmatpush1.xpose.msra.mxu0 0.0
    %2778 = vmatprep.subr.mxu0 0.0
    %2779 = vmatpush1.xpose.msra.mxu0 0.0
    %2780 = vmatprep.subr.mxu0 0.0
    %2781 = vmatpush1.xpose.msra.mxu0 0.0
    %2782 = vmatprep.mubr.f32.mxu0 0.0
    %2783 = vmatmul.mubr.f32.gmra.mrb[0].mxu0 %v2714
    %v2784 = vpop.f32.mrb[0].mxu0
    %v2785 = vadd.f32 0.0, %v2784
    %v2786 = vpop.f32.mrb[0].mxu0
    %2787 = vdwg.mxu0
    %v2788 = vmul.f32 %v2707, 0.35355338
    %v2789 = vmul.f32 %v2785, 0.35355338
    %v2790 = vsel %vm167, %v2788, -inf
    %2791 = vmax.xlane.f32.xlu0 %v2790
    %v2792 = vpop.xlane.xlu0 %2791
    %v2793 = vsel %vm167, %v2789, -inf
    %2794 = vmax.xlane.f32.xlu0 %v2793
    %v2795 = vpop.xlane.xlu0 %2794
    %v2796 = vsub.f32 %v2788, %v2792
    %v2797 = vsub.f32 %v2789, %v2795
    %v2798 = vmul.f32 %v2796, 1.442695
    %v2799 = vpow.pop %v2798
    %v2800 = vmul.f32 %v2797, 1.442695
    %v2801 = vpow.pop %v2800
    %v2802 = vsel %vm167, %v2799, 0.0
    %2803 = vadd.xlane.f32.xlu0 %v2802
    %v2804 = vpop.xlane.xlu0 %2803
    %v2805 = vsel %vm167, %v2801, 0.0
    %2806 = vadd.xlane.f32.xlu0 %v2805
    %v2807 = vpop.xlane.xlu0 %2806
    %v2808 = vrcp.pop %v2804
    %v2809 = vrcp.pop %v2807
    %v2810 = vmul.f32 %v2799, %v2808
    %v2811 = vmul.f32 %v2801, %v2809
    %2812 = vrot.lane.b32.xlu0 %v1962, 48
    %v2813 = vpop.permute.xlu0 %2812
    %v2816 = vsel %vm167, %v2810, 0
    %2818 = vmatprep.subr.mxu0 0.0
    %2819 = vmatpush1.msra.mxu0 %v2813
    %2820 = vmatprep.subr.mxu0 0.0
    %2821 = vmatpush1.msra.mxu0 0.0
    %2822 = vmatprep.subr.mxu0 0.0
    %2823 = vmatpush1.msra.mxu0 0.0
    %2824 = vmatprep.subr.mxu0 0.0
    %2825 = vmatpush1.msra.mxu0 0.0
    %2826 = vmatprep.subr.mxu0 0.0
    %2827 = vmatpush1.msra.mxu0 0.0
    %2828 = vmatprep.subr.mxu0 0.0
    %2829 = vmatpush1.msra.mxu0 0.0
    %2830 = vmatprep.subr.mxu0 0.0
    %2831 = vmatpush1.msra.mxu0 0.0
    %2832 = vmatprep.subr.mxu0 0.0
    %2833 = vmatpush1.msra.mxu0 0.0
    %2834 = vmatprep.subr.mxu0 0.0
    %2835 = vmatpush1.msra.mxu0 0.0
    %2836 = vmatprep.subr.mxu0 0.0
    %2837 = vmatpush1.msra.mxu0 0.0
    %2838 = vmatprep.subr.mxu0 0.0
    %2839 = vmatpush1.msra.mxu0 0.0
    %2840 = vmatprep.subr.mxu0 0.0
    %2841 = vmatpush1.msra.mxu0 0.0
    %2842 = vmatprep.subr.mxu0 0.0
    %2843 = vmatpush1.msra.mxu0 0.0
    %2844 = vmatprep.subr.mxu0 0.0
    %2845 = vmatpush1.msra.mxu0 0.0
    %2846 = vmatprep.subr.mxu0 0.0
    %2847 = vmatpush1.msra.mxu0 0.0
    %2848 = vmatprep.subr.mxu0 0.0
    %2849 = vmatpush1.msra.mxu0 0.0
    %2850 = vmatprep.subr.mxu0 0.0
    %2851 = vmatpush1.msra.mxu0 0.0
    %2852 = vmatprep.subr.mxu0 0.0
    %2853 = vmatpush1.msra.mxu0 0.0
    %2854 = vmatprep.subr.mxu0 0.0
    %2855 = vmatpush1.msra.mxu0 0.0
    %2856 = vmatprep.subr.mxu0 0.0
    %2857 = vmatpush1.msra.mxu0 0.0
    %2858 = vmatprep.subr.mxu0 0.0
    %2859 = vmatpush1.msra.mxu0 0.0
    %2860 = vmatprep.subr.mxu0 0.0
    %2861 = vmatpush1.msra.mxu0 0.0
    %2862 = vmatprep.subr.mxu0 0.0
    %2863 = vmatpush1.msra.mxu0 0.0
    %2864 = vmatprep.subr.mxu0 0.0
    %2865 = vmatpush1.msra.mxu0 0.0
    %2866 = vmatprep.subr.mxu0 0.0
    %2867 = vmatpush1.msra.mxu0 0.0
    %2868 = vmatprep.subr.mxu0 0.0
    %2869 = vmatpush1.msra.mxu0 0.0
    %2870 = vmatprep.subr.mxu0 0.0
    %2871 = vmatpush1.msra.mxu0 0.0
    %2872 = vmatprep.subr.mxu0 0.0
    %2873 = vmatpush1.msra.mxu0 0.0
    %2874 = vmatprep.subr.mxu0 0.0
    %2875 = vmatpush1.msra.mxu0 0.0
    %2876 = vmatprep.subr.mxu0 0.0
    %2877 = vmatpush1.msra.mxu0 0.0
    %2878 = vmatprep.subr.mxu0 0.0
    %2879 = vmatpush1.msra.mxu0 0.0
    %2880 = vmatprep.subr.mxu0 0.0
    %2881 = vmatpush1.msra.mxu0 0.0
    %2882 = vmatprep.mubr.f32.mxu0 0.0
    %2883 = vmatmul.mubr.f32.gmra.mrb[0].mxu0 %v2816
    %v2884 = vpop.f32.mrb[0].mxu0
    %v2885 = vadd.f32 0.0, %v2884
    %v2886 = vpop.f32.mrb[0].mxu0
    %2887 = vdwg.mxu0
    %2888 = vrot.lane.b32.xlu0 %v1967, 48
    %v2889 = vpop.permute.xlu0 %2888
    %v2892 = vsel %vm167, %v2811, 0
    %2894 = vmatprep.subr.mxu0 0.0
    %2895 = vmatpush1.msra.mxu0 %v2889
    %2896 = vmatprep.subr.mxu0 0.0
    %2897 = vmatpush1.msra.mxu0 0.0
    %2898 = vmatprep.subr.mxu0 0.0
    %2899 = vmatpush1.msra.mxu0 0.0
    %2900 = vmatprep.subr.mxu0 0.0
    %2901 = vmatpush1.msra.mxu0 0.0
    %2902 = vmatprep.subr.mxu0 0.0
    %2903 = vmatpush1.msra.mxu0 0.0
    %2904 = vmatprep.subr.mxu0 0.0
    %2905 = vmatpush1.msra.mxu0 0.0
    %2906 = vmatprep.subr.mxu0 0.0
    %2907 = vmatpush1.msra.mxu0 0.0
    %2908 = vmatprep.subr.mxu0 0.0
    %2909 = vmatpush1.msra.mxu0 0.0
    %2910 = vmatprep.subr.mxu0 0.0
    %2911 = vmatpush1.msra.mxu0 0.0
    %2912 = vmatprep.subr.mxu0 0.0
    %2913 = vmatpush1.msra.mxu0 0.0
    %2914 = vmatprep.subr.mxu0 0.0
    %2915 = vmatpush1.msra.mxu0 0.0
    %2916 = vmatprep.subr.mxu0 0.0
    %2917 = vmatpush1.msra.mxu0 0.0
    %2918 = vmatprep.subr.mxu0 0.0
    %2919 = vmatpush1.msra.mxu0 0.0
    %2920 = vmatprep.subr.mxu0 0.0
    %2921 = vmatpush1.msra.mxu0 0.0
    %2922 = vmatprep.subr.mxu0 0.0
    %2923 = vmatpush1.msra.mxu0 0.0
    %2924 = vmatprep.subr.mxu0 0.0
    %2925 = vmatpush1.msra.mxu0 0.0
    %2926 = vmatprep.subr.mxu0 0.0
    %2927 = vmatpush1.msra.mxu0 0.0
    %2928 = vmatprep.subr.mxu0 0.0
    %2929 = vmatpush1.msra.mxu0 0.0
    %2930 = vmatprep.subr.mxu0 0.0
    %2931 = vmatpush1.msra.mxu0 0.0
    %2932 = vmatprep.subr.mxu0 0.0
    %2933 = vmatpush1.msra.mxu0 0.0
    %2934 = vmatprep.subr.mxu0 0.0
    %2935 = vmatpush1.msra.mxu0 0.0
    %2936 = vmatprep.subr.mxu0 0.0
    %2937 = vmatpush1.msra.mxu0 0.0
    %2938 = vmatprep.subr.mxu0 0.0
    %2939 = vmatpush1.msra.mxu0 0.0
    %2940 = vmatprep.subr.mxu0 0.0
    %2941 = vmatpush1.msra.mxu0 0.0
    %2942 = vmatprep.subr.mxu0 0.0
    %2943 = vmatpush1.msra.mxu0 0.0
    %2944 = vmatprep.subr.mxu0 0.0
    %2945 = vmatpush1.msra.mxu0 0.0
    %2946 = vmatprep.subr.mxu0 0.0
    %2947 = vmatpush1.msra.mxu0 0.0
    %2948 = vmatprep.subr.mxu0 0.0
    %2949 = vmatpush1.msra.mxu0 0.0
    %2950 = vmatprep.subr.mxu0 0.0
    %2951 = vmatpush1.msra.mxu0 0.0
    %2952 = vmatprep.subr.mxu0 0.0
    %2953 = vmatpush1.msra.mxu0 0.0
    %2954 = vmatprep.subr.mxu0 0.0
    %2955 = vmatpush1.msra.mxu0 0.0
    %2956 = vmatprep.subr.mxu0 0.0
    %2957 = vmatpush1.msra.mxu0 0.0
    %2958 = vmatprep.mubr.f32.mxu0 0.0
    %2959 = vmatmul.mubr.f32.gmra.mrb[0].mxu0 %v2892
    %v2960 = vpop.f32.mrb[0].mxu0
    %v2961 = vadd.f32 0.0, %v2960
    %v2962 = vpop.f32.mrb[0].mxu0
    %2963 = vdwg.mxu0
    %2964 = vrot.lane.b32.xlu0 %v1962, 104
    %v2965 = vpop.permute.xlu0 %2964
    %2966 = vrot.lane.b32.xlu0 %v1962, 72
    %v2967 = vpop.permute.xlu0 %2966
    %v2968 = vsel %vm167, %v2965, 0
    %v2970 = vsel %vm167, %v2967, 0
    %2972 = vmatprep.subr.mxu0 0.0
    %2973 = vmatpush1.xpose.msra.mxu0 %v2970
    %2974 = vmatprep.subr.mxu0 0.0
    %2975 = vmatpush1.xpose.msra.mxu0 0.0
    %2976 = vmatprep.subr.mxu0 0.0
    %2977 = vmatpush1.xpose.msra.mxu0 0.0
    %2978 = vmatprep.subr.mxu0 0.0
    %2979 = vmatpush1.xpose.msra.mxu0 0.0
    %2980 = vmatprep.subr.mxu0 0.0
    %2981 = vmatpush1.xpose.msra.mxu0 0.0
    %2982 = vmatprep.subr.mxu0 0.0
    %2983 = vmatpush1.xpose.msra.mxu0 0.0
    %2984 = vmatprep.subr.mxu0 0.0
    %2985 = vmatpush1.xpose.msra.mxu0 0.0
    %2986 = vmatprep.subr.mxu0 0.0
    %2987 = vmatpush1.xpose.msra.mxu0 0.0
    %2988 = vmatprep.subr.mxu0 0.0
    %2989 = vmatpush1.xpose.msra.mxu0 0.0
    %2990 = vmatprep.subr.mxu0 0.0
    %2991 = vmatpush1.xpose.msra.mxu0 0.0
    %2992 = vmatprep.subr.mxu0 0.0
    %2993 = vmatpush1.xpose.msra.mxu0 0.0
    %2994 = vmatprep.subr.mxu0 0.0
    %2995 = vmatpush1.xpose.msra.mxu0 0.0
    %2996 = vmatprep.subr.mxu0 0.0
    %2997 = vmatpush1.xpose.msra.mxu0 0.0
    %2998 = vmatprep.subr.mxu0 0.0
    %2999 = vmatpush1.xpose.msra.mxu0 0.0
    %3000 = vmatprep.subr.mxu0 0.0
    %3001 = vmatpush1.xpose.msra.mxu0 0.0
    %3002 = vmatprep.subr.mxu0 0.0
    %3003 = vmatpush1.xpose.msra.mxu0 0.0
    %3004 = vmatprep.subr.mxu0 0.0
    %3005 = vmatpush1.xpose.msra.mxu0 0.0
    %3006 = vmatprep.subr.mxu0 0.0
    %3007 = vmatpush1.xpose.msra.mxu0 0.0
    %3008 = vmatprep.subr.mxu0 0.0
    %3009 = vmatpush1.xpose.msra.mxu0 0.0
    %3010 = vmatprep.subr.mxu0 0.0
    %3011 = vmatpush1.xpose.msra.mxu0 0.0
    %3012 = vmatprep.subr.mxu0 0.0
    %3013 = vmatpush1.xpose.msra.mxu0 0.0
    %3014 = vmatprep.subr.mxu0 0.0
    %3015 = vmatpush1.xpose.msra.mxu0 0.0
    %3016 = vmatprep.subr.mxu0 0.0
    %3017 = vmatpush1.xpose.msra.mxu0 0.0
    %3018 = vmatprep.subr.mxu0 0.0
    %3019 = vmatpush1.xpose.msra.mxu0 0.0
    %3020 = vmatprep.subr.mxu0 0.0
    %3021 = vmatpush1.xpose.msra.mxu0 0.0
    %3022 = vmatprep.subr.mxu0 0.0
    %3023 = vmatpush1.xpose.msra.mxu0 0.0
    %3024 = vmatprep.subr.mxu0 0.0
    %3025 = vmatpush1.xpose.msra.mxu0 0.0
    %3026 = vmatprep.subr.mxu0 0.0
    %3027 = vmatpush1.xpose.msra.mxu0 0.0
    %3028 = vmatprep.subr.mxu0 0.0
    %3029 = vmatpush1.xpose.msra.mxu0 0.0
    %3030 = vmatprep.subr.mxu0 0.0
    %3031 = vmatpush1.xpose.msra.mxu0 0.0
    %3032 = vmatprep.subr.mxu0 0.0
    %3033 = vmatpush1.xpose.msra.mxu0 0.0
    %3034 = vmatprep.subr.mxu0 0.0
    %3035 = vmatpush1.xpose.msra.mxu0 0.0
    %3036 = vmatprep.mubr.f32.mxu0 0.0
    %3037 = vmatmul.mubr.f32.gmra.mrb[0].mxu0 %v2968
    %v3038 = vpop.f32.mrb[0].mxu0
    %v3039 = vadd.f32 0.0, %v3038
    %v3040 = vpop.f32.mrb[0].mxu0
    %3041 = vdwg.mxu0
    %3042 = vrot.lane.b32.xlu0 %v1967, 104
    %v3043 = vpop.permute.xlu0 %3042
    %3044 = vrot.lane.b32.xlu0 %v1967, 72
    %v3045 = vpop.permute.xlu0 %3044
    %v3046 = vsel %vm167, %v3043, 0
    %v3048 = vsel %vm167, %v3045, 0
    %3050 = vmatprep.subr.mxu0 0.0
    %3051 = vmatpush1.xpose.msra.mxu0 %v3048
    %3052 = vmatprep.subr.mxu0 0.0
    %3053 = vmatpush1.xpose.msra.mxu0 0.0
    %3054 = vmatprep.subr.mxu0 0.0
    %3055 = vmatpush1.xpose.msra.mxu0 0.0
    %3056 = vmatprep.subr.mxu0 0.0
    %3057 = vmatpush1.xpose.msra.mxu0 0.0
    %3058 = vmatprep.subr.mxu0 0.0
    %3059 = vmatpush1.xpose.msra.mxu0 0.0
    %3060 = vmatprep.subr.mxu0 0.0
    %3061 = vmatpush1.xpose.msra.mxu0 0.0
    %3062 = vmatprep.subr.mxu0 0.0
    %3063 = vmatpush1.xpose.msra.mxu0 0.0
    %3064 = vmatprep.subr.mxu0 0.0
    %3065 = vmatpush1.xpose.msra.mxu0 0.0
    %3066 = vmatprep.subr.mxu0 0.0
    %3067 = vmatpush1.xpose.msra.mxu0 0.0
    %3068 = vmatprep.subr.mxu0 0.0
    %3069 = vmatpush1.xpose.msra.mxu0 0.0
    %3070 = vmatprep.subr.mxu0 0.0
    %3071 = vmatpush1.xpose.msra.mxu0 0.0
    %3072 = vmatprep.subr.mxu0 0.0
    %3073 = vmatpush1.xpose.msra.mxu0 0.0
    %3074 = vmatprep.subr.mxu0 0.0
    %3075 = vmatpush1.xpose.msra.mxu0 0.0
    %3076 = vmatprep.subr.mxu0 0.0
    %3077 = vmatpush1.xpose.msra.mxu0 0.0
    %3078 = vmatprep.subr.mxu0 0.0
    %3079 = vmatpush1.xpose.msra.mxu0 0.0
    %3080 = vmatprep.subr.mxu0 0.0
    %3081 = vmatpush1.xpose.msra.mxu0 0.0
    %3082 = vmatprep.subr.mxu0 0.0
    %3083 = vmatpush1.xpose.msra.mxu0 0.0
    %3084 = vmatprep.subr.mxu0 0.0
    %3085 = vmatpush1.xpose.msra.mxu0 0.0
    %3086 = vmatprep.subr.mxu0 0.0
    %3087 = vmatpush1.xpose.msra.mxu0 0.0
    %3088 = vmatprep.subr.mxu0 0.0
    %3089 = vmatpush1.xpose.msra.mxu0 0.0
    %3090 = vmatprep.subr.mxu0 0.0
    %3091 = vmatpush1.xpose.msra.mxu0 0.0
    %3092 = vmatprep.subr.mxu0 0.0
    %3093 = vmatpush1.xpose.msra.mxu0 0.0
    %3094 = vmatprep.subr.mxu0 0.0
    %3095 = vmatpush1.xpose.msra.mxu0 0.0
    %3096 = vmatprep.subr.mxu0 0.0
    %3097 = vmatpush1.xpose.msra.mxu0 0.0
    %3098 = vmatprep.subr.mxu0 0.0
    %3099 = vmatpush1.xpose.msra.mxu0 0.0
    %3100 = vmatprep.subr.mxu0 0.0
    %3101 = vmatpush1.xpose.msra.mxu0 0.0
    %3102 = vmatprep.subr.mxu0 0.0
    %3103 = vmatpush1.xpose.msra.mxu0 0.0
    %3104 = vmatprep.subr.mxu0 0.0
    %3105 = vmatpush1.xpose.msra.mxu0 0.0
    %3106 = vmatprep.subr.mxu0 0.0
    %3107 = vmatpush1.xpose.msra.mxu0 0.0
    %3108 = vmatprep.subr.mxu0 0.0
    %3109 = vmatpush1.xpose.msra.mxu0 0.0
    %3110 = vmatprep.subr.mxu0 0.0
    %3111 = vmatpush1.xpose.msra.mxu0 0.0
    %3112 = vmatprep.subr.mxu0 0.0
    %3113 = vmatpush1.xpose.msra.mxu0 0.0
    %3114 = vmatprep.mubr.f32.mxu0 0.0
    %3115 = vmatmul.mubr.f32.gmra.mrb[0].mxu0 %v3046
    %v3116 = vpop.f32.mrb[0].mxu0
    %v3117 = vadd.f32 0.0, %v3116
    %v3118 = vpop.f32.mrb[0].mxu0
    %3119 = vdwg.mxu0
    %v3120 = vmul.f32 %v3039, 0.35355338
    %v3121 = vmul.f32 %v3117, 0.35355338
    %v3122 = vsel %vm167, %v3120, -inf
    %3123 = vmax.xlane.f32.xlu0 %v3122
    %v3124 = vpop.xlane.xlu0 %3123
    %v3125 = vsel %vm167, %v3121, -inf
    %3126 = vmax.xlane.f32.xlu0 %v3125
    %v3127 = vpop.xlane.xlu0 %3126
    %v3128 = vsub.f32 %v3120, %v3124
    %v3129 = vsub.f32 %v3121, %v3127
    %v3130 = vmul.f32 %v3128, 1.442695
    %v3131 = vpow.pop %v3130
    %v3132 = vmul.f32 %v3129, 1.442695
    %v3133 = vpow.pop %v3132
    %v3134 = vsel %vm167, %v3131, 0.0
    %3135 = vadd.xlane.f32.xlu0 %v3134
    %v3136 = vpop.xlane.xlu0 %3135
    %v3137 = vsel %vm167, %v3133, 0.0
    %3138 = vadd.xlane.f32.xlu0 %v3137
    %v3139 = vpop.xlane.xlu0 %3138
    %v3140 = vrcp.pop %v3136
    %v3141 = vrcp.pop %v3139
    %v3142 = vmul.f32 %v3131, %v3140
    %v3143 = vmul.f32 %v3133, %v3141
    %3144 = vrot.lane.b32.xlu0 %v1962, 40
    %v3145 = vpop.permute.xlu0 %3144
    %v3148 = vsel %vm167, %v3142, 0
    %3150 = vmatprep.subr.mxu0 0.0
    %3151 = vmatpush1.msra.mxu0 %v3145
    %3152 = vmatprep.subr.mxu0 0.0
    %3153 = vmatpush1.msra.mxu0 0.0
    %3154 = vmatprep.subr.mxu0 0.0
    %3155 = vmatpush1.msra.mxu0 0.0
    %3156 = vmatprep.subr.mxu0 0.0
    %3157 = vmatpush1.msra.mxu0 0.0
    %3158 = vmatprep.subr.mxu0 0.0
    %3159 = vmatpush1.msra.mxu0 0.0
    %3160 = vmatprep.subr.mxu0 0.0
    %3161 = vmatpush1.msra.mxu0 0.0
    %3162 = vmatprep.subr.mxu0 0.0
    %3163 = vmatpush1.msra.mxu0 0.0
    %3164 = vmatprep.subr.mxu0 0.0
    %3165 = vmatpush1.msra.mxu0 0.0
    %3166 = vmatprep.subr.mxu0 0.0
    %3167 = vmatpush1.msra.mxu0 0.0
    %3168 = vmatprep.subr.mxu0 0.0
    %3169 = vmatpush1.msra.mxu0 0.0
    %3170 = vmatprep.subr.mxu0 0.0
    %3171 = vmatpush1.msra.mxu0 0.0
    %3172 = vmatprep.subr.mxu0 0.0
    %3173 = vmatpush1.msra.mxu0 0.0
    %3174 = vmatprep.subr.mxu0 0.0
    %3175 = vmatpush1.msra.mxu0 0.0
    %3176 = vmatprep.subr.mxu0 0.0
    %3177 = vmatpush1.msra.mxu0 0.0
    %3178 = vmatprep.subr.mxu0 0.0
    %3179 = vmatpush1.msra.mxu0 0.0
    %3180 = vmatprep.subr.mxu0 0.0
    %3181 = vmatpush1.msra.mxu0 0.0
    %3182 = vmatprep.subr.mxu0 0.0
    %3183 = vmatpush1.msra.mxu0 0.0
    %3184 = vmatprep.subr.mxu0 0.0
    %3185 = vmatpush1.msra.mxu0 0.0
    %3186 = vmatprep.subr.mxu0 0.0
    %3187 = vmatpush1.msra.mxu0 0.0
    %3188 = vmatprep.subr.mxu0 0.0
    %3189 = vmatpush1.msra.mxu0 0.0
    %3190 = vmatprep.subr.mxu0 0.0
    %3191 = vmatpush1.msra.mxu0 0.0
    %3192 = vmatprep.subr.mxu0 0.0
    %3193 = vmatpush1.msra.mxu0 0.0
    %3194 = vmatprep.subr.mxu0 0.0
    %3195 = vmatpush1.msra.mxu0 0.0
    %3196 = vmatprep.subr.mxu0 0.0
    %3197 = vmatpush1.msra.mxu0 0.0
    %3198 = vmatprep.subr.mxu0 0.0
    %3199 = vmatpush1.msra.mxu0 0.0
    %3200 = vmatprep.subr.mxu0 0.0
    %3201 = vmatpush1.msra.mxu0 0.0
    %3202 = vmatprep.subr.mxu0 0.0
    %3203 = vmatpush1.msra.mxu0 0.0
    %3204 = vmatprep.subr.mxu0 0.0
    %3205 = vmatpush1.msra.mxu0 0.0
    %3206 = vmatprep.subr.mxu0 0.0
    %3207 = vmatpush1.msra.mxu0 0.0
    %3208 = vmatprep.subr.mxu0 0.0
    %3209 = vmatpush1.msra.mxu0 0.0
    %3210 = vmatprep.subr.mxu0 0.0
    %3211 = vmatpush1.msra.mxu0 0.0
    %3212 = vmatprep.subr.mxu0 0.0
    %3213 = vmatpush1.msra.mxu0 0.0
    %3214 = vmatprep.mubr.f32.mxu0 0.0
    %3215 = vmatmul.mubr.f32.gmra.mrb[0].mxu0 %v3148
    %v3216 = vpop.f32.mrb[0].mxu0
    %v3217 = vadd.f32 0.0, %v3216
    %v3218 = vpop.f32.mrb[0].mxu0
    %3219 = vdwg.mxu0
    %3220 = vrot.lane.b32.xlu0 %v1967, 40
    %v3221 = vpop.permute.xlu0 %3220
    %v3224 = vsel %vm167, %v3143, 0
    %3226 = vmatprep.subr.mxu0 0.0
    %3227 = vmatpush1.msra.mxu0 %v3221
    %3228 = vmatprep.subr.mxu0 0.0
    %3229 = vmatpush1.msra.mxu0 0.0
    %3230 = vmatprep.subr.mxu0 0.0
    %3231 = vmatpush1.msra.mxu0 0.0
    %3232 = vmatprep.subr.mxu0 0.0
    %3233 = vmatpush1.msra.mxu0 0.0
    %3234 = vmatprep.subr.mxu0 0.0
    %3235 = vmatpush1.msra.mxu0 0.0
    %3236 = vmatprep.subr.mxu0 0.0
    %3237 = vmatpush1.msra.mxu0 0.0
    %3238 = vmatprep.subr.mxu0 0.0
    %3239 = vmatpush1.msra.mxu0 0.0
    %3240 = vmatprep.subr.mxu0 0.0
    %3241 = vmatpush1.msra.mxu0 0.0
    %3242 = vmatprep.subr.mxu0 0.0
    %3243 = vmatpush1.msra.mxu0 0.0
    %3244 = vmatprep.subr.mxu0 0.0
    %3245 = vmatpush1.msra.mxu0 0.0
    %3246 = vmatprep.subr.mxu0 0.0
    %3247 = vmatpush1.msra.mxu0 0.0
    %3248 = vmatprep.subr.mxu0 0.0
    %3249 = vmatpush1.msra.mxu0 0.0
    %3250 = vmatprep.subr.mxu0 0.0
    %3251 = vmatpush1.msra.mxu0 0.0
    %3252 = vmatprep.subr.mxu0 0.0
    %3253 = vmatpush1.msra.mxu0 0.0
    %3254 = vmatprep.subr.mxu0 0.0
    %3255 = vmatpush1.msra.mxu0 0.0
    %3256 = vmatprep.subr.mxu0 0.0
    %3257 = vmatpush1.msra.mxu0 0.0
    %3258 = vmatprep.subr.mxu0 0.0
    %3259 = vmatpush1.msra.mxu0 0.0
    %3260 = vmatprep.subr.mxu0 0.0
    %3261 = vmatpush1.msra.mxu0 0.0
    %3262 = vmatprep.subr.mxu0 0.0
    %3263 = vmatpush1.msra.mxu0 0.0
    %3264 = vmatprep.subr.mxu0 0.0
    %3265 = vmatpush1.msra.mxu0 0.0
    %3266 = vmatprep.subr.mxu0 0.0
    %3267 = vmatpush1.msra.mxu0 0.0
    %3268 = vmatprep.subr.mxu0 0.0
    %3269 = vmatpush1.msra.mxu0 0.0
    %3270 = vmatprep.subr.mxu0 0.0
    %3271 = vmatpush1.msra.mxu0 0.0
    %3272 = vmatprep.subr.mxu0 0.0
    %3273 = vmatpush1.msra.mxu0 0.0
    %3274 = vmatprep.subr.mxu0 0.0
    %3275 = vmatpush1.msra.mxu0 0.0
    %3276 = vmatprep.subr.mxu0 0.0
    %3277 = vmatpush1.msra.mxu0 0.0
    %3278 = vmatprep.subr.mxu0 0.0
    %3279 = vmatpush1.msra.mxu0 0.0
    %3280 = vmatprep.subr.mxu0 0.0
    %3281 = vmatpush1.msra.mxu0 0.0
    %3282 = vmatprep.subr.mxu0 0.0
    %3283 = vmatpush1.msra.mxu0 0.0
    %3284 = vmatprep.subr.mxu0 0.0
    %3285 = vmatpush1.msra.mxu0 0.0
    %3286 = vmatprep.subr.mxu0 0.0
    %3287 = vmatpush1.msra.mxu0 0.0
    %3288 = vmatprep.subr.mxu0 0.0
    %3289 = vmatpush1.msra.mxu0 0.0
    %3290 = vmatprep.mubr.f32.mxu0 0.0
    %3291 = vmatmul.mubr.f32.gmra.mrb[0].mxu0 %v3224
    %v3292 = vpop.f32.mrb[0].mxu0
    %v3293 = vadd.f32 0.0, %v3292
    %v3294 = vpop.f32.mrb[0].mxu0
    %3295 = vdwg.mxu0
    %3298 = vrot.lane.b32.xlu0 %v2553, 8
    %v3299 = vpop.permute.xlu0 %3298
    %3300 = vrot.lane.b32.xlu0 %v2629, 8
    %v3301 = vpop.permute.xlu0 %3300
    %3306 = vrot.lane.b32.xlu0 %v2885, 16
    %v3307 = vpop.permute.xlu0 %3306
    %3308 = vrot.lane.b32.xlu0 %v2961, 16
    %v3309 = vpop.permute.xlu0 %3308
    %3314 = vrot.lane.b32.xlu0 %v3217, 24
    %v3315 = vpop.permute.xlu0 %3314
    %3316 = vrot.lane.b32.xlu0 %v3293, 24
    %v3317 = vpop.permute.xlu0 %3316
    %v3320 = vsel %vm167, %v2221, %v3299
    %v3321 = vsel %vm167, %v2297, %v3301
    %v3322 = vsel %vm1517, %v3320, %v3307
    %v3323 = vsel %vm1517, %v3321, %v3309
    %v3324 = vsel %vm1520, %v3322, %v3315
    %v3325 = vsel %vm1520, %v3323, %v3317
    %s3326 = scalar_lea.vmem %s4, 32
    %v3327 = vld [vmem:[%s3326] sm:$0xff]
    %v3328 = vld [vmem:[%s3326 + $0x8] sm:$0xff]
    %v3329 = vld [vmem:[%s3326 + $0x10] sm:$0xff]
    %v3330 = vld [vmem:[%s3326 + $0x18] sm:$0xff]
    %v3331 = vlaneseq
    %v3332 = vshrl.u32 %v3331, 7
    %v3333 = vsub.s32 1, %v3332
    %v3334 = vrot.slane %v1879, %v3333
    %v3336 = vsel %vm82, %v3324, 0
    %v3339 = vsel %vm82, %v3325, 0
    %3341 = vmatprep.subr.mxu0 0.0
    %3342 = vmatpush1.msra.mxu0 %v3327
    %3343 = vmatprep.subr.mxu0 0.0
    %3344 = vmatpush1.msra.mxu0 %v3328
    %3345 = vmatprep.subr.mxu0 0.0
    %3346 = vmatpush1.msra.mxu0 %v3329
    %3347 = vmatprep.subr.mxu0 0.0
    %3348 = vmatpush1.msra.mxu0 %v3330
    %3349 = vmatprep.subr.mxu0 0.0
    %3350 = vmatpush1.msra.mxu0 0.0
    %3351 = vmatprep.subr.mxu0 0.0
    %3352 = vmatpush1.msra.mxu0 0.0
    %3353 = vmatprep.subr.mxu0 0.0
    %3354 = vmatpush1.msra.mxu0 0.0
    %3355 = vmatprep.subr.mxu0 0.0
    %3356 = vmatpush1.msra.mxu0 0.0
    %3357 = vmatprep.subr.mxu0 0.0
    %3358 = vmatpush1.msra.mxu0 0.0
    %3359 = vmatprep.subr.mxu0 0.0
    %3360 = vmatpush1.msra.mxu0 0.0
    %3361 = vmatprep.subr.mxu0 0.0
    %3362 = vmatpush1.msra.mxu0 0.0
    %3363 = vmatprep.subr.mxu0 0.0
    %3364 = vmatpush1.msra.mxu0 0.0
    %3365 = vmatprep.subr.mxu0 0.0
    %3366 = vmatpush1.msra.mxu0 0.0
    %3367 = vmatprep.subr.mxu0 0.0
    %3368 = vmatpush1.msra.mxu0 0.0
    %3369 = vmatprep.subr.mxu0 0.0
    %3370 = vmatpush1.msra.mxu0 0.0
    %3371 = vmatprep.subr.mxu0 0.0
    %3372 = vmatpush1.msra.mxu0 0.0
    %3373 = vmatprep.subr.mxu0 0.0
    %3374 = vmatpush1.msra.mxu0 0.0
    %3375 = vmatprep.subr.mxu0 0.0
    %3376 = vmatpush1.msra.mxu0 0.0
    %3377 = vmatprep.subr.mxu0 0.0
    %3378 = vmatpush1.msra.mxu0 0.0
    %3379 = vmatprep.subr.mxu0 0.0
    %3380 = vmatpush1.msra.mxu0 0.0
    %3381 = vmatprep.subr.mxu0 0.0
    %3382 = vmatpush1.msra.mxu0 0.0
    %3383 = vmatprep.subr.mxu0 0.0
    %3384 = vmatpush1.msra.mxu0 0.0
    %3385 = vmatprep.subr.mxu0 0.0
    %3386 = vmatpush1.msra.mxu0 0.0
    %3387 = vmatprep.subr.mxu0 0.0
    %3388 = vmatpush1.msra.mxu0 0.0
    %3389 = vmatprep.subr.mxu0 0.0
    %3390 = vmatpush1.msra.mxu0 0.0
    %3391 = vmatprep.subr.mxu0 0.0
    %3392 = vmatpush1.msra.mxu0 0.0
    %3393 = vmatprep.subr.mxu0 0.0
    %3394 = vmatpush1.msra.mxu0 0.0
    %3395 = vmatprep.subr.mxu0 0.0
    %3396 = vmatpush1.msra.mxu0 0.0
    %3397 = vmatprep.subr.mxu0 0.0
    %3398 = vmatpush1.msra.mxu0 0.0
    %3399 = vmatprep.subr.mxu0 0.0
    %3400 = vmatpush1.msra.mxu0 0.0
    %3401 = vmatprep.subr.mxu0 0.0
    %3402 = vmatpush1.msra.mxu0 0.0
    %3403 = vmatprep.subr.mxu0 0.0
    %3404 = vmatpush1.msra.mxu0 0.0
    %3405 = vmatprep.mubr.f32.mxu0 0.0
    %3406 = vmatmul.mubr.f32.gmra.mrb[0].mxu0 %v3336
    %v3407 = vpop.f32.mrb[0].mxu0
    %v3408 = vadd.f32 %v3334, %v3407
    %v3409 = vpop.f32.mrb[0].mxu0
    %3410 = vmatprep.mubr.f32.mxu0 0.0
    %3411 = vmatmul.mubr.f32.gmra.mrb[0].mxu0 %v3339
    %v3412 = vpop.f32.mrb[0].mxu0
    %v3413 = vadd.f32 %v3334, %v3412
    %v3414 = vpop.f32.mrb[0].mxu0
    %3415 = vdwg.mxu0
    %v3416 = vadd.f32 %v1876, %v3408
    %v3417 = vadd.f32 %v1877, %v3413
    %v3418 = vsel %vm82, %v3416, 0.0
    %3419 = vadd.xlane.f32.xlu0 %v3418
    %v3420 = vpop.xlane.xlu0 %3419
    %v3421 = vsel %vm82, %v3417, 0.0
    %3422 = vadd.xlane.f32.xlu0 %v3421
    %v3423 = vpop.xlane.xlu0 %3422
    %v3424 = vmul.f32 %v3420, %v1620
    %v3425 = vmul.f32 %v3423, %v1620
    %v3426 = vsub.f32 %v3416, %v3424
    %v3427 = vsub.f32 %v3417, %v3425
    %v3428 = vmul.f32 %v3426, %v3426
    %v3429 = vmul.f32 %v3427, %v3427
    %v3430 = vsel %vm82, %v3428, 0.0
    %3431 = vadd.xlane.f32.xlu0 %v3430
    %v3432 = vpop.xlane.xlu0 %3431
    %v3433 = vsel %vm82, %v3429, 0.0
    %3434 = vadd.xlane.f32.xlu0 %v3433
    %v3435 = vpop.xlane.xlu0 %3434
    %v3436 = vmul.f32 %v3432, %v1620
    %v3437 = vmul.f32 %v3435, %v1620
    %v3438 = vadd.f32 %v3436, 1e-05
    %v3439 = vadd.f32 %v3437, 1e-05
    %v3440 = vrsqrt.pop %v3438
    %v3441 = vrsqrt.pop %v3439
    %v3442 = vmul.f32 %v3426, %v3440
    %v3443 = vmul.f32 %v3427, %v3441
    %v3444 = vlaneseq
    %v3445 = vshrl.u32 %v3444, 7
    %v3446 = vsub.s32 2, %v3445
    %v3447 = vrot.slane %v1879, %v3446
    %v3448 = vmul.f32 %v3442, %v3447
    %v3449 = vmul.f32 %v3443, %v3447
    %v3450 = vlaneseq
    %v3451 = vshrl.u32 %v3450, 7
    %v3452 = vsub.s32 3, %v3451
    %v3453 = vrot.slane %v1879, %v3452
    %v3454 = vadd.f32 %v3448, %v3453
    %v3455 = vadd.f32 %v3449, %v3453
    %s3456 = scalar_lea.vmem %s5, 32
    %v3457 = vld [vmem:[%s3456] sm:$0xff]
    %v3458 = vld [vmem:[%s3456 + $0x8] sm:$0xff]
    %v3459 = vld [vmem:[%s3456 + $0x10] sm:$0xff]
    %v3460 = vld [vmem:[%s3456 + $0x18] sm:$0xff]
    %v3461 = vlaneseq
    %v3462 = vshrl.u32 %v3461, 7
    %v3463 = vsub.s32 4, %v3462
    %v3464 = vrot.slane %v1879, %v3463
    %v3466 = vsel %vm82, %v3454, 0
    %v3469 = vsel %vm82, %v3455, 0
    %3471 = vmatprep.subr.mxu0 0.0
    %3472 = vmatpush1.msra.mxu0 %v3457
    %3473 = vmatprep.subr.mxu0 0.0
    %3474 = vmatpush1.msra.mxu0 %v3458
    %3475 = vmatprep.subr.mxu0 0.0
    %3476 = vmatpush1.msra.mxu0 %v3459
    %3477 = vmatprep.subr.mxu0 0.0
    %3478 = vmatpush1.msra.mxu0 %v3460
    %3479 = vmatprep.subr.mxu0 0.0
    %3480 = vmatpush1.msra.mxu0 0.0
    %3481 = vmatprep.subr.mxu0 0.0
    %3482 = vmatpush1.msra.mxu0 0.0
    %3483 = vmatprep.subr.mxu0 0.0
    %3484 = vmatpush1.msra.mxu0 0.0
    %3485 = vmatprep.subr.mxu0 0.0
    %3486 = vmatpush1.msra.mxu0 0.0
    %3487 = vmatprep.subr.mxu0 0.0
    %3488 = vmatpush1.msra.mxu0 0.0
    %3489 = vmatprep.subr.mxu0 0.0
    %3490 = vmatpush1.msra.mxu0 0.0
    %3491 = vmatprep.subr.mxu0 0.0
    %3492 = vmatpush1.msra.mxu0 0.0
    %3493 = vmatprep.subr.mxu0 0.0
    %3494 = vmatpush1.msra.mxu0 0.0
    %3495 = vmatprep.subr.mxu0 0.0
    %3496 = vmatpush1.msra.mxu0 0.0
    %3497 = vmatprep.subr.mxu0 0.0
    %3498 = vmatpush1.msra.mxu0 0.0
    %3499 = vmatprep.subr.mxu0 0.0
    %3500 = vmatpush1.msra.mxu0 0.0
    %3501 = vmatprep.subr.mxu0 0.0
    %3502 = vmatpush1.msra.mxu0 0.0
    %3503 = vmatprep.subr.mxu0 0.0
    %3504 = vmatpush1.msra.mxu0 0.0
    %3505 = vmatprep.subr.mxu0 0.0
    %3506 = vmatpush1.msra.mxu0 0.0
    %3507 = vmatprep.subr.mxu0 0.0
    %3508 = vmatpush1.msra.mxu0 0.0
    %3509 = vmatprep.subr.mxu0 0.0
    %3510 = vmatpush1.msra.mxu0 0.0
    %3511 = vmatprep.subr.mxu0 0.0
    %3512 = vmatpush1.msra.mxu0 0.0
    %3513 = vmatprep.subr.mxu0 0.0
    %3514 = vmatpush1.msra.mxu0 0.0
    %3515 = vmatprep.subr.mxu0 0.0
    %3516 = vmatpush1.msra.mxu0 0.0
    %3517 = vmatprep.subr.mxu0 0.0
    %3518 = vmatpush1.msra.mxu0 0.0
    %3519 = vmatprep.subr.mxu0 0.0
    %3520 = vmatpush1.msra.mxu0 0.0
    %3521 = vmatprep.subr.mxu0 0.0
    %3522 = vmatpush1.msra.mxu0 0.0
    %3523 = vmatprep.subr.mxu0 0.0
    %3524 = vmatpush1.msra.mxu0 0.0
    %3525 = vmatprep.subr.mxu0 0.0
    %3526 = vmatpush1.msra.mxu0 0.0
    %3527 = vmatprep.subr.mxu0 0.0
    %3528 = vmatpush1.msra.mxu0 0.0
    %3529 = vmatprep.subr.mxu0 0.0
    %3530 = vmatpush1.msra.mxu0 0.0
    %3531 = vmatprep.subr.mxu0 0.0
    %3532 = vmatpush1.msra.mxu0 0.0
    %3533 = vmatprep.subr.mxu0 0.0
    %3534 = vmatpush1.msra.mxu0 0.0
    %3535 = vmatprep.mubr.f32.mxu0 0.0
    %3536 = vmatmul.mubr.f32.gmra.mrb[0].mxu0 %v3466
    %v3537 = vpop.f32.mrb[0].mxu0
    %v3538 = vadd.f32 %v3464, %v3537
    %v3539 = vpop.f32.mrb[0].mxu0
    %3540 = vmatprep.mubr.f32.mxu0 0.0
    %3541 = vmatmul.mubr.f32.gmra.mrb[0].mxu0 %v3469
    %v3542 = vpop.f32.mrb[0].mxu0
    %v3543 = vadd.f32 %v3464, %v3542
    %v3544 = vpop.f32.mrb[0].mxu0
    %3545 = vdwg.mxu0
    %v3546 = vmax.f32 %v3538, 0.0
    %v3547 = vmax.f32 %v3543, 0.0
    %s3548 = scalar_lea.vmem %s6, 64
    %v3549 = vld [vmem:[%s3548] sm:$0xff]
    %v3550 = vld [vmem:[%s3548 + $0x8] sm:$0xff]
    %v3551 = vld [vmem:[%s3548 + $0x10] sm:$0xff]
    %v3552 = vld [vmem:[%s3548 + $0x18] sm:$0xff]
    %v3553 = vld [vmem:[%s3548 + $0x20] sm:$0xff]
    %v3554 = vld [vmem:[%s3548 + $0x28] sm:$0xff]
    %v3555 = vld [vmem:[%s3548 + $0x30] sm:$0xff]
    %v3556 = vld [vmem:[%s3548 + $0x38] sm:$0xff]
    %v3557 = vlaneseq
    %v3558 = vshrl.u32 %v3557, 7
    %v3559 = vsub.s32 5, %v3558
    %v3560 = vrot.slane %v1879, %v3559
    %v3562 = vsel %vm1756, %v3546, 0
    %v3565 = vsel %vm1756, %v3547, 0
    %3567 = vmatprep.subr.mxu0 0.0
    %3568 = vmatpush1.msra.mxu0 %v3549
    %3569 = vmatprep.subr.mxu0 0.0
    %3570 = vmatpush1.msra.mxu0 %v3550
    %3571 = vmatprep.subr.mxu0 0.0
    %3572 = vmatpush1.msra.mxu0 %v3551
    %3573 = vmatprep.subr.mxu0 0.0
    %3574 = vmatpush1.msra.mxu0 %v3552
    %3575 = vmatprep.subr.mxu0 0.0
    %3576 = vmatpush1.msra.mxu0 %v3553
    %3577 = vmatprep.subr.mxu0 0.0
    %3578 = vmatpush1.msra.mxu0 %v3554
    %3579 = vmatprep.subr.mxu0 0.0
    %3580 = vmatpush1.msra.mxu0 %v3555
    %3581 = vmatprep.subr.mxu0 0.0
    %3582 = vmatpush1.msra.mxu0 %v3556
    %3583 = vmatprep.subr.mxu0 0.0
    %3584 = vmatpush1.msra.mxu0 0.0
    %3585 = vmatprep.subr.mxu0 0.0
    %3586 = vmatpush1.msra.mxu0 0.0
    %3587 = vmatprep.subr.mxu0 0.0
    %3588 = vmatpush1.msra.mxu0 0.0
    %3589 = vmatprep.subr.mxu0 0.0
    %3590 = vmatpush1.msra.mxu0 0.0
    %3591 = vmatprep.subr.mxu0 0.0
    %3592 = vmatpush1.msra.mxu0 0.0
    %3593 = vmatprep.subr.mxu0 0.0
    %3594 = vmatpush1.msra.mxu0 0.0
    %3595 = vmatprep.subr.mxu0 0.0
    %3596 = vmatpush1.msra.mxu0 0.0
    %3597 = vmatprep.subr.mxu0 0.0
    %3598 = vmatpush1.msra.mxu0 0.0
    %3599 = vmatprep.subr.mxu0 0.0
    %3600 = vmatpush1.msra.mxu0 0.0
    %3601 = vmatprep.subr.mxu0 0.0
    %3602 = vmatpush1.msra.mxu0 0.0
    %3603 = vmatprep.subr.mxu0 0.0
    %3604 = vmatpush1.msra.mxu0 0.0
    %3605 = vmatprep.subr.mxu0 0.0
    %3606 = vmatpush1.msra.mxu0 0.0
    %3607 = vmatprep.subr.mxu0 0.0
    %3608 = vmatpush1.msra.mxu0 0.0
    %3609 = vmatprep.subr.mxu0 0.0
    %3610 = vmatpush1.msra.mxu0 0.0
    %3611 = vmatprep.subr.mxu0 0.0
    %3612 = vmatpush1.msra.mxu0 0.0
    %3613 = vmatprep.subr.mxu0 0.0
    %3614 = vmatpush1.msra.mxu0 0.0
    %3615 = vmatprep.subr.mxu0 0.0
    %3616 = vmatpush1.msra.mxu0 0.0
    %3617 = vmatprep.subr.mxu0 0.0
    %3618 = vmatpush1.msra.mxu0 0.0
    %3619 = vmatprep.subr.mxu0 0.0
    %3620 = vmatpush1.msra.mxu0 0.0
    %3621 = vmatprep.subr.mxu0 0.0
    %3622 = vmatpush1.msra.mxu0 0.0
    %3623 = vmatprep.subr.mxu0 0.0
    %3624 = vmatpush1.msra.mxu0 0.0
    %3625 = vmatprep.subr.mxu0 0.0
    %3626 = vmatpush1.msra.mxu0 0.0
    %3627 = vmatprep.subr.mxu0 0.0
    %3628 = vmatpush1.msra.mxu0 0.0
    %3629 = vmatprep.subr.mxu0 0.0
    %3630 = vmatpush1.msra.mxu0 0.0
    %3631 = vmatprep.mubr.f32.mxu0 0.0
    %3632 = vmatmul.mubr.f32.gmra.mrb[0].mxu0 %v3562
    %v3633 = vpop.f32.mrb[0].mxu0
    %v3634 = vadd.f32 %v3560, %v3633
    %v3635 = vpop.f32.mrb[0].mxu0
    %3636 = vmatprep.mubr.f32.mxu0 0.0
    %3637 = vmatmul.mubr.f32.gmra.mrb[0].mxu0 %v3565
    %v3638 = vpop.f32.mrb[0].mxu0
    %v3639 = vadd.f32 %v3560, %v3638
    %v3640 = vpop.f32.mrb[0].mxu0
    %3641 = vdwg.mxu0
    %v3642 = vadd.f32 %v3454, %v3634
    %v3643 = vadd.f32 %v3455, %v3639
    %v3644 = vsel %vm82, %v3642, 0.0
    %3645 = vadd.xlane.f32.xlu0 %v3644
    %v3646 = vpop.xlane.xlu0 %3645
    %v3647 = vsel %vm82, %v3643, 0.0
    %3648 = vadd.xlane.f32.xlu0 %v3647
    %v3649 = vpop.xlane.xlu0 %3648
    %v3650 = vmul.f32 %v3646, %v1620
    %v3651 = vmul.f32 %v3649, %v1620
    %v3652 = vsub.f32 %v3642, %v3650
    %v3653 = vsub.f32 %v3643, %v3651
    %v3654 = vmul.f32 %v3652, %v3652
    %v3655 = vmul.f32 %v3653, %v3653
    %v3656 = vsel %vm82, %v3654, 0.0
    %3657 = vadd.xlane.f32.xlu0 %v3656
    %v3658 = vpop.xlane.xlu0 %3657
    %v3659 = vsel %vm82, %v3655, 0.0
    %3660 = vadd.xlane.f32.xlu0 %v3659
    %v3661 = vpop.xlane.xlu0 %3660
    %v3662 = vmul.f32 %v3658, %v1620
    %v3663 = vmul.f32 %v3661, %v1620
    %v3664 = vadd.f32 %v3662, 1e-05
    %v3665 = vadd.f32 %v3663, 1e-05
    %v3666 = vrsqrt.pop %v3664
    %v3667 = vrsqrt.pop %v3665
    %v3668 = vmul.f32 %v3652, %v3666
    %v3669 = vmul.f32 %v3653, %v3667
    %v3670 = vlaneseq
    %v3671 = vshrl.u32 %v3670, 7
    %v3672 = vsub.s32 6, %v3671
    %v3673 = vrot.slane %v1879, %v3672
    %v3674 = vmul.f32 %v3668, %v3673
    %v3675 = vmul.f32 %v3669, %v3673
    %v3676 = vlaneseq
    %v3677 = vshrl.u32 %v3676, 7
    %v3678 = vsub.s32 7, %v3677
    %v3679 = vrot.slane %v1879, %v3678
    %v3680 = vadd.f32 %v3674, %v3679
    %v3681 = vadd.f32 %v3675, %v3679
    %v3682 = vsel %vm82, %v3680, 0.0
    %v3683 = vrot.slane %v3682, 4
    %v3684 = vadd.f32 %v3682, %v3683
    %v3685 = vrot.slane %v3684, 2
    %v3686 = vadd.f32 %v3684, %v3685
    %v3687 = vrot.slane %v3686, 1
    %v3688 = vadd.f32 %v3686, %v3687
    %v3689 = vsel %vm82, %v3681, 0.0
    %v3690 = vrot.slane %v3689, 4
    %v3691 = vadd.f32 %v3689, %v3690
    %v3692 = vrot.slane %v3691, 2
    %v3693 = vadd.f32 %v3691, %v3692
    %v3694 = vrot.slane %v3693, 1
    %v3695 = vadd.f32 %v3693, %v3694
    %v3696 = vld [vmem:[%s8] sm:$0x1]
    %v3698 = vlaneseq
    %v3699 = vshrl.u32 %v3698, 7
    %v3700 = vsub.s32 0, %v3699
    %v3701 = vrot.slane %v3696, %v3700
    %v3703 = vmul.f32 %v3688, %v3701
    %v3704 = vmul.f32 %v3695, %v3701
    %v3707 = vrot.slane %v3704, 7
    %vm3708 = vcmask 1041409
    %v3709 = vsel %vm3708, %v3707, %v3703
    %vm3711 = vcmask 254976
    %v3712 = vsel %vm3711, %v3709, 0.0
    %3713 = vadd.xlane.f32.xlu0 %v3712
    %v3714 = vpop.xlane.xlu0 %3713
    %v3715 = vld [vmem:[#allocation2] sm:$0x1]
    %v3717 = vlaneseq
    %v3718 = vshrl.u32 %v3717, 7
    %v3719 = vsub.s32 0, %v3718
    %v3720 = vrot.slane %v3715, %v3719
    %v3722 = vadd.f32 %v3714, %v3720
    %vm3723 = vcmask 1024
    %3724 = vst.msk [vmem:[%s10] sm:$0x3] %vm3723, %v3722
    // Predicated region
    $region46: #{tpu_custom_call.1} parent=1 // pred_check
      _
    $region47: #{tpu_custom_call.1} parent=1 // pred_check_branch
      %3726 = sbr.rel (0) target = $region49
    $region48: #{tpu_custom_call.1} parent=1 // pred_region
      _
    $region49: #{tpu_custom_call.1} parent=1 // pred_fallthru
      _
    // Predicated region
    $region50: #{tpu_custom_call.1} parent=1 // pred_check
      _
    $region51: #{tpu_custom_call.1} parent=1 // pred_check_branch
      %3728 = sbr.rel (0) target = $region53
    $region52: #{tpu_custom_call.1} parent=1 // pred_region
      _
    $region53: #{tpu_custom_call.1} parent=1 // pred_fallthru
      _
    %3729 = vsyncpa [#allocation4], 1

</llo_original>
